<compile_context>
chip_gen: v7x
topology: tpu7x:2x2x1
jax: 0.10.0
libtpu: 0.0.40
codegen_flags: <defaults>
</compile_context>

<pallas_src>
import functools

import jax
import jax.numpy as jnp
from jax.experimental import pallas as pl
from jax.experimental.pallas import tpu as pltpu

GN_EPS = 1e-5


def _compute_groups(channels, base_factor=32, min_group_channels=16):
    return max(1, min(base_factor, channels // min_group_channels))


def ema_kernel(gx_ref, w1_ref, b1_ref, w3f_ref, b3_ref, gamma_ref, beta_ref,
               pool_ref, bh_ref, bw_ref, seg_ref, segt_ref, mask_ref,
               o_ref, *, cg, h, w, nb):
    """One grid step: nb (batch*group) slabs folded lane-dense as (cg, nb*h*w)."""
    del cg  # shapes come from the refs
    L = nb * h * w
    f32 = jnp.float32
    gx = gx_ref[0].astype(f32)                                       # (cg, L)

    # ---- directional average pooling (pool_h / pool_w) as one matmul -------
    # pool_ref columns: first nb*h = per-(slab,row) means over W,
    #                   last  nb*w = per-(slab,col) means over H.
    seq = jnp.dot(gx, pool_ref[...], preferred_element_type=f32)     # (cg, nb*(h+w))

    # ---- 1x1 conv == channel-mixing matmul ----------------------------------
    hw_mix = jnp.dot(w1_ref[...], seq, preferred_element_type=f32) + b1_ref[...]

    # ---- broadcast gate logits back to (cg, L) with one-hot matrices, then
    # sigmoid (broadcast commutes with the elementwise sigmoid; doing sigmoid
    # after the MXU broadcast keeps the gate more accurate, and the extra
    # transcendentals ride the otherwise-idle EUP slot).
    gate_h = jnp.dot(hw_mix[:, :nb * h], bh_ref[...], preferred_element_type=f32)
    gate_w = jnp.dot(hw_mix[:, nb * h:], bw_ref[...], preferred_element_type=f32)
    attn = gx * jax.nn.sigmoid(gate_h) * jax.nn.sigmoid(gate_w)      # (cg, L)

    # ---- GroupNorm(num_groups == channels): per-slab, per-channel ----------
    mu = jnp.dot(attn, segt_ref[...], preferred_element_type=f32)    # (cg, nb)
    mu_full = jnp.dot(mu, seg_ref[...], preferred_element_type=f32)  # (cg, L)
    cen = attn - mu_full
    var = jnp.dot(cen * cen, segt_ref[...], preferred_element_type=f32)
    var_full = jnp.dot(var, seg_ref[...], preferred_element_type=f32)
    x1 = gamma_ref[...] * cen * jax.lax.rsqrt(var_full + GN_EPS) + beta_ref[...]

    # ---- dilated 3x3 conv (dilation=2, pad=2): 9 lane-rolled taps stacked
    # along K, one fused MXU matmul (K = 9*cg).  Boundary (and slab-crossing)
    # wrap-around is killed by the precomputed masks, so no padded scratch and
    # no memset are needed.
    masks = mask_ref[...]                                            # (9, L)
    taps = []
    k = 0
    for kh in range(3):
        for kw in range(3):
            delta = (2 * kh - 2) * w + (2 * kw - 2)   # flat source offset
            shift = (-delta) % L                      # jnp.roll convention
            rolled = gx if shift == 0 else pltpu.roll(gx, shift=shift, axis=1)
            taps.append(rolled * masks[k:k + 1, :])
            k += 1
    stacked = jnp.concatenate(taps, axis=0)                          # (9*cg, L)
    x2 = jnp.dot(w3f_ref[...], stacked, preferred_element_type=f32) + b3_ref[...]

    # ---- per-slab global pool + channel softmax, cross re-weighting --------
    m1 = jnp.dot(x1, segt_ref[...], preferred_element_type=f32)      # (cg, nb)
    m2 = jnp.dot(x2, segt_ref[...], preferred_element_type=f32)
    e1 = jnp.exp(m1 - jnp.max(m1, axis=0, keepdims=True))
    x11 = e1 / jnp.sum(e1, axis=0, keepdims=True)                    # (cg, nb)
    e2 = jnp.exp(m2 - jnp.max(m2, axis=0, keepdims=True))
    x21 = e2 / jnp.sum(e2, axis=0, keepdims=True)

    w11 = jnp.dot(x11, seg_ref[...], preferred_element_type=f32)     # (cg, L)
    w21 = jnp.dot(x21, seg_ref[...], preferred_element_type=f32)
    wflat = jnp.sum(w11 * x2 + w21 * x1, axis=0, keepdims=True)      # (1, L)
    o_ref[0] = (gx * jax.nn.sigmoid(wflat)).astype(o_ref.dtype)


def _ema_constants(h, w, nb, dtype=jnp.float32):
    """Small constant matrices that keep all per-slab ops lane-dense/MXU."""
    hw = h * w
    L = nb * hw
    pos = jnp.arange(L, dtype=jnp.int32)
    slab = pos // hw
    rem = pos % hw
    row = rem // w
    col = rem % w

    # one-hot broadcast matrices: (slab,row) -> lane and (slab,col) -> lane
    bh = (jnp.arange(nb * h, dtype=jnp.int32)[:, None]
          == (slab * h + row)[None, :]).astype(dtype)                # (nb*h, L)
    bw = (jnp.arange(nb * w, dtype=jnp.int32)[:, None]
          == (slab * w + col)[None, :]).astype(dtype)                # (nb*w, L)
    # directional mean-pooling matrix: [mean over W | mean over H]
    pool = jnp.concatenate([bh.T / w, bw.T / h], axis=1)             # (L, nb*(h+w))
    # per-slab broadcast / mean matrices
    seg = (jnp.arange(nb, dtype=jnp.int32)[:, None]
           == slab[None, :]).astype(dtype)                           # (nb, L)
    segt = seg.T / hw                                                # (L, nb)
    # validity masks for the 9 dilated-conv taps (dilation=2, pad=2)
    masks = []
    for kh in range(3):
        for kw in range(3):
            dh, dw = 2 * kh - 2, 2 * kw - 2
            ok = ((row + dh >= 0) & (row + dh < h) &
                  (col + dw >= 0) & (col + dw < w))
            masks.append(ok)
    masks = jnp.stack(masks, axis=0).astype(dtype)                   # (9, L)
    return pool, bh, bw, seg, segt, masks


def ema_pallas(x, params, groups, nb=None):
    b, c, h, w = x.shape
    cg = c // groups
    bg = b * groups
    hw = h * w

    if nb is None:
        # Batch slabs per step to amortize pipeline overhead, but keep >= 2
        # grid steps so both v7x TensorCores get work on the parallel axis.
        nb = 1
        for cand in (8, 4, 2):
            if bg % cand == 0 and bg // cand >= 2:
                nb = cand
                break
    assert bg % nb == 0
    steps = bg // nb
    L = nb * hw

    # Fold nb slabs onto the lane axis (wrapper-side layout plumbing only):
    # (b, c, h, w) -> (steps, nb, cg, hw) -> (steps, cg, nb*hw)
    gxf = (x.reshape(steps, nb, cg, hw)
             .transpose(0, 2, 1, 3)
             .reshape(steps, cg, L))

    f32 = jnp.float32
    w1 = params["w1"].astype(f32)                                    # (cg, cg)
    b1 = params["b1"].reshape(cg, 1).astype(f32)
    # (out, in, kh, kw) -> (out, kh, kw, in) -> (out, 9*in); K block = kh*3+kw
    w3f = jnp.transpose(params["w3"], (0, 2, 3, 1)).reshape(cg, 9 * cg).astype(f32)
    b3 = params["b3"].reshape(cg, 1).astype(f32)
    gamma = params["gamma"].reshape(cg, 1).astype(f32)
    beta = params["beta"].reshape(cg, 1).astype(f32)

    pool, bh, bw, seg, segt, masks = _ema_constants(h, w, nb)

    kernel = functools.partial(ema_kernel, cg=cg, h=h, w=w, nb=nb)
    out = pl.pallas_call(
        kernel,
        out_shape=jax.ShapeDtypeStruct((steps, cg, L), x.dtype),
        grid_spec=pltpu.PrefetchScalarGridSpec(
            num_scalar_prefetch=0,
            grid=(steps,),
            in_specs=[
                pl.BlockSpec((1, cg, L), lambda i: (i, 0, 0)),        # folded slabs
                pl.BlockSpec((cg, cg), lambda i: (0, 0)),             # conv1x1 W
                pl.BlockSpec((cg, 1), lambda i: (0, 0)),              # conv1x1 b
                pl.BlockSpec((cg, 9 * cg), lambda i: (0, 0)),         # fused dilated W
                pl.BlockSpec((cg, 1), lambda i: (0, 0)),              # dilated b
                pl.BlockSpec((cg, 1), lambda i: (0, 0)),              # GN gamma
                pl.BlockSpec((cg, 1), lambda i: (0, 0)),              # GN beta
                pl.BlockSpec((L, nb * (h + w)), lambda i: (0, 0)),    # pooling matrix
                pl.BlockSpec((nb * h, L), lambda i: (0, 0)),          # row one-hot bcast
                pl.BlockSpec((nb * w, L), lambda i: (0, 0)),          # col one-hot bcast
                pl.BlockSpec((nb, L), lambda i: (0, 0)),              # slab one-hot bcast
                pl.BlockSpec((L, nb), lambda i: (0, 0)),              # per-slab mean matrix
                pl.BlockSpec((9, L), lambda i: (0, 0)),               # dilated-tap masks
            ],
            out_specs=pl.BlockSpec((1, cg, L), lambda i: (i, 0, 0)),
        ),
        compiler_params=pltpu.CompilerParams(
            dimension_semantics=("parallel",)),
    )(gxf, w1, b1, w3f, b3, gamma, beta, pool, bh, bw, seg, segt, masks)

    # Unfold: (steps, cg, nb*hw) -> (b, c, h, w)
    return (out.reshape(steps, cg, nb, hw)
               .transpose(0, 2, 1, 3)
               .reshape(b, c, h, w))


def ema_reference(x, params, groups):
    """Pure-JAX reference matching the PyTorch forward."""
    b, c, h, w = x.shape
    cg = c // groups
    gx = x.reshape(b * groups, cg, h, w)
    x_h = gx.mean(axis=3)                                            # (bg, cg, h)
    x_w = gx.mean(axis=2)                                            # (bg, cg, w)
    seq = jnp.concatenate([x_h, x_w], axis=2)                        # (bg, cg, h+w)
    hw_mix = (jnp.einsum("oc,bcp->bop", params["w1"], seq)
              + params["b1"][None, :, None])
    sh = jax.nn.sigmoid(hw_mix[:, :, :h])
    sw = jax.nn.sigmoid(hw_mix[:, :, h:])
    attn = gx * sh[:, :, :, None] * sw[:, :, None, :]
    mu = attn.mean(axis=(2, 3), keepdims=True)
    var = ((attn - mu) ** 2).mean(axis=(2, 3), keepdims=True)
    x1 = (params["gamma"][None, :, None, None] * (attn - mu)
          / jnp.sqrt(var + GN_EPS) + params["beta"][None, :, None, None])
    x2 = jax.lax.conv_general_dilated(
        gx, params["w3"], window_strides=(1, 1), padding=((2, 2), (2, 2)),
        rhs_dilation=(2, 2), dimension_numbers=("NCHW", "OIHW", "NCHW"),
    ) + params["b3"][None, :, None, None]
    x11 = jax.nn.softmax(x1.mean(axis=(2, 3)), axis=1)               # (bg, cg)
    x21 = jax.nn.softmax(x2.mean(axis=(2, 3)), axis=1)
    x12 = x2.reshape(b * groups, cg, h * w)
    x22 = x1.reshape(b * groups, cg, h * w)
    wts = (jnp.einsum("bc,bcp->bp", x11, x12)
           + jnp.einsum("bc,bcp->bp", x21, x22))
    out = gx * jax.nn.sigmoid(wts).reshape(b * groups, 1, h, w)
    return out.reshape(b, c, h, w)


if __name__ == "__main__":
    B, C, H, W = 2, 32, 16, 16
    groups = _compute_groups(C)            # = 2 -> channels-per-group = 16
    cg = C // groups

    key = jax.random.PRNGKey(0)
    ks = jax.random.split(key, 7)
    x = jax.random.normal(ks[0], (B, C, H, W), jnp.float32)
    params = {
        "w1": 0.10 * jax.random.normal(ks[1], (cg, cg), jnp.float32),
        "b1": 0.05 * jax.random.normal(ks[2], (cg,), jnp.float32),
        "w3": 0.05 * jax.random.normal(ks[3], (cg, cg, 3, 3), jnp.float32),
        "b3": 0.05 * jax.random.normal(ks[4], (cg,), jnp.float32),
        "gamma": 1.0 + 0.1 * jax.random.normal(ks[5], (cg,), jnp.float32),
        "beta": 0.1 * jax.random.normal(ks[6], (cg,), jnp.float32),
    }

    out = jax.block_until_ready(ema_pallas(x, params, groups))
    ref = jax.block_until_ready(ema_reference(x, params, groups))

    assert out.shape == (B, C, H, W)
    max_err = float(jnp.max(jnp.abs(out - ref)))
    # Tolerance leaves headroom for MXU bf16-pass rounding of f32 dot operands
    # (default matmul precision); any indexing/semantics bug would be >> 1e-1.
    assert max_err < 2e-3, f"mismatch vs reference: {max_err}"
    print("KERNEL_OK")
</pallas_src>

<mosaic_0001>
module attributes {stable_mosaic.version = 11 : i64} {
  func.func @ema_kernel(%arg0: i32, %arg1: memref<1x16x512xf32, #tpu.memory_space<vmem>>, %arg2: memref<16x16xf32, #tpu.memory_space<vmem>>, %arg3: memref<16x1xf32, #tpu.memory_space<vmem>>, %arg4: memref<16x144xf32, #tpu.memory_space<vmem>>, %arg5: memref<16x1xf32, #tpu.memory_space<vmem>>, %arg6: memref<16x1xf32, #tpu.memory_space<vmem>>, %arg7: memref<16x1xf32, #tpu.memory_space<vmem>>, %arg8: memref<512x64xf32, #tpu.memory_space<vmem>>, %arg9: memref<32x512xf32, #tpu.memory_space<vmem>>, %arg10: memref<32x512xf32, #tpu.memory_space<vmem>>, %arg11: memref<2x512xf32, #tpu.memory_space<vmem>>, %arg12: memref<512x2xf32, #tpu.memory_space<vmem>>, %arg13: memref<9x512xf32, #tpu.memory_space<vmem>>, %arg14: memref<1x16x512xf32, #tpu.memory_space<vmem>>) attributes {dimension_semantics = [#tpu.dimension_semantics<parallel>], iteration_bounds = array<i64: 2>, scalar_prefetch = 0 : i64, scratch_operands = 0 : i64, tpu.core_type = #tpu.core_type<tc>, window_params = [{transform_indices = @transform_0, window_bounds = array<i64: 1, 16, 512>}, {pipeline_mode = #tpu.pipeline_mode<synchronous>, transform_indices = @transform_1, window_bounds = array<i64: 16, 16>}, {pipeline_mode = #tpu.pipeline_mode<synchronous>, transform_indices = @transform_2, window_bounds = array<i64: 16, 1>}, {pipeline_mode = #tpu.pipeline_mode<synchronous>, transform_indices = @transform_3, window_bounds = array<i64: 16, 144>}, {pipeline_mode = #tpu.pipeline_mode<synchronous>, transform_indices = @transform_4, window_bounds = array<i64: 16, 1>}, {pipeline_mode = #tpu.pipeline_mode<synchronous>, transform_indices = @transform_5, window_bounds = array<i64: 16, 1>}, {pipeline_mode = #tpu.pipeline_mode<synchronous>, transform_indices = @transform_6, window_bounds = array<i64: 16, 1>}, {pipeline_mode = #tpu.pipeline_mode<synchronous>, transform_indices = @transform_7, window_bounds = array<i64: 512, 64>}, {pipeline_mode = #tpu.pipeline_mode<synchronous>, transform_indices = @transform_8, window_bounds = array<i64: 32, 512>}, {pipeline_mode = #tpu.pipeline_mode<synchronous>, transform_indices = @transform_9, window_bounds = array<i64: 32, 512>}, {pipeline_mode = #tpu.pipeline_mode<synchronous>, transform_indices = @transform_10, window_bounds = array<i64: 2, 512>}, {pipeline_mode = #tpu.pipeline_mode<synchronous>, transform_indices = @transform_11, window_bounds = array<i64: 512, 2>}, {pipeline_mode = #tpu.pipeline_mode<synchronous>, transform_indices = @transform_12, window_bounds = array<i64: 9, 512>}, {transform_indices = @transform_13, window_bounds = array<i64: 1, 16, 512>}]} {
    %c0 = arith.constant 0 : index
    %c0_0 = arith.constant 0 : index
    %c0_1 = arith.constant 0 : index
    %0 = vector.load %arg1[%c0, %c0_0, %c0_1] : memref<1x16x512xf32, #tpu.memory_space<vmem>>, vector<1x16x512xf32>
    %1 = vector.shape_cast %0 : vector<1x16x512xf32> to vector<16x512xf32>
    %c0_2 = arith.constant 0 : index
    %c0_3 = arith.constant 0 : index
    %2 = vector.load %arg8[%c0_2, %c0_3] : memref<512x64xf32, #tpu.memory_space<vmem>>, vector<512x64xf32>
    %cst = arith.constant dense<0.000000e+00> : vector<16x64xf32>
    %3 = tpu.matmul %1, %2, %cst {dimension_numbers = #tpu.dot_dimension_numbers<[1], [0], [0], [1], [0, 0, 1, 1], [], []>} : vector<16x512xf32>, vector<512x64xf32>, vector<16x64xf32> -> vector<16x64xf32>
    %c0_4 = arith.constant 0 : index
    %c0_5 = arith.constant 0 : index
    %4 = vector.load %arg2[%c0_4, %c0_5] : memref<16x16xf32, #tpu.memory_space<vmem>>, vector<16x16xf32>
    %cst_6 = arith.constant dense<0.000000e+00> : vector<16x64xf32>
    %5 = tpu.matmul %4, %3, %cst_6 {dimension_numbers = #tpu.dot_dimension_numbers<[1], [0], [0], [1], [0, 0, 1, 1], [], []>} : vector<16x16xf32>, vector<16x64xf32>, vector<16x64xf32> -> vector<16x64xf32>
    %c0_7 = arith.constant 0 : index
    %c0_8 = arith.constant 0 : index
    %6 = vector.load %arg3[%c0_7, %c0_8] : memref<16x1xf32, #tpu.memory_space<vmem>>, vector<16x1xf32>
    %7 = vector.broadcast %6 : vector<16x1xf32> to vector<16x64xf32>
    %8 = arith.addf %5, %7 : vector<16x64xf32>
    %9 = vector.extract_strided_slice %8 {offsets = [0, 0], sizes = [16, 32], strides = [1, 1]} : vector<16x64xf32> to vector<16x32xf32>
    %c0_9 = arith.constant 0 : index
    %c0_10 = arith.constant 0 : index
    %10 = vector.load %arg9[%c0_9, %c0_10] : memref<32x512xf32, #tpu.memory_space<vmem>>, vector<32x512xf32>
    %cst_11 = arith.constant dense<0.000000e+00> : vector<16x512xf32>
    %11 = tpu.matmul %9, %10, %cst_11 {dimension_numbers = #tpu.dot_dimension_numbers<[1], [0], [0], [1], [0, 0, 1, 1], [], []>} : vector<16x32xf32>, vector<32x512xf32>, vector<16x512xf32> -> vector<16x512xf32>
    %12 = vector.extract_strided_slice %8 {offsets = [0, 32], sizes = [16, 32], strides = [1, 1]} : vector<16x64xf32> to vector<16x32xf32>
    %c0_12 = arith.constant 0 : index
    %c0_13 = arith.constant 0 : index
    %13 = vector.load %arg10[%c0_12, %c0_13] : memref<32x512xf32, #tpu.memory_space<vmem>>, vector<32x512xf32>
    %cst_14 = arith.constant dense<0.000000e+00> : vector<16x512xf32>
    %14 = tpu.matmul %12, %13, %cst_14 {dimension_numbers = #tpu.dot_dimension_numbers<[1], [0], [0], [1], [0, 0, 1, 1], [], []>} : vector<16x32xf32>, vector<32x512xf32>, vector<16x512xf32> -> vector<16x512xf32>
    %15 = arith.negf %11 : vector<16x512xf32>
    %16 = math.exp %15 : vector<16x512xf32>
    %cst_15 = arith.constant 1.000000e+00 : f32
    %17 = vector.broadcast %cst_15 : f32 to vector<16x512xf32>
    %18 = arith.addf %17, %16 : vector<16x512xf32>
    %19 = arith.divf %17, %18 : vector<16x512xf32>
    %20 = arith.mulf %1, %19 : vector<16x512xf32>
    %21 = arith.negf %14 : vector<16x512xf32>
    %22 = math.exp %21 : vector<16x512xf32>
    %cst_16 = arith.constant 1.000000e+00 : f32
    %23 = vector.broadcast %cst_16 : f32 to vector<16x512xf32>
    %24 = arith.addf %23, %22 : vector<16x512xf32>
    %25 = arith.divf %23, %24 : vector<16x512xf32>
    %26 = arith.mulf %20, %25 : vector<16x512xf32>
    %c0_17 = arith.constant 0 : index
    %c0_18 = arith.constant 0 : index
    %27 = vector.load %arg12[%c0_17, %c0_18] : memref<512x2xf32, #tpu.memory_space<vmem>>, vector<512x2xf32>
    %cst_19 = arith.constant dense<0.000000e+00> : vector<16x2xf32>
    %28 = tpu.matmul %26, %27, %cst_19 {dimension_numbers = #tpu.dot_dimension_numbers<[1], [0], [0], [1], [0, 0, 1, 1], [], []>} : vector<16x512xf32>, vector<512x2xf32>, vector<16x2xf32> -> vector<16x2xf32>
    %c0_20 = arith.constant 0 : index
    %c0_21 = arith.constant 0 : index
    %29 = vector.load %arg11[%c0_20, %c0_21] : memref<2x512xf32, #tpu.memory_space<vmem>>, vector<2x512xf32>
    %cst_22 = arith.constant dense<0.000000e+00> : vector<16x512xf32>
    %30 = tpu.matmul %28, %29, %cst_22 {dimension_numbers = #tpu.dot_dimension_numbers<[1], [0], [0], [1], [0, 0, 1, 1], [], []>} : vector<16x2xf32>, vector<2x512xf32>, vector<16x512xf32> -> vector<16x512xf32>
    %31 = arith.subf %26, %30 : vector<16x512xf32>
    %32 = arith.mulf %31, %31 : vector<16x512xf32>
    %c0_23 = arith.constant 0 : index
    %c0_24 = arith.constant 0 : index
    %33 = vector.load %arg12[%c0_23, %c0_24] : memref<512x2xf32, #tpu.memory_space<vmem>>, vector<512x2xf32>
    %cst_25 = arith.constant dense<0.000000e+00> : vector<16x2xf32>
    %34 = tpu.matmul %32, %33, %cst_25 {dimension_numbers = #tpu.dot_dimension_numbers<[1], [0], [0], [1], [0, 0, 1, 1], [], []>} : vector<16x512xf32>, vector<512x2xf32>, vector<16x2xf32> -> vector<16x2xf32>
    %c0_26 = arith.constant 0 : index
    %c0_27 = arith.constant 0 : index
    %35 = vector.load %arg11[%c0_26, %c0_27] : memref<2x512xf32, #tpu.memory_space<vmem>>, vector<2x512xf32>
    %cst_28 = arith.constant dense<0.000000e+00> : vector<16x512xf32>
    %36 = tpu.matmul %34, %35, %cst_28 {dimension_numbers = #tpu.dot_dimension_numbers<[1], [0], [0], [1], [0, 0, 1, 1], [], []>} : vector<16x2xf32>, vector<2x512xf32>, vector<16x512xf32> -> vector<16x512xf32>
    %c0_29 = arith.constant 0 : index
    %c0_30 = arith.constant 0 : index
    %37 = vector.load %arg6[%c0_29, %c0_30] : memref<16x1xf32, #tpu.memory_space<vmem>>, vector<16x1xf32>
    %38 = vector.broadcast %37 : vector<16x1xf32> to vector<16x512xf32>
    %39 = arith.mulf %38, %31 : vector<16x512xf32>
    %cst_31 = arith.constant 9.99999974E-6 : f32
    %40 = vector.broadcast %cst_31 : f32 to vector<16x512xf32>
    %41 = arith.addf %36, %40 : vector<16x512xf32>
    %42 = math.rsqrt %41 : vector<16x512xf32>
    %43 = arith.mulf %39, %42 : vector<16x512xf32>
    %c0_32 = arith.constant 0 : index
    %c0_33 = arith.constant 0 : index
    %44 = vector.load %arg7[%c0_32, %c0_33] : memref<16x1xf32, #tpu.memory_space<vmem>>, vector<16x1xf32>
    %45 = vector.broadcast %44 : vector<16x1xf32> to vector<16x512xf32>
    %46 = arith.addf %43, %45 : vector<16x512xf32>
    %c0_34 = arith.constant 0 : index
    %c0_35 = arith.constant 0 : index
    %47 = vector.load %arg13[%c0_34, %c0_35] : memref<9x512xf32, #tpu.memory_space<vmem>>, vector<9x512xf32>
    %c34_i32 = arith.constant 34 : i32
    %48 = tpu.dynamic_rotate %1 by %c34_i32 dim 1 : vector<16x512xf32>, i32 -> vector<16x512xf32>
    %49 = vector.extract_strided_slice %47 {offsets = [0, 0], sizes = [1, 512], strides = [1, 1]} : vector<9x512xf32> to vector<1x512xf32>
    %50 = vector.broadcast %49 : vector<1x512xf32> to vector<16x512xf32>
    %51 = arith.mulf %48, %50 : vector<16x512xf32>
    %c32_i32 = arith.constant 32 : i32
    %52 = tpu.dynamic_rotate %1 by %c32_i32 dim 1 : vector<16x512xf32>, i32 -> vector<16x512xf32>
    %53 = vector.extract_strided_slice %47 {offsets = [1, 0], sizes = [1, 512], strides = [1, 1]} : vector<9x512xf32> to vector<1x512xf32>
    %54 = vector.broadcast %53 : vector<1x512xf32> to vector<16x512xf32>
    %55 = arith.mulf %52, %54 : vector<16x512xf32>
    %c30_i32 = arith.constant 30 : i32
    %56 = tpu.dynamic_rotate %1 by %c30_i32 dim 1 : vector<16x512xf32>, i32 -> vector<16x512xf32>
    %57 = vector.extract_strided_slice %47 {offsets = [2, 0], sizes = [1, 512], strides = [1, 1]} : vector<9x512xf32> to vector<1x512xf32>
    %58 = vector.broadcast %57 : vector<1x512xf32> to vector<16x512xf32>
    %59 = arith.mulf %56, %58 : vector<16x512xf32>
    %c2_i32 = arith.constant 2 : i32
    %60 = tpu.dynamic_rotate %1 by %c2_i32 dim 1 : vector<16x512xf32>, i32 -> vector<16x512xf32>
    %61 = vector.extract_strided_slice %47 {offsets = [3, 0], sizes = [1, 512], strides = [1, 1]} : vector<9x512xf32> to vector<1x512xf32>
    %62 = vector.broadcast %61 : vector<1x512xf32> to vector<16x512xf32>
    %63 = arith.mulf %60, %62 : vector<16x512xf32>
    %64 = vector.extract_strided_slice %47 {offsets = [4, 0], sizes = [1, 512], strides = [1, 1]} : vector<9x512xf32> to vector<1x512xf32>
    %65 = vector.broadcast %64 : vector<1x512xf32> to vector<16x512xf32>
    %66 = arith.mulf %1, %65 : vector<16x512xf32>
    %c510_i32 = arith.constant 510 : i32
    %67 = tpu.dynamic_rotate %1 by %c510_i32 dim 1 : vector<16x512xf32>, i32 -> vector<16x512xf32>
    %68 = vector.extract_strided_slice %47 {offsets = [5, 0], sizes = [1, 512], strides = [1, 1]} : vector<9x512xf32> to vector<1x512xf32>
    %69 = vector.broadcast %68 : vector<1x512xf32> to vector<16x512xf32>
    %70 = arith.mulf %67, %69 : vector<16x512xf32>
    %c482_i32 = arith.constant 482 : i32
    %71 = tpu.dynamic_rotate %1 by %c482_i32 dim 1 : vector<16x512xf32>, i32 -> vector<16x512xf32>
    %72 = vector.extract_strided_slice %47 {offsets = [6, 0], sizes = [1, 512], strides = [1, 1]} : vector<9x512xf32> to vector<1x512xf32>
    %73 = vector.broadcast %72 : vector<1x512xf32> to vector<16x512xf32>
    %74 = arith.mulf %71, %73 : vector<16x512xf32>
    %c480_i32 = arith.constant 480 : i32
    %75 = tpu.dynamic_rotate %1 by %c480_i32 dim 1 : vector<16x512xf32>, i32 -> vector<16x512xf32>
    %76 = vector.extract_strided_slice %47 {offsets = [7, 0], sizes = [1, 512], strides = [1, 1]} : vector<9x512xf32> to vector<1x512xf32>
    %77 = vector.broadcast %76 : vector<1x512xf32> to vector<16x512xf32>
    %78 = arith.mulf %75, %77 : vector<16x512xf32>
    %c478_i32 = arith.constant 478 : i32
    %79 = tpu.dynamic_rotate %1 by %c478_i32 dim 1 : vector<16x512xf32>, i32 -> vector<16x512xf32>
    %80 = vector.extract_strided_slice %47 {offsets = [8, 0], sizes = [1, 512], strides = [1, 1]} : vector<9x512xf32> to vector<1x512xf32>
    %81 = vector.broadcast %80 : vector<1x512xf32> to vector<16x512xf32>
    %82 = arith.mulf %79, %81 : vector<16x512xf32>
    %83 = tpu.concatenate %51, %55, %59, %63, %66, %70, %74, %78, %82 in 0 : vector<16x512xf32>, vector<16x512xf32>, vector<16x512xf32>, vector<16x512xf32>, vector<16x512xf32>, vector<16x512xf32>, vector<16x512xf32>, vector<16x512xf32>, vector<16x512xf32> -> vector<144x512xf32>
    %c0_36 = arith.constant 0 : index
    %c0_37 = arith.constant 0 : index
    %84 = vector.load %arg4[%c0_36, %c0_37] : memref<16x144xf32, #tpu.memory_space<vmem>>, vector<16x144xf32>
    %cst_38 = arith.constant dense<0.000000e+00> : vector<16x512xf32>
    %85 = tpu.matmul %84, %83, %cst_38 {dimension_numbers = #tpu.dot_dimension_numbers<[1], [0], [0], [1], [0, 0, 1, 1], [], []>} : vector<16x144xf32>, vector<144x512xf32>, vector<16x512xf32> -> vector<16x512xf32>
    %c0_39 = arith.constant 0 : index
    %c0_40 = arith.constant 0 : index
    %86 = vector.load %arg5[%c0_39, %c0_40] : memref<16x1xf32, #tpu.memory_space<vmem>>, vector<16x1xf32>
    %87 = vector.broadcast %86 : vector<16x1xf32> to vector<16x512xf32>
    %88 = arith.addf %85, %87 : vector<16x512xf32>
    %c0_41 = arith.constant 0 : index
    %c0_42 = arith.constant 0 : index
    %89 = vector.load %arg12[%c0_41, %c0_42] : memref<512x2xf32, #tpu.memory_space<vmem>>, vector<512x2xf32>
    %cst_43 = arith.constant dense<0.000000e+00> : vector<16x2xf32>
    %90 = tpu.matmul %46, %89, %cst_43 {dimension_numbers = #tpu.dot_dimension_numbers<[1], [0], [0], [1], [0, 0, 1, 1], [], []>} : vector<16x512xf32>, vector<512x2xf32>, vector<16x2xf32> -> vector<16x2xf32>
    %c0_44 = arith.constant 0 : index
    %c0_45 = arith.constant 0 : index
    %91 = vector.load %arg12[%c0_44, %c0_45] : memref<512x2xf32, #tpu.memory_space<vmem>>, vector<512x2xf32>
    %cst_46 = arith.constant dense<0.000000e+00> : vector<16x2xf32>
    %92 = tpu.matmul %88, %91, %cst_46 {dimension_numbers = #tpu.dot_dimension_numbers<[1], [0], [0], [1], [0, 0, 1, 1], [], []>} : vector<16x512xf32>, vector<512x2xf32>, vector<16x2xf32> -> vector<16x2xf32>
    %cst_47 = arith.constant dense<0xFF800000> : vector<2xf32>
    %93 = vector.multi_reduction <maximumf>, %90, %cst_47 [0] : vector<16x2xf32> to vector<2xf32>
    %94 = vector.shape_cast %93 : vector<2xf32> to vector<1x2xf32>
    %95 = vector.broadcast %94 : vector<1x2xf32> to vector<16x2xf32>
    %96 = arith.subf %90, %95 : vector<16x2xf32>
    %97 = math.exp %96 : vector<16x2xf32>
    %cst_48 = arith.constant dense<0.000000e+00> : vector<2xf32>
    %98 = vector.multi_reduction <add>, %97, %cst_48 [0] : vector<16x2xf32> to vector<2xf32>
    %99 = vector.shape_cast %98 : vector<2xf32> to vector<1x2xf32>
    %100 = vector.broadcast %99 : vector<1x2xf32> to vector<16x2xf32>
    %101 = arith.divf %97, %100 : vector<16x2xf32>
    %cst_49 = arith.constant dense<0xFF800000> : vector<2xf32>
    %102 = vector.multi_reduction <maximumf>, %92, %cst_49 [0] : vector<16x2xf32> to vector<2xf32>
    %103 = vector.shape_cast %102 : vector<2xf32> to vector<1x2xf32>
    %104 = vector.broadcast %103 : vector<1x2xf32> to vector<16x2xf32>
    %105 = arith.subf %92, %104 : vector<16x2xf32>
    %106 = math.exp %105 : vector<16x2xf32>
    %cst_50 = arith.constant dense<0.000000e+00> : vector<2xf32>
    %107 = vector.multi_reduction <add>, %106, %cst_50 [0] : vector<16x2xf32> to vector<2xf32>
    %108 = vector.shape_cast %107 : vector<2xf32> to vector<1x2xf32>
    %109 = vector.broadcast %108 : vector<1x2xf32> to vector<16x2xf32>
    %110 = arith.divf %106, %109 : vector<16x2xf32>
    %c0_51 = arith.constant 0 : index
    %c0_52 = arith.constant 0 : index
    %111 = vector.load %arg11[%c0_51, %c0_52] : memref<2x512xf32, #tpu.memory_space<vmem>>, vector<2x512xf32>
    %cst_53 = arith.constant dense<0.000000e+00> : vector<16x512xf32>
    %112 = tpu.matmul %101, %111, %cst_53 {dimension_numbers = #tpu.dot_dimension_numbers<[1], [0], [0], [1], [0, 0, 1, 1], [], []>} : vector<16x2xf32>, vector<2x512xf32>, vector<16x512xf32> -> vector<16x512xf32>
    %c0_54 = arith.constant 0 : index
    %c0_55 = arith.constant 0 : index
    %113 = vector.load %arg11[%c0_54, %c0_55] : memref<2x512xf32, #tpu.memory_space<vmem>>, vector<2x512xf32>
    %cst_56 = arith.constant dense<0.000000e+00> : vector<16x512xf32>
    %114 = tpu.matmul %110, %113, %cst_56 {dimension_numbers = #tpu.dot_dimension_numbers<[1], [0], [0], [1], [0, 0, 1, 1], [], []>} : vector<16x2xf32>, vector<2x512xf32>, vector<16x512xf32> -> vector<16x512xf32>
    %115 = arith.mulf %112, %88 : vector<16x512xf32>
    %116 = arith.mulf %114, %46 : vector<16x512xf32>
    %117 = arith.addf %115, %116 : vector<16x512xf32>
    %cst_57 = arith.constant dense<0.000000e+00> : vector<512xf32>
    %118 = vector.multi_reduction <add>, %117, %cst_57 [0] : vector<16x512xf32> to vector<512xf32>
    %119 = vector.shape_cast %118 : vector<512xf32> to vector<1x512xf32>
    %120 = arith.negf %119 : vector<1x512xf32>
    %121 = math.exp %120 : vector<1x512xf32>
    %cst_58 = arith.constant 1.000000e+00 : f32
    %122 = vector.broadcast %cst_58 : f32 to vector<1x512xf32>
    %123 = arith.addf %122, %121 : vector<1x512xf32>
    %124 = arith.divf %122, %123 : vector<1x512xf32>
    %125 = vector.broadcast %124 : vector<1x512xf32> to vector<16x512xf32>
    %126 = arith.mulf %1, %125 : vector<16x512xf32>
    %c0_59 = arith.constant 0 : index
    %c0_60 = arith.constant 0 : index
    %c0_61 = arith.constant 0 : index
    %127 = vector.load %arg14[%c0_59, %c0_60, %c0_61] : memref<1x16x512xf32, #tpu.memory_space<vmem>>, vector<1x16x512xf32>
    %128 = vector.shape_cast %127 : vector<1x16x512xf32> to vector<16x512xf32>
    %129 = vector.shape_cast %126 : vector<16x512xf32> to vector<1x16x512xf32>
    tpu.vector_store %arg14[%c0_59, %c0_60, %c0_61], %129 {strides = array<i32>} : memref<1x16x512xf32, #tpu.memory_space<vmem>>, vector<1x16x512xf32>,
    return
  }
  func.func @transform_0(%arg0: i32) -> (i32, i32, i32) {
    %c0_i32 = arith.constant 0 : i32
    %c0_i32_0 = arith.constant 0 : i32
    %c0_i32_1 = arith.constant 0 : i32
    return %arg0, %c0_i32, %c0_i32_0 : i32, i32, i32
  }
  func.func @transform_1(%arg0: i32) -> (i32, i32) {
    %c0_i32 = arith.constant 0 : i32
    %c0_i32_0 = arith.constant 0 : i32
    %c0_i32_1 = arith.constant 0 : i32
    return %c0_i32, %c0_i32_0 : i32, i32
  }
  func.func @transform_2(%arg0: i32) -> (i32, i32) {
    %c0_i32 = arith.constant 0 : i32
    %c0_i32_0 = arith.constant 0 : i32
    %c0_i32_1 = arith.constant 0 : i32
    return %c0_i32, %c0_i32_0 : i32, i32
  }
  func.func @transform_3(%arg0: i32) -> (i32, i32) {
    %c0_i32 = arith.constant 0 : i32
    %c0_i32_0 = arith.constant 0 : i32
    %c0_i32_1 = arith.constant 0 : i32
    return %c0_i32, %c0_i32_0 : i32, i32
  }
  func.func @transform_4(%arg0: i32) -> (i32, i32) {
    %c0_i32 = arith.constant 0 : i32
    %c0_i32_0 = arith.constant 0 : i32
    %c0_i32_1 = arith.constant 0 : i32
    return %c0_i32, %c0_i32_0 : i32, i32
  }
  func.func @transform_5(%arg0: i32) -> (i32, i32) {
    %c0_i32 = arith.constant 0 : i32
    %c0_i32_0 = arith.constant 0 : i32
    %c0_i32_1 = arith.constant 0 : i32
    return %c0_i32, %c0_i32_0 : i32, i32
  }
  func.func @transform_6(%arg0: i32) -> (i32, i32) {
    %c0_i32 = arith.constant 0 : i32
    %c0_i32_0 = arith.constant 0 : i32
    %c0_i32_1 = arith.constant 0 : i32
    return %c0_i32, %c0_i32_0 : i32, i32
  }
  func.func @transform_7(%arg0: i32) -> (i32, i32) {
    %c0_i32 = arith.constant 0 : i32
    %c0_i32_0 = arith.constant 0 : i32
    %c0_i32_1 = arith.constant 0 : i32
    return %c0_i32, %c0_i32_0 : i32, i32
  }
  func.func @transform_8(%arg0: i32) -> (i32, i32) {
    %c0_i32 = arith.constant 0 : i32
    %c0_i32_0 = arith.constant 0 : i32
    %c0_i32_1 = arith.constant 0 : i32
    return %c0_i32, %c0_i32_0 : i32, i32
  }
  func.func @transform_9(%arg0: i32) -> (i32, i32) {
    %c0_i32 = arith.constant 0 : i32
    %c0_i32_0 = arith.constant 0 : i32
    %c0_i32_1 = arith.constant 0 : i32
    return %c0_i32, %c0_i32_0 : i32, i32
  }
  func.func @transform_10(%arg0: i32) -> (i32, i32) {
    %c0_i32 = arith.constant 0 : i32
    %c0_i32_0 = arith.constant 0 : i32
    %c0_i32_1 = arith.constant 0 : i32
    return %c0_i32, %c0_i32_0 : i32, i32
  }
  func.func @transform_11(%arg0: i32) -> (i32, i32) {
    %c0_i32 = arith.constant 0 : i32
    %c0_i32_0 = arith.constant 0 : i32
    %c0_i32_1 = arith.constant 0 : i32
    return %c0_i32, %c0_i32_0 : i32, i32
  }
  func.func @transform_12(%arg0: i32) -> (i32, i32) {
    %c0_i32 = arith.constant 0 : i32
    %c0_i32_0 = arith.constant 0 : i32
    %c0_i32_1 = arith.constant 0 : i32
    return %c0_i32, %c0_i32_0 : i32, i32
  }
  func.func @transform_13(%arg0: i32) -> (i32, i32, i32) {
    %c0_i32 = arith.constant 0 : i32
    %c0_i32_0 = arith.constant 0 : i32
    %c0_i32_1 = arith.constant 0 : i32
    return %arg0, %c0_i32, %c0_i32_0 : i32, i32, i32
  }
}

</mosaic_0001>

<llo_original>
// kernel: tpu_custom_call.1
$region0: #{tpu_custom_call.1}
  #allocation0 [shape = 'u32[]', space=smem, size = 0x4, offset = 0x4, fixed_abs, tag = 'smem constant byte address 0x4 - core index']
  #allocation1 [shape = 'u32[144,128]{1,0:T(1,128)}', space=vmem, size = 0x12000, scoped, tag = 'internal scratch']
  %s0 = inlined_call_operand.vmem [shape: f32[2,16,512], index: 0, kind: input, shape index: {}]
  %s1 = inlined_call_operand.vmem [shape: f32[16,16], index: 1, kind: input, shape index: {}]
  %s2 = inlined_call_operand.vmem [shape: f32[16,1], index: 2, kind: input, shape index: {}]
  %s3 = inlined_call_operand.vmem [shape: f32[16,144], index: 3, kind: input, shape index: {}]
  %s4 = inlined_call_operand.vmem [shape: f32[16,1], index: 4, kind: input, shape index: {}]
  %s5 = inlined_call_operand.vmem [shape: f32[16,1], index: 5, kind: input, shape index: {}]
  %s6 = inlined_call_operand.vmem [shape: f32[16,1], index: 6, kind: input, shape index: {}]
  %s7 = inlined_call_operand.vmem [shape: f32[512,64], index: 7, kind: input, shape index: {}]
  %s8 = inlined_call_operand.vmem [shape: f32[32,512], index: 8, kind: input, shape index: {}]
  %s9 = inlined_call_operand.vmem [shape: f32[32,512], index: 9, kind: input, shape index: {}]
  %s10 = inlined_call_operand.vmem [shape: f32[2,512], index: 10, kind: input, shape index: {}]
  %s11 = inlined_call_operand.vmem [shape: f32[512,2], index: 11, kind: input, shape index: {}]
  %s12 = inlined_call_operand.vmem [shape: f32[9,512], index: 12, kind: input, shape index: {}]
  %s13 = inlined_call_operand.hbm [shape: f32[2,16,512], index: 13, kind: output, shape index: {}]
  %s14 = sld [smem:[#allocation0]]
  $region85: #{tpu_custom_call.1} parent=0
    _
  %s16 = ssub.s32 1, %s14
  %s17 = scalar_select 0, %s16, %s14
  $region1: #{tpu_custom_call.1} parent=0
    #allocation2 [shape = 'u8[65536]{0}', space=vmem, size = 0x10000, scoped, tag = 'output window, operand 0']
    #allocation3 [shape = 's32[2]{0}', space=sflag, size = 0x8, scoped, tag = 'scoped memory for tpu_custom_call.1']
    %18 = vsyncpa [#allocation3], 0
    %s19 = scalar_lea.sflag [#allocation3], 1
    %20 = vsyncpa %s19, 0
    loop: start=0, step=1, limit=4
    $region2: #{tpu_custom_call.1} parent=1 // loop_pre_header
      _
    $region3: #{tpu_custom_call.1} parent=1 // loop_header
      %s22 = sphi 0, %s26
      %p23 = scmp.ge.s32.totalorder %s22, 4
      %s32 = sphi 0, %s34
      %s35 = sphi 0, %s32
      %s36 = sphi 0, %s35
      %s52 = sphi 0, %s36
      %s56 = sphi 0, %s56
      %s58 = sphi 0, %s56
      %s59 = sphi 0, %s58
      %s73 = sphi 0, %s59
      %s77 = sphi 0, %s77
      %s79 = sphi 0, %s77
      %s80 = sphi 0, %s79
      %s94 = sphi 0, %s80
      %s98 = sphi 0, %s98
      %s100 = sphi 0, %s98
      %s101 = sphi 0, %s100
      %s115 = sphi 0, %s101
      %s119 = sphi 0, %s119
      %s121 = sphi 0, %s119
      %s122 = sphi 0, %s121
      %s136 = sphi 0, %s122
      %s140 = sphi 0, %s140
      %s142 = sphi 0, %s140
      %s143 = sphi 0, %s142
      %s157 = sphi 0, %s143
      %s161 = sphi 0, %s161
      %s163 = sphi 0, %s161
      %s164 = sphi 0, %s163
      %s178 = sphi 0, %s164
      %s182 = sphi 0, %s182
      %s184 = sphi 0, %s182
      %s185 = sphi 0, %s184
      %s199 = sphi 0, %s185
      %s203 = sphi 0, %s203
      %s205 = sphi 0, %s203
      %s206 = sphi 0, %s205
      %s220 = sphi 0, %s206
      %s224 = sphi 0, %s224
      %s226 = sphi 0, %s224
      %s227 = sphi 0, %s226
      %s241 = sphi 0, %s227
      %s245 = sphi 0, %s245
      %s247 = sphi 0, %s245
      %s248 = sphi 0, %s247
      %s262 = sphi 0, %s248
      %s266 = sphi 0, %s266
      %s268 = sphi 0, %s266
      %s269 = sphi 0, %s268
      %s283 = sphi 0, %s269
      %s287 = sphi 0, %s287
      %s289 = sphi 0, %s287
      %s290 = sphi 0, %s289
      %s304 = sphi 0, %s290
      %s310 = sphi 0, %s312
      %s313 = sphi 0, %s310
      %s314 = sphi 0, %s313
      %s330 = sphi 0, %s314
    $region4: #{tpu_custom_call.1} parent=1 // loop_header_branch
      %25 = sbr.rel (%p23) target = $region8
    $region5: #{tpu_custom_call.1} parent=1 // loop_body
      %s27 = ssub.s32 %s22, 1
      %s28 = ssub.s32 %s22, 2
      %s29 = sadd.s32 %s22, 1
      %s30 = ssub.s32 %s22, %s29
      %p31 = scmp.eq.s32.totalorder %s30, 0
      %s33 = sadd.s32 %s32, 1
      %s34 = scalar_select %p31, %s32, %s33
      %p37 = pneg %p31
      %p38 = scmp.eq.s32.totalorder %s22, 1
      %p39 = por %p37, %p38
      %p40 = scmp.ne.s32.totalorder %s32, %s35
      %p41 = scmp.eq.s32.totalorder %s22, 0
      %p42 = por %p40, %p41
      %p43 = scmp.ne.s32.totalorder %s32, %s35
      %p44 = scmp.eq.s32.totalorder %s27, 1
      %p45 = por %p43, %p44
      %p46 = scmp.ne.s32.totalorder %s35, %s36
      %p47 = scmp.eq.s32.totalorder %s27, 0
      %p48 = por %p46, %p47
      %p49 = scmp.ne.s32.totalorder %s35, %s36
      %p50 = scmp.eq.s32.totalorder %s28, 1
      %p51 = por %p49, %p50
      %p53 = scmp.ne.s32.totalorder %s36, %s52
      %p54 = scmp.eq.s32.totalorder %s28, 0
      %p55 = por %p53, %p54
      %s57 = sadd.s32 %s56, 1
      %p60 = scmp.eq.s32.totalorder %s22, 1
      %p61 = scmp.ne.s32.totalorder %s56, %s58
      %p62 = scmp.eq.s32.totalorder %s22, 0
      %p63 = por %p61, %p62
      %p64 = scmp.ne.s32.totalorder %s56, %s58
      %p65 = scmp.eq.s32.totalorder %s27, 1
      %p66 = por %p64, %p65
      %p67 = scmp.ne.s32.totalorder %s58, %s59
      %p68 = scmp.eq.s32.totalorder %s27, 0
      %p69 = por %p67, %p68
      %p70 = scmp.ne.s32.totalorder %s58, %s59
      %p71 = scmp.eq.s32.totalorder %s28, 1
      %p72 = por %p70, %p71
      %p74 = scmp.ne.s32.totalorder %s59, %s73
      %p75 = scmp.eq.s32.totalorder %s28, 0
      %p76 = por %p74, %p75
      %s78 = sadd.s32 %s77, 1
      %p81 = scmp.eq.s32.totalorder %s22, 1
      %p82 = scmp.ne.s32.totalorder %s77, %s79
      %p83 = scmp.eq.s32.totalorder %s22, 0
      %p84 = por %p82, %p83
      %p85 = scmp.ne.s32.totalorder %s77, %s79
      %p86 = scmp.eq.s32.totalorder %s27, 1
      %p87 = por %p85, %p86
      %p88 = scmp.ne.s32.totalorder %s79, %s80
      %p89 = scmp.eq.s32.totalorder %s27, 0
      %p90 = por %p88, %p89
      %p91 = scmp.ne.s32.totalorder %s79, %s80
      %p92 = scmp.eq.s32.totalorder %s28, 1
      %p93 = por %p91, %p92
      %p95 = scmp.ne.s32.totalorder %s80, %s94
      %p96 = scmp.eq.s32.totalorder %s28, 0
      %p97 = por %p95, %p96
      %s99 = sadd.s32 %s98, 1
      %p102 = scmp.eq.s32.totalorder %s22, 1
      %p103 = scmp.ne.s32.totalorder %s98, %s100
      %p104 = scmp.eq.s32.totalorder %s22, 0
      %p105 = por %p103, %p104
      %p106 = scmp.ne.s32.totalorder %s98, %s100
      %p107 = scmp.eq.s32.totalorder %s27, 1
      %p108 = por %p106, %p107
      %p109 = scmp.ne.s32.totalorder %s100, %s101
      %p110 = scmp.eq.s32.totalorder %s27, 0
      %p111 = por %p109, %p110
      %p112 = scmp.ne.s32.totalorder %s100, %s101
      %p113 = scmp.eq.s32.totalorder %s28, 1
      %p114 = por %p112, %p113
      %p116 = scmp.ne.s32.totalorder %s101, %s115
      %p117 = scmp.eq.s32.totalorder %s28, 0
      %p118 = por %p116, %p117
      %s120 = sadd.s32 %s119, 1
      %p123 = scmp.eq.s32.totalorder %s22, 1
      %p124 = scmp.ne.s32.totalorder %s119, %s121
      %p125 = scmp.eq.s32.totalorder %s22, 0
      %p126 = por %p124, %p125
      %p127 = scmp.ne.s32.totalorder %s119, %s121
      %p128 = scmp.eq.s32.totalorder %s27, 1
      %p129 = por %p127, %p128
      %p130 = scmp.ne.s32.totalorder %s121, %s122
      %p131 = scmp.eq.s32.totalorder %s27, 0
      %p132 = por %p130, %p131
      %p133 = scmp.ne.s32.totalorder %s121, %s122
      %p134 = scmp.eq.s32.totalorder %s28, 1
      %p135 = por %p133, %p134
      %p137 = scmp.ne.s32.totalorder %s122, %s136
      %p138 = scmp.eq.s32.totalorder %s28, 0
      %p139 = por %p137, %p138
      %s141 = sadd.s32 %s140, 1
      %p144 = scmp.eq.s32.totalorder %s22, 1
      %p145 = scmp.ne.s32.totalorder %s140, %s142
      %p146 = scmp.eq.s32.totalorder %s22, 0
      %p147 = por %p145, %p146
      %p148 = scmp.ne.s32.totalorder %s140, %s142
      %p149 = scmp.eq.s32.totalorder %s27, 1
      %p150 = por %p148, %p149
      %p151 = scmp.ne.s32.totalorder %s142, %s143
      %p152 = scmp.eq.s32.totalorder %s27, 0
      %p153 = por %p151, %p152
      %p154 = scmp.ne.s32.totalorder %s142, %s143
      %p155 = scmp.eq.s32.totalorder %s28, 1
      %p156 = por %p154, %p155
      %p158 = scmp.ne.s32.totalorder %s143, %s157
      %p159 = scmp.eq.s32.totalorder %s28, 0
      %p160 = por %p158, %p159
      %s162 = sadd.s32 %s161, 1
      %p165 = scmp.eq.s32.totalorder %s22, 1
      %p166 = scmp.ne.s32.totalorder %s161, %s163
      %p167 = scmp.eq.s32.totalorder %s22, 0
      %p168 = por %p166, %p167
      %p169 = scmp.ne.s32.totalorder %s161, %s163
      %p170 = scmp.eq.s32.totalorder %s27, 1
      %p171 = por %p169, %p170
      %p172 = scmp.ne.s32.totalorder %s163, %s164
      %p173 = scmp.eq.s32.totalorder %s27, 0
      %p174 = por %p172, %p173
      %p175 = scmp.ne.s32.totalorder %s163, %s164
      %p176 = scmp.eq.s32.totalorder %s28, 1
      %p177 = por %p175, %p176
      %p179 = scmp.ne.s32.totalorder %s164, %s178
      %p180 = scmp.eq.s32.totalorder %s28, 0
      %p181 = por %p179, %p180
      %s183 = sadd.s32 %s182, 1
      %p186 = scmp.eq.s32.totalorder %s22, 1
      %p187 = scmp.ne.s32.totalorder %s182, %s184
      %p188 = scmp.eq.s32.totalorder %s22, 0
      %p189 = por %p187, %p188
      %p190 = scmp.ne.s32.totalorder %s182, %s184
      %p191 = scmp.eq.s32.totalorder %s27, 1
      %p192 = por %p190, %p191
      %p193 = scmp.ne.s32.totalorder %s184, %s185
      %p194 = scmp.eq.s32.totalorder %s27, 0
      %p195 = por %p193, %p194
      %p196 = scmp.ne.s32.totalorder %s184, %s185
      %p197 = scmp.eq.s32.totalorder %s28, 1
      %p198 = por %p196, %p197
      %p200 = scmp.ne.s32.totalorder %s185, %s199
      %p201 = scmp.eq.s32.totalorder %s28, 0
      %p202 = por %p200, %p201
      %s204 = sadd.s32 %s203, 1
      %p207 = scmp.eq.s32.totalorder %s22, 1
      %p208 = scmp.ne.s32.totalorder %s203, %s205
      %p209 = scmp.eq.s32.totalorder %s22, 0
      %p210 = por %p208, %p209
      %p211 = scmp.ne.s32.totalorder %s203, %s205
      %p212 = scmp.eq.s32.totalorder %s27, 1
      %p213 = por %p211, %p212
      %p214 = scmp.ne.s32.totalorder %s205, %s206
      %p215 = scmp.eq.s32.totalorder %s27, 0
      %p216 = por %p214, %p215
      %p217 = scmp.ne.s32.totalorder %s205, %s206
      %p218 = scmp.eq.s32.totalorder %s28, 1
      %p219 = por %p217, %p218
      %p221 = scmp.ne.s32.totalorder %s206, %s220
      %p222 = scmp.eq.s32.totalorder %s28, 0
      %p223 = por %p221, %p222
      %s225 = sadd.s32 %s224, 1
      %p228 = scmp.eq.s32.totalorder %s22, 1
      %p229 = scmp.ne.s32.totalorder %s224, %s226
      %p230 = scmp.eq.s32.totalorder %s22, 0
      %p231 = por %p229, %p230
      %p232 = scmp.ne.s32.totalorder %s224, %s226
      %p233 = scmp.eq.s32.totalorder %s27, 1
      %p234 = por %p232, %p233
      %p235 = scmp.ne.s32.totalorder %s226, %s227
      %p236 = scmp.eq.s32.totalorder %s27, 0
      %p237 = por %p235, %p236
      %p238 = scmp.ne.s32.totalorder %s226, %s227
      %p239 = scmp.eq.s32.totalorder %s28, 1
      %p240 = por %p238, %p239
      %p242 = scmp.ne.s32.totalorder %s227, %s241
      %p243 = scmp.eq.s32.totalorder %s28, 0
      %p244 = por %p242, %p243
      %s246 = sadd.s32 %s245, 1
      %p249 = scmp.eq.s32.totalorder %s22, 1
      %p250 = scmp.ne.s32.totalorder %s245, %s247
      %p251 = scmp.eq.s32.totalorder %s22, 0
      %p252 = por %p250, %p251
      %p253 = scmp.ne.s32.totalorder %s245, %s247
      %p254 = scmp.eq.s32.totalorder %s27, 1
      %p255 = por %p253, %p254
      %p256 = scmp.ne.s32.totalorder %s247, %s248
      %p257 = scmp.eq.s32.totalorder %s27, 0
      %p258 = por %p256, %p257
      %p259 = scmp.ne.s32.totalorder %s247, %s248
      %p260 = scmp.eq.s32.totalorder %s28, 1
      %p261 = por %p259, %p260
      %p263 = scmp.ne.s32.totalorder %s248, %s262
      %p264 = scmp.eq.s32.totalorder %s28, 0
      %p265 = por %p263, %p264
      %s267 = sadd.s32 %s266, 1
      %p270 = scmp.eq.s32.totalorder %s22, 1
      %p271 = scmp.ne.s32.totalorder %s266, %s268
      %p272 = scmp.eq.s32.totalorder %s22, 0
      %p273 = por %p271, %p272
      %p274 = scmp.ne.s32.totalorder %s266, %s268
      %p275 = scmp.eq.s32.totalorder %s27, 1
      %p276 = por %p274, %p275
      %p277 = scmp.ne.s32.totalorder %s268, %s269
      %p278 = scmp.eq.s32.totalorder %s27, 0
      %p279 = por %p277, %p278
      %p280 = scmp.ne.s32.totalorder %s268, %s269
      %p281 = scmp.eq.s32.totalorder %s28, 1
      %p282 = por %p280, %p281
      %p284 = scmp.ne.s32.totalorder %s269, %s283
      %p285 = scmp.eq.s32.totalorder %s28, 0
      %p286 = por %p284, %p285
      %s288 = sadd.s32 %s287, 1
      %p291 = scmp.eq.s32.totalorder %s22, 1
      %p292 = scmp.ne.s32.totalorder %s287, %s289
      %p293 = scmp.eq.s32.totalorder %s22, 0
      %p294 = por %p292, %p293
      %p295 = scmp.ne.s32.totalorder %s287, %s289
      %p296 = scmp.eq.s32.totalorder %s27, 1
      %p297 = por %p295, %p296
      %p298 = scmp.ne.s32.totalorder %s289, %s290
      %p299 = scmp.eq.s32.totalorder %s27, 0
      %p300 = por %p298, %p299
      %p301 = scmp.ne.s32.totalorder %s289, %s290
      %p302 = scmp.eq.s32.totalorder %s28, 1
      %p303 = por %p301, %p302
      %p305 = scmp.ne.s32.totalorder %s290, %s304
      %p306 = scmp.eq.s32.totalorder %s28, 0
      %p307 = por %p305, %p306
      %s308 = ssub.s32 %s22, %s29
      %p309 = scmp.eq.s32.totalorder %s308, 0
      %s311 = sadd.s32 %s310, 1
      %s312 = scalar_select %p309, %s310, %s311
      %p315 = pneg %p309
      %p316 = scmp.eq.s32.totalorder %s22, 1
      %p317 = por %p315, %p316
      %p318 = scmp.ne.s32.totalorder %s310, %s313
      %p319 = scmp.eq.s32.totalorder %s22, 0
      %p320 = por %p318, %p319
      %p321 = scmp.ne.s32.totalorder %s310, %s313
      %p322 = scmp.eq.s32.totalorder %s27, 1
      %p323 = por %p321, %p322
      %p324 = scmp.ne.s32.totalorder %s313, %s314
      %p325 = scmp.eq.s32.totalorder %s27, 0
      %p326 = por %p324, %p325
      %p327 = scmp.ne.s32.totalorder %s313, %s314
      %p328 = scmp.eq.s32.totalorder %s28, 1
      %p329 = por %p327, %p328
      %p331 = scmp.ne.s32.totalorder %s314, %s330
      %p332 = scmp.eq.s32.totalorder %s28, 0
      %p333 = por %p331, %p332
      %p334 = scmp.le.s32.totalorder 1, %s22
      %p335 = scmp.lt.s32.totalorder %s22, 3
      %p336 = pnand %p334, %p335
      %p337 = pneg %p336
      // Predicated region
      $region9: #{tpu_custom_call.1} parent=5 // pred_check
        _
      $region10: #{tpu_custom_call.1} parent=5 // pred_check_branch
        %339 = sbr.rel (%p336) target = $region12
      $region11: #{tpu_custom_call.1} parent=5 // pred_region
        %s340 = ssub.s32 %s22, 1
        // Predicated region
        $region13: #{tpu_custom_call.1} parent=11 // pred_check
          %p341 = pneg %p69
        $region14: #{tpu_custom_call.1} parent=11 // pred_check_branch
          %343 = sbr.rel (%p341) target = $region16
        $region15: #{tpu_custom_call.1} parent=11 // pred_region
          _
        $region16: #{tpu_custom_call.1} parent=11 // pred_fallthru
          _
        // Predicated region
        $region17: #{tpu_custom_call.1} parent=11 // pred_check
          %p344 = pneg %p90
        $region18: #{tpu_custom_call.1} parent=11 // pred_check_branch
          %346 = sbr.rel (%p344) target = $region20
        $region19: #{tpu_custom_call.1} parent=11 // pred_region
          _
        $region20: #{tpu_custom_call.1} parent=11 // pred_fallthru
          _
        // Predicated region
        $region21: #{tpu_custom_call.1} parent=11 // pred_check
          %p347 = pneg %p111
        $region22: #{tpu_custom_call.1} parent=11 // pred_check_branch
          %349 = sbr.rel (%p347) target = $region24
        $region23: #{tpu_custom_call.1} parent=11 // pred_region
          _
        $region24: #{tpu_custom_call.1} parent=11 // pred_fallthru
          _
        // Predicated region
        $region25: #{tpu_custom_call.1} parent=11 // pred_check
          %p350 = pneg %p132
        $region26: #{tpu_custom_call.1} parent=11 // pred_check_branch
          %352 = sbr.rel (%p350) target = $region28
        $region27: #{tpu_custom_call.1} parent=11 // pred_region
          _
        $region28: #{tpu_custom_call.1} parent=11 // pred_fallthru
          _
        // Predicated region
        $region29: #{tpu_custom_call.1} parent=11 // pred_check
          %p353 = pneg %p153
        $region30: #{tpu_custom_call.1} parent=11 // pred_check_branch
          %355 = sbr.rel (%p353) target = $region32
        $region31: #{tpu_custom_call.1} parent=11 // pred_region
          _
        $region32: #{tpu_custom_call.1} parent=11 // pred_fallthru
          _
        // Predicated region
        $region33: #{tpu_custom_call.1} parent=11 // pred_check
          %p356 = pneg %p174
        $region34: #{tpu_custom_call.1} parent=11 // pred_check_branch
          %358 = sbr.rel (%p356) target = $region36
        $region35: #{tpu_custom_call.1} parent=11 // pred_region
          _
        $region36: #{tpu_custom_call.1} parent=11 // pred_fallthru
          _
        // Predicated region
        $region37: #{tpu_custom_call.1} parent=11 // pred_check
          %p359 = pneg %p195
        $region38: #{tpu_custom_call.1} parent=11 // pred_check_branch
          %361 = sbr.rel (%p359) target = $region40
        $region39: #{tpu_custom_call.1} parent=11 // pred_region
          _
        $region40: #{tpu_custom_call.1} parent=11 // pred_fallthru
          _
        // Predicated region
        $region41: #{tpu_custom_call.1} parent=11 // pred_check
          %p362 = pneg %p216
        $region42: #{tpu_custom_call.1} parent=11 // pred_check_branch
          %364 = sbr.rel (%p362) target = $region44
        $region43: #{tpu_custom_call.1} parent=11 // pred_region
          _
        $region44: #{tpu_custom_call.1} parent=11 // pred_fallthru
          _
        // Predicated region
        $region45: #{tpu_custom_call.1} parent=11 // pred_check
          %p365 = pneg %p237
        $region46: #{tpu_custom_call.1} parent=11 // pred_check_branch
          %367 = sbr.rel (%p365) target = $region48
        $region47: #{tpu_custom_call.1} parent=11 // pred_region
          _
        $region48: #{tpu_custom_call.1} parent=11 // pred_fallthru
          _
        // Predicated region
        $region49: #{tpu_custom_call.1} parent=11 // pred_check
          %p368 = pneg %p258
        $region50: #{tpu_custom_call.1} parent=11 // pred_check_branch
          %370 = sbr.rel (%p368) target = $region52
        $region51: #{tpu_custom_call.1} parent=11 // pred_region
          _
        $region52: #{tpu_custom_call.1} parent=11 // pred_fallthru
          _
        // Predicated region
        $region53: #{tpu_custom_call.1} parent=11 // pred_check
          %p371 = pneg %p279
        $region54: #{tpu_custom_call.1} parent=11 // pred_check_branch
          %373 = sbr.rel (%p371) target = $region56
        $region55: #{tpu_custom_call.1} parent=11 // pred_region
          _
        $region56: #{tpu_custom_call.1} parent=11 // pred_fallthru
          _
        // Predicated region
        $region57: #{tpu_custom_call.1} parent=11 // pred_check
          %p374 = pneg %p300
        $region58: #{tpu_custom_call.1} parent=11 // pred_check_branch
          %376 = sbr.rel (%p374) target = $region60
        $region59: #{tpu_custom_call.1} parent=11 // pred_region
          _
        $region60: #{tpu_custom_call.1} parent=11 // pred_fallthru
          _
      $region12: #{tpu_custom_call.1} parent=5 // pred_fallthru
        _
      %p377 = scmp.lt.s32.totalorder %s22, 2
      // Predicated region
      $region61: #{tpu_custom_call.1} parent=5 // pred_check
        %p378 = pneg %p377
      $region62: #{tpu_custom_call.1} parent=5 // pred_check_branch
        %380 = sbr.rel (%p378) target = $region64
      $region63: #{tpu_custom_call.1} parent=5 // pred_region
        // Predicated region
        $region65: #{tpu_custom_call.1} parent=63 // pred_check
          %p381 = pneg %p42
        $region66: #{tpu_custom_call.1} parent=63 // pred_check_branch
          %383 = sbr.rel (%p381) target = $region68
        $region67: #{tpu_custom_call.1} parent=63 // pred_region
          %p384 = scmp.lt.s32.totalorder %s22, 1
          %s385 = scalar_select %p384, %s22, 1
          %s386 = smul.addr %s385, 8
          %s387 = smul.addr %s386, 8
          %s388 = scalar_lea.vmem %s0, %s387
        $region68: #{tpu_custom_call.1} parent=63 // pred_fallthru
          _
      $region64: #{tpu_custom_call.1} parent=5 // pred_fallthru
        _
      %p389 = scmp.le.s32.totalorder 1, %s22
      %p390 = scmp.lt.s32.totalorder %s22, 3
      %p391 = pnand %p389, %p390
      %p392 = pneg %p391
      // Predicated region
      $region69: #{tpu_custom_call.1} parent=5 // pred_check
        _
      $region70: #{tpu_custom_call.1} parent=5 // pred_check_branch
        %394 = sbr.rel (%p391) target = $region72
      $region71: #{tpu_custom_call.1} parent=5 // pred_region
        %s395 = ssub.s32 %s22, 1
        %p396 = scmp.lt.s32.totalorder %s27, 1
        %s397 = scalar_select %p396, %s27, 1
        %s398 = smul.addr %s397, 8
        %s399 = smul.addr %s398, 8
        %s400 = scalar_lea.vmem %s0, %s399
        %p401 = pneg %p48
        %p402 = pneg %p45
        %p403 = pneg %p69
        %p404 = pneg %p66
        %p405 = pneg %p90
        %p406 = pneg %p87
        %p407 = pneg %p111
        %p408 = pneg %p108
        %p409 = pneg %p132
        %p410 = pneg %p129
        %p411 = pneg %p153
        %p412 = pneg %p150
        %p413 = pneg %p174
        %p414 = pneg %p171
        %p415 = pneg %p195
        %p416 = pneg %p192
        %p417 = pneg %p216
        %p418 = pneg %p213
        %p419 = pneg %p237
        %p420 = pneg %p234
        %p421 = pneg %p258
        %p422 = pneg %p255
        %p423 = pneg %p279
        %p424 = pneg %p276
        %p425 = pneg %p300
        %p426 = pneg %p297
        %p427 = pneg %p326
        %p428 = pneg %p323
        %s429 = sand.u32 %s313, 1
        %s430 = scalar_lea.sflag [#allocation3], %s429
        %s431 = sand.u32 %s313, 1
        %s432 = smul.addr %s431, 64
        %s433 = scalar_lea.vmem [#allocation2], %s432
        %p434 = scmp.lt.s32.totalorder %s27, 1
        %s435 = scalar_select %p434, %s27, 1
        %s436 = smul.addr %s435, 8
        %s437 = smul.addr %s436, 8
        %s438 = scalar_lea.vmem %s0, %s437
        %v439 = vld [vmem:[%s438] sm:$0xff]
        %v440 = vld [vmem:[%s438 + $0x8] sm:$0xff]
        %v441 = vld [vmem:[%s438 + $0x10] sm:$0xff]
        %v442 = vld [vmem:[%s438 + $0x18] sm:$0xff]
        %v443 = vld [vmem:[%s438 + $0x20] sm:$0xff]
        %v444 = vld [vmem:[%s438 + $0x28] sm:$0xff]
        %v445 = vld [vmem:[%s438 + $0x30] sm:$0xff]
        %v446 = vld [vmem:[%s438 + $0x38] sm:$0xff]
        %v447 = vld [vmem:[%s7] sm:$0xff]
        %v448 = vld [vmem:[%s7 + $0x8] sm:$0xff]
        %v449 = vld [vmem:[%s7 + $0x10] sm:$0xff]
        %v450 = vld [vmem:[%s7 + $0x18] sm:$0xff]
        %v451 = vld [vmem:[%s7 + $0x20] sm:$0xff]
        %v452 = vld [vmem:[%s7 + $0x28] sm:$0xff]
        %v453 = vld [vmem:[%s7 + $0x30] sm:$0xff]
        %v454 = vld [vmem:[%s7 + $0x38] sm:$0xff]
        %v455 = vld [vmem:[%s7 + $0x40] sm:$0xff]
        %v456 = vld [vmem:[%s7 + $0x48] sm:$0xff]
        %v457 = vld [vmem:[%s7 + $0x50] sm:$0xff]
        %v458 = vld [vmem:[%s7 + $0x58] sm:$0xff]
        %v459 = vld [vmem:[%s7 + $0x60] sm:$0xff]
        %v460 = vld [vmem:[%s7 + $0x68] sm:$0xff]
        %v461 = vld [vmem:[%s7 + $0x70] sm:$0xff]
        %v462 = vld [vmem:[%s7 + $0x78] sm:$0xff]
        %v463 = vld [vmem:[%s7 + $0x80] sm:$0xff]
        %v464 = vld [vmem:[%s7 + $0x88] sm:$0xff]
        %v465 = vld [vmem:[%s7 + $0x90] sm:$0xff]
        %v466 = vld [vmem:[%s7 + $0x98] sm:$0xff]
        %v467 = vld [vmem:[%s7 + $0xa0] sm:$0xff]
        %v468 = vld [vmem:[%s7 + $0xa8] sm:$0xff]
        %v469 = vld [vmem:[%s7 + $0xb0] sm:$0xff]
        %v470 = vld [vmem:[%s7 + $0xb8] sm:$0xff]
        %v471 = vld [vmem:[%s7 + $0xc0] sm:$0xff]
        %v472 = vld [vmem:[%s7 + $0xc8] sm:$0xff]
        %v473 = vld [vmem:[%s7 + $0xd0] sm:$0xff]
        %v474 = vld [vmem:[%s7 + $0xd8] sm:$0xff]
        %v475 = vld [vmem:[%s7 + $0xe0] sm:$0xff]
        %v476 = vld [vmem:[%s7 + $0xe8] sm:$0xff]
        %v477 = vld [vmem:[%s7 + $0xf0] sm:$0xff]
        %v478 = vld [vmem:[%s7 + $0xf8] sm:$0xff]
        %v479 = vld [vmem:[%s7 + $0x100] sm:$0xff]
        %v480 = vld [vmem:[%s7 + $0x108] sm:$0xff]
        %v481 = vld [vmem:[%s7 + $0x110] sm:$0xff]
        %v482 = vld [vmem:[%s7 + $0x118] sm:$0xff]
        %v483 = vld [vmem:[%s7 + $0x120] sm:$0xff]
        %v484 = vld [vmem:[%s7 + $0x128] sm:$0xff]
        %v485 = vld [vmem:[%s7 + $0x130] sm:$0xff]
        %v486 = vld [vmem:[%s7 + $0x138] sm:$0xff]
        %v487 = vld [vmem:[%s7 + $0x140] sm:$0xff]
        %v488 = vld [vmem:[%s7 + $0x148] sm:$0xff]
        %v489 = vld [vmem:[%s7 + $0x150] sm:$0xff]
        %v490 = vld [vmem:[%s7 + $0x158] sm:$0xff]
        %v491 = vld [vmem:[%s7 + $0x160] sm:$0xff]
        %v492 = vld [vmem:[%s7 + $0x168] sm:$0xff]
        %v493 = vld [vmem:[%s7 + $0x170] sm:$0xff]
        %v494 = vld [vmem:[%s7 + $0x178] sm:$0xff]
        %v495 = vld [vmem:[%s7 + $0x180] sm:$0xff]
        %v496 = vld [vmem:[%s7 + $0x188] sm:$0xff]
        %v497 = vld [vmem:[%s7 + $0x190] sm:$0xff]
        %v498 = vld [vmem:[%s7 + $0x198] sm:$0xff]
        %v499 = vld [vmem:[%s7 + $0x1a0] sm:$0xff]
        %v500 = vld [vmem:[%s7 + $0x1a8] sm:$0xff]
        %v501 = vld [vmem:[%s7 + $0x1b0] sm:$0xff]
        %v502 = vld [vmem:[%s7 + $0x1b8] sm:$0xff]
        %v503 = vld [vmem:[%s7 + $0x1c0] sm:$0xff]
        %v504 = vld [vmem:[%s7 + $0x1c8] sm:$0xff]
        %v505 = vld [vmem:[%s7 + $0x1d0] sm:$0xff]
        %v506 = vld [vmem:[%s7 + $0x1d8] sm:$0xff]
        %v507 = vld [vmem:[%s7 + $0x1e0] sm:$0xff]
        %v508 = vld [vmem:[%s7 + $0x1e8] sm:$0xff]
        %v509 = vld [vmem:[%s7 + $0x1f0] sm:$0xff]
        %v510 = vld [vmem:[%s7 + $0x1f8] sm:$0xff]
        %511 = vmatprep.subr.mxu0 0.0
        %512 = vmatpush1.msra.mxu0 %v447
        %513 = vmatprep.subr.mxu0 0.0
        %514 = vmatpush1.msra.mxu0 %v448
        %515 = vmatprep.subr.mxu0 0.0
        %516 = vmatpush1.msra.mxu0 %v449
        %517 = vmatprep.subr.mxu0 0.0
        %518 = vmatpush1.msra.mxu0 %v450
        %519 = vmatprep.subr.mxu0 0.0
        %520 = vmatpush1.msra.mxu0 %v451
        %521 = vmatprep.subr.mxu0 0.0
        %522 = vmatpush1.msra.mxu0 %v452
        %523 = vmatprep.subr.mxu0 0.0
        %524 = vmatpush1.msra.mxu0 %v453
        %525 = vmatprep.subr.mxu0 0.0
        %526 = vmatpush1.msra.mxu0 %v454
        %527 = vmatprep.subr.mxu0 0.0
        %528 = vmatpush1.msra.mxu0 %v455
        %529 = vmatprep.subr.mxu0 0.0
        %530 = vmatpush1.msra.mxu0 %v456
        %531 = vmatprep.subr.mxu0 0.0
        %532 = vmatpush1.msra.mxu0 %v457
        %533 = vmatprep.subr.mxu0 0.0
        %534 = vmatpush1.msra.mxu0 %v458
        %535 = vmatprep.subr.mxu0 0.0
        %536 = vmatpush1.msra.mxu0 %v459
        %537 = vmatprep.subr.mxu0 0.0
        %538 = vmatpush1.msra.mxu0 %v460
        %539 = vmatprep.subr.mxu0 0.0
        %540 = vmatpush1.msra.mxu0 %v461
        %541 = vmatprep.subr.mxu0 0.0
        %542 = vmatpush1.msra.mxu0 %v462
        %543 = vmatprep.subr.mxu0 0.0
        %544 = vmatpush1.msra.mxu0 %v463
        %545 = vmatprep.subr.mxu0 0.0
        %546 = vmatpush1.msra.mxu0 %v464
        %547 = vmatprep.subr.mxu0 0.0
        %548 = vmatpush1.msra.mxu0 %v465
        %549 = vmatprep.subr.mxu0 0.0
        %550 = vmatpush1.msra.mxu0 %v466
        %551 = vmatprep.subr.mxu0 0.0
        %552 = vmatpush1.msra.mxu0 %v467
        %553 = vmatprep.subr.mxu0 0.0
        %554 = vmatpush1.msra.mxu0 %v468
        %555 = vmatprep.subr.mxu0 0.0
        %556 = vmatpush1.msra.mxu0 %v469
        %557 = vmatprep.subr.mxu0 0.0
        %558 = vmatpush1.msra.mxu0 %v470
        %559 = vmatprep.subr.mxu0 0.0
        %560 = vmatpush1.msra.mxu0 %v471
        %561 = vmatprep.subr.mxu0 0.0
        %562 = vmatpush1.msra.mxu0 %v472
        %563 = vmatprep.subr.mxu0 0.0
        %564 = vmatpush1.msra.mxu0 %v473
        %565 = vmatprep.subr.mxu0 0.0
        %566 = vmatpush1.msra.mxu0 %v474
        %567 = vmatprep.subr.mxu0 0.0
        %568 = vmatpush1.msra.mxu0 %v475
        %569 = vmatprep.subr.mxu0 0.0
        %570 = vmatpush1.msra.mxu0 %v476
        %571 = vmatprep.subr.mxu0 0.0
        %572 = vmatpush1.msra.mxu0 %v477
        %573 = vmatprep.subr.mxu0 0.0
        %574 = vmatpush1.msra.mxu0 %v478
        %575 = vmatprep.mubr.f32.mxu0 %v440
        %576 = vmatmul.mubr.f32.gmra.mrb[0].mxu0 %v439
        %v577 = vpop.f32.mrb[0].mxu0
        %v578 = vadd.f32 0.0, %v577
        %v579 = vpop.f32.mrb[0].mxu0
        %580 = vmatprep.mubr.f32.mxu0 %v444
        %581 = vmatmul.mubr.f32.gmra.mrb[0].mxu0 %v443
        %v582 = vpop.f32.mrb[0].mxu0
        %v583 = vadd.f32 0.0, %v582
        %v584 = vpop.f32.mrb[0].mxu0
        %585 = vdwg.mxu0
        %586 = vmatprep.subr.mxu0 0.0
        %587 = vmatpush1.msra.mxu0 %v479
        %588 = vmatprep.subr.mxu0 0.0
        %589 = vmatpush1.msra.mxu0 %v480
        %590 = vmatprep.subr.mxu0 0.0
        %591 = vmatpush1.msra.mxu0 %v481
        %592 = vmatprep.subr.mxu0 0.0
        %593 = vmatpush1.msra.mxu0 %v482
        %594 = vmatprep.subr.mxu0 0.0
        %595 = vmatpush1.msra.mxu0 %v483
        %596 = vmatprep.subr.mxu0 0.0
        %597 = vmatpush1.msra.mxu0 %v484
        %598 = vmatprep.subr.mxu0 0.0
        %599 = vmatpush1.msra.mxu0 %v485
        %600 = vmatprep.subr.mxu0 0.0
        %601 = vmatpush1.msra.mxu0 %v486
        %602 = vmatprep.subr.mxu0 0.0
        %603 = vmatpush1.msra.mxu0 %v487
        %604 = vmatprep.subr.mxu0 0.0
        %605 = vmatpush1.msra.mxu0 %v488
        %606 = vmatprep.subr.mxu0 0.0
        %607 = vmatpush1.msra.mxu0 %v489
        %608 = vmatprep.subr.mxu0 0.0
        %609 = vmatpush1.msra.mxu0 %v490
        %610 = vmatprep.subr.mxu0 0.0
        %611 = vmatpush1.msra.mxu0 %v491
        %612 = vmatprep.subr.mxu0 0.0
        %613 = vmatpush1.msra.mxu0 %v492
        %614 = vmatprep.subr.mxu0 0.0
        %615 = vmatpush1.msra.mxu0 %v493
        %616 = vmatprep.subr.mxu0 0.0
        %617 = vmatpush1.msra.mxu0 %v494
        %618 = vmatprep.subr.mxu0 0.0
        %619 = vmatpush1.msra.mxu0 %v495
        %620 = vmatprep.subr.mxu0 0.0
        %621 = vmatpush1.msra.mxu0 %v496
        %622 = vmatprep.subr.mxu0 0.0
        %623 = vmatpush1.msra.mxu0 %v497
        %624 = vmatprep.subr.mxu0 0.0
        %625 = vmatpush1.msra.mxu0 %v498
        %626 = vmatprep.subr.mxu0 0.0
        %627 = vmatpush1.msra.mxu0 %v499
        %628 = vmatprep.subr.mxu0 0.0
        %629 = vmatpush1.msra.mxu0 %v500
        %630 = vmatprep.subr.mxu0 0.0
        %631 = vmatpush1.msra.mxu0 %v501
        %632 = vmatprep.subr.mxu0 0.0
        %633 = vmatpush1.msra.mxu0 %v502
        %634 = vmatprep.subr.mxu0 0.0
        %635 = vmatpush1.msra.mxu0 %v503
        %636 = vmatprep.subr.mxu0 0.0
        %637 = vmatpush1.msra.mxu0 %v504
        %638 = vmatprep.subr.mxu0 0.0
        %639 = vmatpush1.msra.mxu0 %v505
        %640 = vmatprep.subr.mxu0 0.0
        %641 = vmatpush1.msra.mxu0 %v506
        %642 = vmatprep.subr.mxu0 0.0
        %643 = vmatpush1.msra.mxu0 %v507
        %644 = vmatprep.subr.mxu0 0.0
        %645 = vmatpush1.msra.mxu0 %v508
        %646 = vmatprep.subr.mxu0 0.0
        %647 = vmatpush1.msra.mxu0 %v509
        %648 = vmatprep.subr.mxu0 0.0
        %649 = vmatpush1.msra.mxu0 %v510
        %650 = vmatprep.mubr.f32.mxu0 %v442
        %651 = vmatmul.mubr.f32.gmra.mrb[0].mxu0 %v441
        %v652 = vpop.f32.mrb[0].mxu0
        %v653 = vadd.f32 %v578, %v652
        %v654 = vpop.f32.mrb[0].mxu0
        %655 = vmatprep.mubr.f32.mxu0 %v446
        %656 = vmatmul.mubr.f32.gmra.mrb[0].mxu0 %v445
        %v657 = vpop.f32.mrb[0].mxu0
        %v658 = vadd.f32 %v583, %v657
        %v659 = vpop.f32.mrb[0].mxu0
        %660 = vdwg.mxu0
        %v661 = vld [vmem:[%s1] sm:$0xff]
        %v662 = vld [vmem:[%s1 + $0x8] sm:$0xff]
        %v663 = vld [vmem:[%s2] sm:$0xff]
        %v664 = vld [vmem:[%s2 + $0x8] sm:$0xff]
        %666 = vset.pattern.permute.xlu0 0
        %667 = vperm.xlu0 %666, %v663
        %v668 = vpop.permute.xlu0 %667
        %671 = vset.pattern.permute.xlu0 0
        %672 = vperm.xlu0 %671, %v664
        %v673 = vpop.permute.xlu0 %672
        %vm675 = vcmask 130048
        %v677 = vsel %vm675, %v661, 0
        %v680 = vsel %vm675, %v662, 0
        %682 = vmatprep.subr.mxu0 0.0
        %683 = vmatpush1.msra.mxu0 %v653
        %684 = vmatprep.subr.mxu0 0.0
        %685 = vmatpush1.msra.mxu0 %v658
        %686 = vmatprep.subr.mxu0 0.0
        %687 = vmatpush1.msra.mxu0 0.0
        %688 = vmatprep.subr.mxu0 0.0
        %689 = vmatpush1.msra.mxu0 0.0
        %690 = vmatprep.subr.mxu0 0.0
        %691 = vmatpush1.msra.mxu0 0.0
        %692 = vmatprep.subr.mxu0 0.0
        %693 = vmatpush1.msra.mxu0 0.0
        %694 = vmatprep.subr.mxu0 0.0
        %695 = vmatpush1.msra.mxu0 0.0
        %696 = vmatprep.subr.mxu0 0.0
        %697 = vmatpush1.msra.mxu0 0.0
        %698 = vmatprep.subr.mxu0 0.0
        %699 = vmatpush1.msra.mxu0 0.0
        %700 = vmatprep.subr.mxu0 0.0
        %701 = vmatpush1.msra.mxu0 0.0
        %702 = vmatprep.subr.mxu0 0.0
        %703 = vmatpush1.msra.mxu0 0.0
        %704 = vmatprep.subr.mxu0 0.0
        %705 = vmatpush1.msra.mxu0 0.0
        %706 = vmatprep.subr.mxu0 0.0
        %707 = vmatpush1.msra.mxu0 0.0
        %708 = vmatprep.subr.mxu0 0.0
        %709 = vmatpush1.msra.mxu0 0.0
        %710 = vmatprep.subr.mxu0 0.0
        %711 = vmatpush1.msra.mxu0 0.0
        %712 = vmatprep.subr.mxu0 0.0
        %713 = vmatpush1.msra.mxu0 0.0
        %714 = vmatprep.subr.mxu0 0.0
        %715 = vmatpush1.msra.mxu0 0.0
        %716 = vmatprep.subr.mxu0 0.0
        %717 = vmatpush1.msra.mxu0 0.0
        %718 = vmatprep.subr.mxu0 0.0
        %719 = vmatpush1.msra.mxu0 0.0
        %720 = vmatprep.subr.mxu0 0.0
        %721 = vmatpush1.msra.mxu0 0.0
        %722 = vmatprep.subr.mxu0 0.0
        %723 = vmatpush1.msra.mxu0 0.0
        %724 = vmatprep.subr.mxu0 0.0
        %725 = vmatpush1.msra.mxu0 0.0
        %726 = vmatprep.subr.mxu0 0.0
        %727 = vmatpush1.msra.mxu0 0.0
        %728 = vmatprep.subr.mxu0 0.0
        %729 = vmatpush1.msra.mxu0 0.0
        %730 = vmatprep.subr.mxu0 0.0
        %731 = vmatpush1.msra.mxu0 0.0
        %732 = vmatprep.subr.mxu0 0.0
        %733 = vmatpush1.msra.mxu0 0.0
        %734 = vmatprep.subr.mxu0 0.0
        %735 = vmatpush1.msra.mxu0 0.0
        %736 = vmatprep.subr.mxu0 0.0
        %737 = vmatpush1.msra.mxu0 0.0
        %738 = vmatprep.subr.mxu0 0.0
        %739 = vmatpush1.msra.mxu0 0.0
        %740 = vmatprep.subr.mxu0 0.0
        %741 = vmatpush1.msra.mxu0 0.0
        %742 = vmatprep.subr.mxu0 0.0
        %743 = vmatpush1.msra.mxu0 0.0
        %744 = vmatprep.subr.mxu0 0.0
        %745 = vmatpush1.msra.mxu0 0.0
        %746 = vmatprep.mubr.f32.mxu0 0.0
        %747 = vmatmul.mubr.f32.gmra.mrb[0].mxu0 %v677
        %v748 = vpop.f32.mrb[0].mxu0
        %v749 = vadd.f32 %v668, %v748
        %v750 = vpop.f32.mrb[0].mxu0
        %751 = vmatprep.mubr.f32.mxu0 0.0
        %752 = vmatmul.mubr.f32.gmra.mrb[0].mxu0 %v680
        %v753 = vpop.f32.mrb[0].mxu0
        %v754 = vadd.f32 %v673, %v753
        %v755 = vpop.f32.mrb[0].mxu0
        %756 = vdwg.mxu0
        %v757 = vld [vmem:[%s8] sm:$0xff]
        %v758 = vld [vmem:[%s8 + $0x8] sm:$0xff]
        %v759 = vld [vmem:[%s8 + $0x10] sm:$0xff]
        %v760 = vld [vmem:[%s8 + $0x18] sm:$0xff]
        %v761 = vld [vmem:[%s8 + $0x20] sm:$0xff]
        %v762 = vld [vmem:[%s8 + $0x28] sm:$0xff]
        %v763 = vld [vmem:[%s8 + $0x30] sm:$0xff]
        %v764 = vld [vmem:[%s8 + $0x38] sm:$0xff]
        %v765 = vld [vmem:[%s8 + $0x40] sm:$0xff]
        %v766 = vld [vmem:[%s8 + $0x48] sm:$0xff]
        %v767 = vld [vmem:[%s8 + $0x50] sm:$0xff]
        %v768 = vld [vmem:[%s8 + $0x58] sm:$0xff]
        %v769 = vld [vmem:[%s8 + $0x60] sm:$0xff]
        %v770 = vld [vmem:[%s8 + $0x68] sm:$0xff]
        %v771 = vld [vmem:[%s8 + $0x70] sm:$0xff]
        %v772 = vld [vmem:[%s8 + $0x78] sm:$0xff]
        %vm773 = vcmask 261120
        %v775 = vsel %vm773, %v749, 0
        %v778 = vsel %vm773, %v754, 0
        %780 = vmatprep.subr.mxu0 %v758
        %781 = vmatpush1.msra.mxu0 %v757
        %782 = vmatprep.subr.mxu0 %v762
        %783 = vmatpush1.msra.mxu0 %v761
        %784 = vmatprep.subr.mxu0 %v766
        %785 = vmatpush1.msra.mxu0 %v765
        %786 = vmatprep.subr.mxu0 %v770
        %787 = vmatpush1.msra.mxu0 %v769
        %788 = vmatprep.subr.mxu0 0.0
        %789 = vmatpush1.msra.mxu0 0.0
        %790 = vmatprep.subr.mxu0 0.0
        %791 = vmatpush1.msra.mxu0 0.0
        %792 = vmatprep.subr.mxu0 0.0
        %793 = vmatpush1.msra.mxu0 0.0
        %794 = vmatprep.subr.mxu0 0.0
        %795 = vmatpush1.msra.mxu0 0.0
        %796 = vmatprep.subr.mxu0 0.0
        %797 = vmatpush1.msra.mxu0 0.0
        %798 = vmatprep.subr.mxu0 0.0
        %799 = vmatpush1.msra.mxu0 0.0
        %800 = vmatprep.subr.mxu0 0.0
        %801 = vmatpush1.msra.mxu0 0.0
        %802 = vmatprep.subr.mxu0 0.0
        %803 = vmatpush1.msra.mxu0 0.0
        %804 = vmatprep.subr.mxu0 0.0
        %805 = vmatpush1.msra.mxu0 0.0
        %806 = vmatprep.subr.mxu0 0.0
        %807 = vmatpush1.msra.mxu0 0.0
        %808 = vmatprep.subr.mxu0 0.0
        %809 = vmatpush1.msra.mxu0 0.0
        %810 = vmatprep.subr.mxu0 0.0
        %811 = vmatpush1.msra.mxu0 0.0
        %812 = vmatprep.subr.mxu0 0.0
        %813 = vmatpush1.msra.mxu0 0.0
        %814 = vmatprep.subr.mxu0 0.0
        %815 = vmatpush1.msra.mxu0 0.0
        %816 = vmatprep.subr.mxu0 0.0
        %817 = vmatpush1.msra.mxu0 0.0
        %818 = vmatprep.subr.mxu0 0.0
        %819 = vmatpush1.msra.mxu0 0.0
        %820 = vmatprep.subr.mxu0 0.0
        %821 = vmatpush1.msra.mxu0 0.0
        %822 = vmatprep.subr.mxu0 0.0
        %823 = vmatpush1.msra.mxu0 0.0
        %824 = vmatprep.subr.mxu0 0.0
        %825 = vmatpush1.msra.mxu0 0.0
        %826 = vmatprep.subr.mxu0 0.0
        %827 = vmatpush1.msra.mxu0 0.0
        %828 = vmatprep.subr.mxu0 0.0
        %829 = vmatpush1.msra.mxu0 0.0
        %830 = vmatprep.subr.mxu0 0.0
        %831 = vmatpush1.msra.mxu0 0.0
        %832 = vmatprep.subr.mxu0 0.0
        %833 = vmatpush1.msra.mxu0 0.0
        %834 = vmatprep.subr.mxu0 0.0
        %835 = vmatpush1.msra.mxu0 0.0
        %836 = vmatprep.subr.mxu0 0.0
        %837 = vmatpush1.msra.mxu0 0.0
        %838 = vmatprep.subr.mxu0 0.0
        %839 = vmatpush1.msra.mxu0 0.0
        %840 = vmatprep.subr.mxu0 0.0
        %841 = vmatpush1.msra.mxu0 0.0
        %842 = vmatprep.subr.mxu0 0.0
        %843 = vmatpush1.msra.mxu0 0.0
        %844 = vmatprep.mubr.f32.mxu0 0.0
        %845 = vmatmul.mubr.f32.gmra.mrb[0].mxu0 %v775
        %v846 = vpop.f32.mrb[0].mxu0
        %v847 = vadd.f32 0.0, %v846
        %v848 = vpop.f32.mrb[0].mxu0
        %v849 = vadd.f32 0.0, %v848
        %850 = vmatprep.mubr.f32.mxu0 0.0
        %851 = vmatmul.mubr.f32.gmra.mrb[0].mxu0 %v778
        %v852 = vpop.f32.mrb[0].mxu0
        %v853 = vadd.f32 0.0, %v852
        %v854 = vpop.f32.mrb[0].mxu0
        %v855 = vadd.f32 0.0, %v854
        %856 = vdwg.mxu0
        %857 = vmatprep.subr.mxu0 %v760
        %858 = vmatpush1.msra.mxu0 %v759
        %859 = vmatprep.subr.mxu0 %v764
        %860 = vmatpush1.msra.mxu0 %v763
        %861 = vmatprep.subr.mxu0 %v768
        %862 = vmatpush1.msra.mxu0 %v767
        %863 = vmatprep.subr.mxu0 %v772
        %864 = vmatpush1.msra.mxu0 %v771
        %865 = vmatprep.subr.mxu0 0.0
        %866 = vmatpush1.msra.mxu0 0.0
        %867 = vmatprep.subr.mxu0 0.0
        %868 = vmatpush1.msra.mxu0 0.0
        %869 = vmatprep.subr.mxu0 0.0
        %870 = vmatpush1.msra.mxu0 0.0
        %871 = vmatprep.subr.mxu0 0.0
        %872 = vmatpush1.msra.mxu0 0.0
        %873 = vmatprep.subr.mxu0 0.0
        %874 = vmatpush1.msra.mxu0 0.0
        %875 = vmatprep.subr.mxu0 0.0
        %876 = vmatpush1.msra.mxu0 0.0
        %877 = vmatprep.subr.mxu0 0.0
        %878 = vmatpush1.msra.mxu0 0.0
        %879 = vmatprep.subr.mxu0 0.0
        %880 = vmatpush1.msra.mxu0 0.0
        %881 = vmatprep.subr.mxu0 0.0
        %882 = vmatpush1.msra.mxu0 0.0
        %883 = vmatprep.subr.mxu0 0.0
        %884 = vmatpush1.msra.mxu0 0.0
        %885 = vmatprep.subr.mxu0 0.0
        %886 = vmatpush1.msra.mxu0 0.0
        %887 = vmatprep.subr.mxu0 0.0
        %888 = vmatpush1.msra.mxu0 0.0
        %889 = vmatprep.subr.mxu0 0.0
        %890 = vmatpush1.msra.mxu0 0.0
        %891 = vmatprep.subr.mxu0 0.0
        %892 = vmatpush1.msra.mxu0 0.0
        %893 = vmatprep.subr.mxu0 0.0
        %894 = vmatpush1.msra.mxu0 0.0
        %895 = vmatprep.subr.mxu0 0.0
        %896 = vmatpush1.msra.mxu0 0.0
        %897 = vmatprep.subr.mxu0 0.0
        %898 = vmatpush1.msra.mxu0 0.0
        %899 = vmatprep.subr.mxu0 0.0
        %900 = vmatpush1.msra.mxu0 0.0
        %901 = vmatprep.subr.mxu0 0.0
        %902 = vmatpush1.msra.mxu0 0.0
        %903 = vmatprep.subr.mxu0 0.0
        %904 = vmatpush1.msra.mxu0 0.0
        %905 = vmatprep.subr.mxu0 0.0
        %906 = vmatpush1.msra.mxu0 0.0
        %907 = vmatprep.subr.mxu0 0.0
        %908 = vmatpush1.msra.mxu0 0.0
        %909 = vmatprep.subr.mxu0 0.0
        %910 = vmatpush1.msra.mxu0 0.0
        %911 = vmatprep.subr.mxu0 0.0
        %912 = vmatpush1.msra.mxu0 0.0
        %913 = vmatprep.subr.mxu0 0.0
        %914 = vmatpush1.msra.mxu0 0.0
        %915 = vmatprep.subr.mxu0 0.0
        %916 = vmatpush1.msra.mxu0 0.0
        %917 = vmatprep.subr.mxu0 0.0
        %918 = vmatpush1.msra.mxu0 0.0
        %919 = vmatprep.subr.mxu0 0.0
        %920 = vmatpush1.msra.mxu0 0.0
        %921 = vmatprep.mubr.f32.mxu0 0.0
        %922 = vmatmul.mubr.f32.gmra.mrb[0].mxu0 %v775
        %v923 = vpop.f32.mrb[0].mxu0
        %v924 = vadd.f32 0.0, %v923
        %v925 = vpop.f32.mrb[0].mxu0
        %v926 = vadd.f32 0.0, %v925
        %927 = vmatprep.mubr.f32.mxu0 0.0
        %928 = vmatmul.mubr.f32.gmra.mrb[0].mxu0 %v778
        %v929 = vpop.f32.mrb[0].mxu0
        %v930 = vadd.f32 0.0, %v929
        %v931 = vpop.f32.mrb[0].mxu0
        %v932 = vadd.f32 0.0, %v931
        %933 = vdwg.mxu0
        %v934 = vld [vmem:[%s9] sm:$0xff]
        %v935 = vld [vmem:[%s9 + $0x8] sm:$0xff]
        %v936 = vld [vmem:[%s9 + $0x10] sm:$0xff]
        %v937 = vld [vmem:[%s9 + $0x18] sm:$0xff]
        %v938 = vld [vmem:[%s9 + $0x20] sm:$0xff]
        %v939 = vld [vmem:[%s9 + $0x28] sm:$0xff]
        %v940 = vld [vmem:[%s9 + $0x30] sm:$0xff]
        %v941 = vld [vmem:[%s9 + $0x38] sm:$0xff]
        %v942 = vld [vmem:[%s9 + $0x40] sm:$0xff]
        %v943 = vld [vmem:[%s9 + $0x48] sm:$0xff]
        %v944 = vld [vmem:[%s9 + $0x50] sm:$0xff]
        %v945 = vld [vmem:[%s9 + $0x58] sm:$0xff]
        %v946 = vld [vmem:[%s9 + $0x60] sm:$0xff]
        %v947 = vld [vmem:[%s9 + $0x68] sm:$0xff]
        %v948 = vld [vmem:[%s9 + $0x70] sm:$0xff]
        %v949 = vld [vmem:[%s9 + $0x78] sm:$0xff]
        %950 = vrot.lane.b32.xlu0 %v749, 96
        %v951 = vpop.permute.xlu0 %950
        %952 = vrot.lane.b32.xlu0 %v754, 96
        %v953 = vpop.permute.xlu0 %952
        %v954 = vsel %vm773, %v951, 0
        %v956 = vsel %vm773, %v953, 0
        %958 = vmatprep.subr.mxu0 %v935
        %959 = vmatpush1.msra.mxu0 %v934
        %960 = vmatprep.subr.mxu0 %v939
        %961 = vmatpush1.msra.mxu0 %v938
        %962 = vmatprep.subr.mxu0 %v943
        %963 = vmatpush1.msra.mxu0 %v942
        %964 = vmatprep.subr.mxu0 %v947
        %965 = vmatpush1.msra.mxu0 %v946
        %966 = vmatprep.subr.mxu0 0.0
        %967 = vmatpush1.msra.mxu0 0.0
        %968 = vmatprep.subr.mxu0 0.0
        %969 = vmatpush1.msra.mxu0 0.0
        %970 = vmatprep.subr.mxu0 0.0
        %971 = vmatpush1.msra.mxu0 0.0
        %972 = vmatprep.subr.mxu0 0.0
        %973 = vmatpush1.msra.mxu0 0.0
        %974 = vmatprep.subr.mxu0 0.0
        %975 = vmatpush1.msra.mxu0 0.0
        %976 = vmatprep.subr.mxu0 0.0
        %977 = vmatpush1.msra.mxu0 0.0
        %978 = vmatprep.subr.mxu0 0.0
        %979 = vmatpush1.msra.mxu0 0.0
        %980 = vmatprep.subr.mxu0 0.0
        %981 = vmatpush1.msra.mxu0 0.0
        %982 = vmatprep.subr.mxu0 0.0
        %983 = vmatpush1.msra.mxu0 0.0
        %984 = vmatprep.subr.mxu0 0.0
        %985 = vmatpush1.msra.mxu0 0.0
        %986 = vmatprep.subr.mxu0 0.0
        %987 = vmatpush1.msra.mxu0 0.0
        %988 = vmatprep.subr.mxu0 0.0
        %989 = vmatpush1.msra.mxu0 0.0
        %990 = vmatprep.subr.mxu0 0.0
        %991 = vmatpush1.msra.mxu0 0.0
        %992 = vmatprep.subr.mxu0 0.0
        %993 = vmatpush1.msra.mxu0 0.0
        %994 = vmatprep.subr.mxu0 0.0
        %995 = vmatpush1.msra.mxu0 0.0
        %996 = vmatprep.subr.mxu0 0.0
        %997 = vmatpush1.msra.mxu0 0.0
        %998 = vmatprep.subr.mxu0 0.0
        %999 = vmatpush1.msra.mxu0 0.0
        %1000 = vmatprep.subr.mxu0 0.0
        %1001 = vmatpush1.msra.mxu0 0.0
        %1002 = vmatprep.subr.mxu0 0.0
        %1003 = vmatpush1.msra.mxu0 0.0
        %1004 = vmatprep.subr.mxu0 0.0
        %1005 = vmatpush1.msra.mxu0 0.0
        %1006 = vmatprep.subr.mxu0 0.0
        %1007 = vmatpush1.msra.mxu0 0.0
        %1008 = vmatprep.subr.mxu0 0.0
        %1009 = vmatpush1.msra.mxu0 0.0
        %1010 = vmatprep.subr.mxu0 0.0
        %1011 = vmatpush1.msra.mxu0 0.0
        %1012 = vmatprep.subr.mxu0 0.0
        %1013 = vmatpush1.msra.mxu0 0.0
        %1014 = vmatprep.subr.mxu0 0.0
        %1015 = vmatpush1.msra.mxu0 0.0
        %1016 = vmatprep.subr.mxu0 0.0
        %1017 = vmatpush1.msra.mxu0 0.0
        %1018 = vmatprep.subr.mxu0 0.0
        %1019 = vmatpush1.msra.mxu0 0.0
        %1020 = vmatprep.subr.mxu0 0.0
        %1021 = vmatpush1.msra.mxu0 0.0
        %1022 = vmatprep.mubr.f32.mxu0 0.0
        %1023 = vmatmul.mubr.f32.gmra.mrb[0].mxu0 %v954
        %v1024 = vpop.f32.mrb[0].mxu0
        %v1025 = vadd.f32 0.0, %v1024
        %v1026 = vpop.f32.mrb[0].mxu0
        %v1027 = vadd.f32 0.0, %v1026
        %1028 = vmatprep.mubr.f32.mxu0 0.0
        %1029 = vmatmul.mubr.f32.gmra.mrb[0].mxu0 %v956
        %v1030 = vpop.f32.mrb[0].mxu0
        %v1031 = vadd.f32 0.0, %v1030
        %v1032 = vpop.f32.mrb[0].mxu0
        %v1033 = vadd.f32 0.0, %v1032
        %1034 = vdwg.mxu0
        %1035 = vmatprep.subr.mxu0 %v937
        %1036 = vmatpush1.msra.mxu0 %v936
        %1037 = vmatprep.subr.mxu0 %v941
        %1038 = vmatpush1.msra.mxu0 %v940
        %1039 = vmatprep.subr.mxu0 %v945
        %1040 = vmatpush1.msra.mxu0 %v944
        %1041 = vmatprep.subr.mxu0 %v949
        %1042 = vmatpush1.msra.mxu0 %v948
        %1043 = vmatprep.subr.mxu0 0.0
        %1044 = vmatpush1.msra.mxu0 0.0
        %1045 = vmatprep.subr.mxu0 0.0
        %1046 = vmatpush1.msra.mxu0 0.0
        %1047 = vmatprep.subr.mxu0 0.0
        %1048 = vmatpush1.msra.mxu0 0.0
        %1049 = vmatprep.subr.mxu0 0.0
        %1050 = vmatpush1.msra.mxu0 0.0
        %1051 = vmatprep.subr.mxu0 0.0
        %1052 = vmatpush1.msra.mxu0 0.0
        %1053 = vmatprep.subr.mxu0 0.0
        %1054 = vmatpush1.msra.mxu0 0.0
        %1055 = vmatprep.subr.mxu0 0.0
        %1056 = vmatpush1.msra.mxu0 0.0
        %1057 = vmatprep.subr.mxu0 0.0
        %1058 = vmatpush1.msra.mxu0 0.0
        %1059 = vmatprep.subr.mxu0 0.0
        %1060 = vmatpush1.msra.mxu0 0.0
        %1061 = vmatprep.subr.mxu0 0.0
        %1062 = vmatpush1.msra.mxu0 0.0
        %1063 = vmatprep.subr.mxu0 0.0
        %1064 = vmatpush1.msra.mxu0 0.0
        %1065 = vmatprep.subr.mxu0 0.0
        %1066 = vmatpush1.msra.mxu0 0.0
        %1067 = vmatprep.subr.mxu0 0.0
        %1068 = vmatpush1.msra.mxu0 0.0
        %1069 = vmatprep.subr.mxu0 0.0
        %1070 = vmatpush1.msra.mxu0 0.0
        %1071 = vmatprep.subr.mxu0 0.0
        %1072 = vmatpush1.msra.mxu0 0.0
        %1073 = vmatprep.subr.mxu0 0.0
        %1074 = vmatpush1.msra.mxu0 0.0
        %1075 = vmatprep.subr.mxu0 0.0
        %1076 = vmatpush1.msra.mxu0 0.0
        %1077 = vmatprep.subr.mxu0 0.0
        %1078 = vmatpush1.msra.mxu0 0.0
        %1079 = vmatprep.subr.mxu0 0.0
        %1080 = vmatpush1.msra.mxu0 0.0
        %1081 = vmatprep.subr.mxu0 0.0
        %1082 = vmatpush1.msra.mxu0 0.0
        %1083 = vmatprep.subr.mxu0 0.0
        %1084 = vmatpush1.msra.mxu0 0.0
        %1085 = vmatprep.subr.mxu0 0.0
        %1086 = vmatpush1.msra.mxu0 0.0
        %1087 = vmatprep.subr.mxu0 0.0
        %1088 = vmatpush1.msra.mxu0 0.0
        %1089 = vmatprep.subr.mxu0 0.0
        %1090 = vmatpush1.msra.mxu0 0.0
        %1091 = vmatprep.subr.mxu0 0.0
        %1092 = vmatpush1.msra.mxu0 0.0
        %1093 = vmatprep.subr.mxu0 0.0
        %1094 = vmatpush1.msra.mxu0 0.0
        %1095 = vmatprep.subr.mxu0 0.0
        %1096 = vmatpush1.msra.mxu0 0.0
        %1097 = vmatprep.subr.mxu0 0.0
        %1098 = vmatpush1.msra.mxu0 0.0
        %1099 = vmatprep.mubr.f32.mxu0 0.0
        %1100 = vmatmul.mubr.f32.gmra.mrb[0].mxu0 %v954
        %v1101 = vpop.f32.mrb[0].mxu0
        %v1102 = vadd.f32 0.0, %v1101
        %v1103 = vpop.f32.mrb[0].mxu0
        %v1104 = vadd.f32 0.0, %v1103
        %1105 = vmatprep.mubr.f32.mxu0 0.0
        %1106 = vmatmul.mubr.f32.gmra.mrb[0].mxu0 %v956
        %v1107 = vpop.f32.mrb[0].mxu0
        %v1108 = vadd.f32 0.0, %v1107
        %v1109 = vpop.f32.mrb[0].mxu0
        %v1110 = vadd.f32 0.0, %v1109
        %1111 = vdwg.mxu0
        %v1112 = vxor.u32 %v847, 2147483648
        %v1113 = vxor.u32 %v849, 2147483648
        %v1114 = vxor.u32 %v924, 2147483648
        %v1115 = vxor.u32 %v926, 2147483648
        %v1116 = vxor.u32 %v853, 2147483648
        %v1117 = vxor.u32 %v855, 2147483648
        %v1118 = vxor.u32 %v930, 2147483648
        %v1119 = vxor.u32 %v932, 2147483648
        %v1120 = vmul.f32 %v1112, 1.442695
        %v1121 = vpow.pop %v1120
        %v1122 = vmul.f32 %v1113, 1.442695
        %v1123 = vpow.pop %v1122
        %v1124 = vmul.f32 %v1114, 1.442695
        %v1125 = vpow.pop %v1124
        %v1126 = vmul.f32 %v1115, 1.442695
        %v1127 = vpow.pop %v1126
        %v1128 = vmul.f32 %v1116, 1.442695
        %v1129 = vpow.pop %v1128
        %v1130 = vmul.f32 %v1117, 1.442695
        %v1131 = vpow.pop %v1130
        %v1132 = vmul.f32 %v1118, 1.442695
        %v1133 = vpow.pop %v1132
        %v1134 = vmul.f32 %v1119, 1.442695
        %v1135 = vpow.pop %v1134
        %v1136 = vadd.f32 %v1121, 1.0
        %v1137 = vadd.f32 %v1123, 1.0
        %v1138 = vadd.f32 %v1125, 1.0
        %v1139 = vadd.f32 %v1127, 1.0
        %v1140 = vadd.f32 %v1129, 1.0
        %v1141 = vadd.f32 %v1131, 1.0
        %v1142 = vadd.f32 %v1133, 1.0
        %v1143 = vadd.f32 %v1135, 1.0
        %v1144 = vrcp.pop %v1136
        %v1145 = vmul.f32 1.0, %v1144
        %v1146 = vrcp.pop %v1137
        %v1147 = vmul.f32 1.0, %v1146
        %v1148 = vrcp.pop %v1138
        %v1149 = vmul.f32 1.0, %v1148
        %v1150 = vrcp.pop %v1139
        %v1151 = vmul.f32 1.0, %v1150
        %v1152 = vrcp.pop %v1140
        %v1153 = vmul.f32 1.0, %v1152
        %v1154 = vrcp.pop %v1141
        %v1155 = vmul.f32 1.0, %v1154
        %v1156 = vrcp.pop %v1142
        %v1157 = vmul.f32 1.0, %v1156
        %v1158 = vrcp.pop %v1143
        %v1159 = vmul.f32 1.0, %v1158
        %v1160 = vmul.f32 %v439, %v1145
        %v1161 = vmul.f32 %v440, %v1147
        %v1162 = vmul.f32 %v441, %v1149
        %v1163 = vmul.f32 %v442, %v1151
        %v1164 = vmul.f32 %v443, %v1153
        %v1165 = vmul.f32 %v444, %v1155
        %v1166 = vmul.f32 %v445, %v1157
        %v1167 = vmul.f32 %v446, %v1159
        %v1168 = vxor.u32 %v1025, 2147483648
        %v1169 = vxor.u32 %v1027, 2147483648
        %v1170 = vxor.u32 %v1102, 2147483648
        %v1171 = vxor.u32 %v1104, 2147483648
        %v1172 = vxor.u32 %v1031, 2147483648
        %v1173 = vxor.u32 %v1033, 2147483648
        %v1174 = vxor.u32 %v1108, 2147483648
        %v1175 = vxor.u32 %v1110, 2147483648
        %v1176 = vmul.f32 %v1168, 1.442695
        %v1177 = vpow.pop %v1176
        %v1178 = vmul.f32 %v1169, 1.442695
        %v1179 = vpow.pop %v1178
        %v1180 = vmul.f32 %v1170, 1.442695
        %v1181 = vpow.pop %v1180
        %v1182 = vmul.f32 %v1171, 1.442695
        %v1183 = vpow.pop %v1182
        %v1184 = vmul.f32 %v1172, 1.442695
        %v1185 = vpow.pop %v1184
        %v1186 = vmul.f32 %v1173, 1.442695
        %v1187 = vpow.pop %v1186
        %v1188 = vmul.f32 %v1174, 1.442695
        %v1189 = vpow.pop %v1188
        %v1190 = vmul.f32 %v1175, 1.442695
        %v1191 = vpow.pop %v1190
        %v1192 = vadd.f32 %v1177, 1.0
        %v1193 = vadd.f32 %v1179, 1.0
        %v1194 = vadd.f32 %v1181, 1.0
        %v1195 = vadd.f32 %v1183, 1.0
        %v1196 = vadd.f32 %v1185, 1.0
        %v1197 = vadd.f32 %v1187, 1.0
        %v1198 = vadd.f32 %v1189, 1.0
        %v1199 = vadd.f32 %v1191, 1.0
        %v1200 = vrcp.pop %v1192
        %v1201 = vmul.f32 1.0, %v1200
        %v1202 = vrcp.pop %v1193
        %v1203 = vmul.f32 1.0, %v1202
        %v1204 = vrcp.pop %v1194
        %v1205 = vmul.f32 1.0, %v1204
        %v1206 = vrcp.pop %v1195
        %v1207 = vmul.f32 1.0, %v1206
        %v1208 = vrcp.pop %v1196
        %v1209 = vmul.f32 1.0, %v1208
        %v1210 = vrcp.pop %v1197
        %v1211 = vmul.f32 1.0, %v1210
        %v1212 = vrcp.pop %v1198
        %v1213 = vmul.f32 1.0, %v1212
        %v1214 = vrcp.pop %v1199
        %v1215 = vmul.f32 1.0, %v1214
        %v1216 = vmul.f32 %v1160, %v1201
        %v1217 = vmul.f32 %v1161, %v1203
        %v1218 = vmul.f32 %v1162, %v1205
        %v1219 = vmul.f32 %v1163, %v1207
        %v1220 = vmul.f32 %v1164, %v1209
        %v1221 = vmul.f32 %v1165, %v1211
        %v1222 = vmul.f32 %v1166, %v1213
        %v1223 = vmul.f32 %v1167, %v1215
        %v1224 = vld [vmem:[%s11] sm:$0xff]
        %v1225 = vld [vmem:[%s11 + $0x8] sm:$0xff]
        %v1226 = vld [vmem:[%s11 + $0x10] sm:$0xff]
        %v1227 = vld [vmem:[%s11 + $0x18] sm:$0xff]
        %v1228 = vld [vmem:[%s11 + $0x20] sm:$0xff]
        %v1229 = vld [vmem:[%s11 + $0x28] sm:$0xff]
        %v1230 = vld [vmem:[%s11 + $0x30] sm:$0xff]
        %v1231 = vld [vmem:[%s11 + $0x38] sm:$0xff]
        %v1232 = vld [vmem:[%s11 + $0x40] sm:$0xff]
        %v1233 = vld [vmem:[%s11 + $0x48] sm:$0xff]
        %v1234 = vld [vmem:[%s11 + $0x50] sm:$0xff]
        %v1235 = vld [vmem:[%s11 + $0x58] sm:$0xff]
        %v1236 = vld [vmem:[%s11 + $0x60] sm:$0xff]
        %v1237 = vld [vmem:[%s11 + $0x68] sm:$0xff]
        %v1238 = vld [vmem:[%s11 + $0x70] sm:$0xff]
        %v1239 = vld [vmem:[%s11 + $0x78] sm:$0xff]
        %v1240 = vld [vmem:[%s11 + $0x80] sm:$0xff]
        %v1241 = vld [vmem:[%s11 + $0x88] sm:$0xff]
        %v1242 = vld [vmem:[%s11 + $0x90] sm:$0xff]
        %v1243 = vld [vmem:[%s11 + $0x98] sm:$0xff]
        %v1244 = vld [vmem:[%s11 + $0xa0] sm:$0xff]
        %v1245 = vld [vmem:[%s11 + $0xa8] sm:$0xff]
        %v1246 = vld [vmem:[%s11 + $0xb0] sm:$0xff]
        %v1247 = vld [vmem:[%s11 + $0xb8] sm:$0xff]
        %v1248 = vld [vmem:[%s11 + $0xc0] sm:$0xff]
        %v1249 = vld [vmem:[%s11 + $0xc8] sm:$0xff]
        %v1250 = vld [vmem:[%s11 + $0xd0] sm:$0xff]
        %v1251 = vld [vmem:[%s11 + $0xd8] sm:$0xff]
        %v1252 = vld [vmem:[%s11 + $0xe0] sm:$0xff]
        %v1253 = vld [vmem:[%s11 + $0xe8] sm:$0xff]
        %v1254 = vld [vmem:[%s11 + $0xf0] sm:$0xff]
        %v1255 = vld [vmem:[%s11 + $0xf8] sm:$0xff]
        %v1256 = vld [vmem:[%s11 + $0x100] sm:$0xff]
        %v1257 = vld [vmem:[%s11 + $0x108] sm:$0xff]
        %v1258 = vld [vmem:[%s11 + $0x110] sm:$0xff]
        %v1259 = vld [vmem:[%s11 + $0x118] sm:$0xff]
        %v1260 = vld [vmem:[%s11 + $0x120] sm:$0xff]
        %v1261 = vld [vmem:[%s11 + $0x128] sm:$0xff]
        %v1262 = vld [vmem:[%s11 + $0x130] sm:$0xff]
        %v1263 = vld [vmem:[%s11 + $0x138] sm:$0xff]
        %v1264 = vld [vmem:[%s11 + $0x140] sm:$0xff]
        %v1265 = vld [vmem:[%s11 + $0x148] sm:$0xff]
        %v1266 = vld [vmem:[%s11 + $0x150] sm:$0xff]
        %v1267 = vld [vmem:[%s11 + $0x158] sm:$0xff]
        %v1268 = vld [vmem:[%s11 + $0x160] sm:$0xff]
        %v1269 = vld [vmem:[%s11 + $0x168] sm:$0xff]
        %v1270 = vld [vmem:[%s11 + $0x170] sm:$0xff]
        %v1271 = vld [vmem:[%s11 + $0x178] sm:$0xff]
        %v1272 = vld [vmem:[%s11 + $0x180] sm:$0xff]
        %v1273 = vld [vmem:[%s11 + $0x188] sm:$0xff]
        %v1274 = vld [vmem:[%s11 + $0x190] sm:$0xff]
        %v1275 = vld [vmem:[%s11 + $0x198] sm:$0xff]
        %v1276 = vld [vmem:[%s11 + $0x1a0] sm:$0xff]
        %v1277 = vld [vmem:[%s11 + $0x1a8] sm:$0xff]
        %v1278 = vld [vmem:[%s11 + $0x1b0] sm:$0xff]
        %v1279 = vld [vmem:[%s11 + $0x1b8] sm:$0xff]
        %v1280 = vld [vmem:[%s11 + $0x1c0] sm:$0xff]
        %v1281 = vld [vmem:[%s11 + $0x1c8] sm:$0xff]
        %v1282 = vld [vmem:[%s11 + $0x1d0] sm:$0xff]
        %v1283 = vld [vmem:[%s11 + $0x1d8] sm:$0xff]
        %v1284 = vld [vmem:[%s11 + $0x1e0] sm:$0xff]
        %v1285 = vld [vmem:[%s11 + $0x1e8] sm:$0xff]
        %v1286 = vld [vmem:[%s11 + $0x1f0] sm:$0xff]
        %v1287 = vld [vmem:[%s11 + $0x1f8] sm:$0xff]
        %1288 = vmatprep.subr.mxu0 0.0
        %1289 = vmatpush1.msra.mxu0 %v1224
        %1290 = vmatprep.subr.mxu0 0.0
        %1291 = vmatpush1.msra.mxu0 %v1225
        %1292 = vmatprep.subr.mxu0 0.0
        %1293 = vmatpush1.msra.mxu0 %v1226
        %1294 = vmatprep.subr.mxu0 0.0
        %1295 = vmatpush1.msra.mxu0 %v1227
        %1296 = vmatprep.subr.mxu0 0.0
        %1297 = vmatpush1.msra.mxu0 %v1228
        %1298 = vmatprep.subr.mxu0 0.0
        %1299 = vmatpush1.msra.mxu0 %v1229
        %1300 = vmatprep.subr.mxu0 0.0
        %1301 = vmatpush1.msra.mxu0 %v1230
        %1302 = vmatprep.subr.mxu0 0.0
        %1303 = vmatpush1.msra.mxu0 %v1231
        %1304 = vmatprep.subr.mxu0 0.0
        %1305 = vmatpush1.msra.mxu0 %v1232
        %1306 = vmatprep.subr.mxu0 0.0
        %1307 = vmatpush1.msra.mxu0 %v1233
        %1308 = vmatprep.subr.mxu0 0.0
        %1309 = vmatpush1.msra.mxu0 %v1234
        %1310 = vmatprep.subr.mxu0 0.0
        %1311 = vmatpush1.msra.mxu0 %v1235
        %1312 = vmatprep.subr.mxu0 0.0
        %1313 = vmatpush1.msra.mxu0 %v1236
        %1314 = vmatprep.subr.mxu0 0.0
        %1315 = vmatpush1.msra.mxu0 %v1237
        %1316 = vmatprep.subr.mxu0 0.0
        %1317 = vmatpush1.msra.mxu0 %v1238
        %1318 = vmatprep.subr.mxu0 0.0
        %1319 = vmatpush1.msra.mxu0 %v1239
        %1320 = vmatprep.subr.mxu0 0.0
        %1321 = vmatpush1.msra.mxu0 %v1240
        %1322 = vmatprep.subr.mxu0 0.0
        %1323 = vmatpush1.msra.mxu0 %v1241
        %1324 = vmatprep.subr.mxu0 0.0
        %1325 = vmatpush1.msra.mxu0 %v1242
        %1326 = vmatprep.subr.mxu0 0.0
        %1327 = vmatpush1.msra.mxu0 %v1243
        %1328 = vmatprep.subr.mxu0 0.0
        %1329 = vmatpush1.msra.mxu0 %v1244
        %1330 = vmatprep.subr.mxu0 0.0
        %1331 = vmatpush1.msra.mxu0 %v1245
        %1332 = vmatprep.subr.mxu0 0.0
        %1333 = vmatpush1.msra.mxu0 %v1246
        %1334 = vmatprep.subr.mxu0 0.0
        %1335 = vmatpush1.msra.mxu0 %v1247
        %1336 = vmatprep.subr.mxu0 0.0
        %1337 = vmatpush1.msra.mxu0 %v1248
        %1338 = vmatprep.subr.mxu0 0.0
        %1339 = vmatpush1.msra.mxu0 %v1249
        %1340 = vmatprep.subr.mxu0 0.0
        %1341 = vmatpush1.msra.mxu0 %v1250
        %1342 = vmatprep.subr.mxu0 0.0
        %1343 = vmatpush1.msra.mxu0 %v1251
        %1344 = vmatprep.subr.mxu0 0.0
        %1345 = vmatpush1.msra.mxu0 %v1252
        %1346 = vmatprep.subr.mxu0 0.0
        %1347 = vmatpush1.msra.mxu0 %v1253
        %1348 = vmatprep.subr.mxu0 0.0
        %1349 = vmatpush1.msra.mxu0 %v1254
        %1350 = vmatprep.subr.mxu0 0.0
        %1351 = vmatpush1.msra.mxu0 %v1255
        %1352 = vmatprep.mubr.f32.mxu0 %v1217
        %1353 = vmatmul.mubr.f32.gmra.mrb[0].mxu0 %v1216
        %v1354 = vpop.f32.mrb[0].mxu0
        %v1355 = vadd.f32 0.0, %v1354
        %v1356 = vpop.f32.mrb[0].mxu0
        %1357 = vmatprep.mubr.f32.mxu0 %v1221
        %1358 = vmatmul.mubr.f32.gmra.mrb[0].mxu0 %v1220
        %v1359 = vpop.f32.mrb[0].mxu0
        %v1360 = vadd.f32 0.0, %v1359
        %v1361 = vpop.f32.mrb[0].mxu0
        %1362 = vdwg.mxu0
        %1363 = vmatprep.subr.mxu0 0.0
        %1364 = vmatpush1.msra.mxu0 %v1256
        %1365 = vmatprep.subr.mxu0 0.0
        %1366 = vmatpush1.msra.mxu0 %v1257
        %1367 = vmatprep.subr.mxu0 0.0
        %1368 = vmatpush1.msra.mxu0 %v1258
        %1369 = vmatprep.subr.mxu0 0.0
        %1370 = vmatpush1.msra.mxu0 %v1259
        %1371 = vmatprep.subr.mxu0 0.0
        %1372 = vmatpush1.msra.mxu0 %v1260
        %1373 = vmatprep.subr.mxu0 0.0
        %1374 = vmatpush1.msra.mxu0 %v1261
        %1375 = vmatprep.subr.mxu0 0.0
        %1376 = vmatpush1.msra.mxu0 %v1262
        %1377 = vmatprep.subr.mxu0 0.0
        %1378 = vmatpush1.msra.mxu0 %v1263
        %1379 = vmatprep.subr.mxu0 0.0
        %1380 = vmatpush1.msra.mxu0 %v1264
        %1381 = vmatprep.subr.mxu0 0.0
        %1382 = vmatpush1.msra.mxu0 %v1265
        %1383 = vmatprep.subr.mxu0 0.0
        %1384 = vmatpush1.msra.mxu0 %v1266
        %1385 = vmatprep.subr.mxu0 0.0
        %1386 = vmatpush1.msra.mxu0 %v1267
        %1387 = vmatprep.subr.mxu0 0.0
        %1388 = vmatpush1.msra.mxu0 %v1268
        %1389 = vmatprep.subr.mxu0 0.0
        %1390 = vmatpush1.msra.mxu0 %v1269
        %1391 = vmatprep.subr.mxu0 0.0
        %1392 = vmatpush1.msra.mxu0 %v1270
        %1393 = vmatprep.subr.mxu0 0.0
        %1394 = vmatpush1.msra.mxu0 %v1271
        %1395 = vmatprep.subr.mxu0 0.0
        %1396 = vmatpush1.msra.mxu0 %v1272
        %1397 = vmatprep.subr.mxu0 0.0
        %1398 = vmatpush1.msra.mxu0 %v1273
        %1399 = vmatprep.subr.mxu0 0.0
        %1400 = vmatpush1.msra.mxu0 %v1274
        %1401 = vmatprep.subr.mxu0 0.0
        %1402 = vmatpush1.msra.mxu0 %v1275
        %1403 = vmatprep.subr.mxu0 0.0
        %1404 = vmatpush1.msra.mxu0 %v1276
        %1405 = vmatprep.subr.mxu0 0.0
        %1406 = vmatpush1.msra.mxu0 %v1277
        %1407 = vmatprep.subr.mxu0 0.0
        %1408 = vmatpush1.msra.mxu0 %v1278
        %1409 = vmatprep.subr.mxu0 0.0
        %1410 = vmatpush1.msra.mxu0 %v1279
        %1411 = vmatprep.subr.mxu0 0.0
        %1412 = vmatpush1.msra.mxu0 %v1280
        %1413 = vmatprep.subr.mxu0 0.0
        %1414 = vmatpush1.msra.mxu0 %v1281
        %1415 = vmatprep.subr.mxu0 0.0
        %1416 = vmatpush1.msra.mxu0 %v1282
        %1417 = vmatprep.subr.mxu0 0.0
        %1418 = vmatpush1.msra.mxu0 %v1283
        %1419 = vmatprep.subr.mxu0 0.0
        %1420 = vmatpush1.msra.mxu0 %v1284
        %1421 = vmatprep.subr.mxu0 0.0
        %1422 = vmatpush1.msra.mxu0 %v1285
        %1423 = vmatprep.subr.mxu0 0.0
        %1424 = vmatpush1.msra.mxu0 %v1286
        %1425 = vmatprep.subr.mxu0 0.0
        %1426 = vmatpush1.msra.mxu0 %v1287
        %1427 = vmatprep.mubr.f32.mxu0 %v1219
        %1428 = vmatmul.mubr.f32.gmra.mrb[0].mxu0 %v1218
        %v1429 = vpop.f32.mrb[0].mxu0
        %v1430 = vadd.f32 %v1355, %v1429
        %v1431 = vpop.f32.mrb[0].mxu0
        %1432 = vmatprep.mubr.f32.mxu0 %v1223
        %1433 = vmatmul.mubr.f32.gmra.mrb[0].mxu0 %v1222
        %v1434 = vpop.f32.mrb[0].mxu0
        %v1435 = vadd.f32 %v1360, %v1434
        %v1436 = vpop.f32.mrb[0].mxu0
        %1437 = vdwg.mxu0
        %v1438 = vld [vmem:[%s10] sm:$0xff]
        %v1440 = vcombine.high %v1438, %v1438
        %v1442 = vunpack.c.l.s4 1983009808
        %v1443 = vunpack.c.0.s8 %v1442
        %v1444 = vlaneseq
        %v1445 = vshrl.u32 %v1444, 7
        %v1446 = vsub.s32 %v1443, %v1445
        %v1447 = vrot.slane %v1438, %v1446
        %v1449 = vunpack.c.l.s4 1983009808
        %v1450 = vunpack.c.0.s8 %v1449
        %v1451 = vlaneseq
        %v1452 = vshrl.u32 %v1451, 7
        %v1453 = vsub.s32 %v1450, %v1452
        %v1454 = vrot.slane %v1440, %v1453
        %v1455 = vcombine.high %v1447, %v1447
        %v1456 = vcombine.high %v1454, %v1454
        %vm1457 = vcmask 15360
        %v1459 = vsel %vm1457, %v1430, 0
        %v1462 = vsel %vm1457, %v1435, 0
        %vm1464 = vcmask 1041408
        %v1465 = vsel %vm1464, %v1447, 0
        %v1467 = vsel %vm1464, %v1455, 0
        %v1469 = vsel %vm1464, %v1454, 0
        %v1471 = vsel %vm1464, %v1456, 0
        %1473 = vmatprep.subr.mxu0 %v1467
        %1474 = vmatpush1.msra.mxu0 %v1465
        %1475 = vmatprep.subr.mxu0 0.0
        %1476 = vmatpush1.msra.mxu0 0.0
        %1477 = vmatprep.subr.mxu0 0.0
        %1478 = vmatpush1.msra.mxu0 0.0
        %1479 = vmatprep.subr.mxu0 0.0
        %1480 = vmatpush1.msra.mxu0 0.0
        %1481 = vmatprep.subr.mxu0 0.0
        %1482 = vmatpush1.msra.mxu0 0.0
        %1483 = vmatprep.subr.mxu0 0.0
        %1484 = vmatpush1.msra.mxu0 0.0
        %1485 = vmatprep.subr.mxu0 0.0
        %1486 = vmatpush1.msra.mxu0 0.0
        %1487 = vmatprep.subr.mxu0 0.0
        %1488 = vmatpush1.msra.mxu0 0.0
        %1489 = vmatprep.subr.mxu0 0.0
        %1490 = vmatpush1.msra.mxu0 0.0
        %1491 = vmatprep.subr.mxu0 0.0
        %1492 = vmatpush1.msra.mxu0 0.0
        %1493 = vmatprep.subr.mxu0 0.0
        %1494 = vmatpush1.msra.mxu0 0.0
        %1495 = vmatprep.subr.mxu0 0.0
        %1496 = vmatpush1.msra.mxu0 0.0
        %1497 = vmatprep.subr.mxu0 0.0
        %1498 = vmatpush1.msra.mxu0 0.0
        %1499 = vmatprep.subr.mxu0 0.0
        %1500 = vmatpush1.msra.mxu0 0.0
        %1501 = vmatprep.subr.mxu0 0.0
        %1502 = vmatpush1.msra.mxu0 0.0
        %1503 = vmatprep.subr.mxu0 0.0
        %1504 = vmatpush1.msra.mxu0 0.0
        %1505 = vmatprep.subr.mxu0 0.0
        %1506 = vmatpush1.msra.mxu0 0.0
        %1507 = vmatprep.subr.mxu0 0.0
        %1508 = vmatpush1.msra.mxu0 0.0
        %1509 = vmatprep.subr.mxu0 0.0
        %1510 = vmatpush1.msra.mxu0 0.0
        %1511 = vmatprep.subr.mxu0 0.0
        %1512 = vmatpush1.msra.mxu0 0.0
        %1513 = vmatprep.subr.mxu0 0.0
        %1514 = vmatpush1.msra.mxu0 0.0
        %1515 = vmatprep.subr.mxu0 0.0
        %1516 = vmatpush1.msra.mxu0 0.0
        %1517 = vmatprep.subr.mxu0 0.0
        %1518 = vmatpush1.msra.mxu0 0.0
        %1519 = vmatprep.subr.mxu0 0.0
        %1520 = vmatpush1.msra.mxu0 0.0
        %1521 = vmatprep.subr.mxu0 0.0
        %1522 = vmatpush1.msra.mxu0 0.0
        %1523 = vmatprep.subr.mxu0 0.0
        %1524 = vmatpush1.msra.mxu0 0.0
        %1525 = vmatprep.subr.mxu0 0.0
        %1526 = vmatpush1.msra.mxu0 0.0
        %1527 = vmatprep.subr.mxu0 0.0
        %1528 = vmatpush1.msra.mxu0 0.0
        %1529 = vmatprep.subr.mxu0 0.0
        %1530 = vmatpush1.msra.mxu0 0.0
        %1531 = vmatprep.subr.mxu0 0.0
        %1532 = vmatpush1.msra.mxu0 0.0
        %1533 = vmatprep.subr.mxu0 0.0
        %1534 = vmatpush1.msra.mxu0 0.0
        %1535 = vmatprep.subr.mxu0 0.0
        %1536 = vmatpush1.msra.mxu0 0.0
        %1537 = vmatprep.mubr.f32.mxu0 0.0
        %1538 = vmatmul.mubr.f32.gmra.mrb[0].mxu0 %v1459
        %v1539 = vpop.f32.mrb[0].mxu0
        %v1540 = vadd.f32 0.0, %v1539
        %v1541 = vpop.f32.mrb[0].mxu0
        %v1542 = vadd.f32 0.0, %v1541
        %1543 = vmatprep.mubr.f32.mxu0 0.0
        %1544 = vmatmul.mubr.f32.gmra.mrb[0].mxu0 %v1462
        %v1545 = vpop.f32.mrb[0].mxu0
        %v1546 = vadd.f32 0.0, %v1545
        %v1547 = vpop.f32.mrb[0].mxu0
        %v1548 = vadd.f32 0.0, %v1547
        %1549 = vdwg.mxu0
        %1550 = vmatprep.subr.mxu0 %v1471
        %1551 = vmatpush1.msra.mxu0 %v1469
        %1552 = vmatprep.subr.mxu0 0.0
        %1553 = vmatpush1.msra.mxu0 0.0
        %1554 = vmatprep.subr.mxu0 0.0
        %1555 = vmatpush1.msra.mxu0 0.0
        %1556 = vmatprep.subr.mxu0 0.0
        %1557 = vmatpush1.msra.mxu0 0.0
        %1558 = vmatprep.subr.mxu0 0.0
        %1559 = vmatpush1.msra.mxu0 0.0
        %1560 = vmatprep.subr.mxu0 0.0
        %1561 = vmatpush1.msra.mxu0 0.0
        %1562 = vmatprep.subr.mxu0 0.0
        %1563 = vmatpush1.msra.mxu0 0.0
        %1564 = vmatprep.subr.mxu0 0.0
        %1565 = vmatpush1.msra.mxu0 0.0
        %1566 = vmatprep.subr.mxu0 0.0
        %1567 = vmatpush1.msra.mxu0 0.0
        %1568 = vmatprep.subr.mxu0 0.0
        %1569 = vmatpush1.msra.mxu0 0.0
        %1570 = vmatprep.subr.mxu0 0.0
        %1571 = vmatpush1.msra.mxu0 0.0
        %1572 = vmatprep.subr.mxu0 0.0
        %1573 = vmatpush1.msra.mxu0 0.0
        %1574 = vmatprep.subr.mxu0 0.0
        %1575 = vmatpush1.msra.mxu0 0.0
        %1576 = vmatprep.subr.mxu0 0.0
        %1577 = vmatpush1.msra.mxu0 0.0
        %1578 = vmatprep.subr.mxu0 0.0
        %1579 = vmatpush1.msra.mxu0 0.0
        %1580 = vmatprep.subr.mxu0 0.0
        %1581 = vmatpush1.msra.mxu0 0.0
        %1582 = vmatprep.subr.mxu0 0.0
        %1583 = vmatpush1.msra.mxu0 0.0
        %1584 = vmatprep.subr.mxu0 0.0
        %1585 = vmatpush1.msra.mxu0 0.0
        %1586 = vmatprep.subr.mxu0 0.0
        %1587 = vmatpush1.msra.mxu0 0.0
        %1588 = vmatprep.subr.mxu0 0.0
        %1589 = vmatpush1.msra.mxu0 0.0
        %1590 = vmatprep.subr.mxu0 0.0
        %1591 = vmatpush1.msra.mxu0 0.0
        %1592 = vmatprep.subr.mxu0 0.0
        %1593 = vmatpush1.msra.mxu0 0.0
        %1594 = vmatprep.subr.mxu0 0.0
        %1595 = vmatpush1.msra.mxu0 0.0
        %1596 = vmatprep.subr.mxu0 0.0
        %1597 = vmatpush1.msra.mxu0 0.0
        %1598 = vmatprep.subr.mxu0 0.0
        %1599 = vmatpush1.msra.mxu0 0.0
        %1600 = vmatprep.subr.mxu0 0.0
        %1601 = vmatpush1.msra.mxu0 0.0
        %1602 = vmatprep.subr.mxu0 0.0
        %1603 = vmatpush1.msra.mxu0 0.0
        %1604 = vmatprep.subr.mxu0 0.0
        %1605 = vmatpush1.msra.mxu0 0.0
        %1606 = vmatprep.subr.mxu0 0.0
        %1607 = vmatpush1.msra.mxu0 0.0
        %1608 = vmatprep.subr.mxu0 0.0
        %1609 = vmatpush1.msra.mxu0 0.0
        %1610 = vmatprep.subr.mxu0 0.0
        %1611 = vmatpush1.msra.mxu0 0.0
        %1612 = vmatprep.subr.mxu0 0.0
        %1613 = vmatpush1.msra.mxu0 0.0
        %1614 = vmatprep.mubr.f32.mxu0 0.0
        %1615 = vmatmul.mubr.f32.gmra.mrb[0].mxu0 %v1459
        %v1616 = vpop.f32.mrb[0].mxu0
        %v1617 = vadd.f32 0.0, %v1616
        %v1618 = vpop.f32.mrb[0].mxu0
        %v1619 = vadd.f32 0.0, %v1618
        %1620 = vmatprep.mubr.f32.mxu0 0.0
        %1621 = vmatmul.mubr.f32.gmra.mrb[0].mxu0 %v1462
        %v1622 = vpop.f32.mrb[0].mxu0
        %v1623 = vadd.f32 0.0, %v1622
        %v1624 = vpop.f32.mrb[0].mxu0
        %v1625 = vadd.f32 0.0, %v1624
        %1626 = vdwg.mxu0
        %v1627 = vsub.f32 %v1216, %v1540
        %v1628 = vsub.f32 %v1217, %v1542
        %v1629 = vsub.f32 %v1218, %v1617
        %v1630 = vsub.f32 %v1219, %v1619
        %v1631 = vsub.f32 %v1220, %v1546
        %v1632 = vsub.f32 %v1221, %v1548
        %v1633 = vsub.f32 %v1222, %v1623
        %v1634 = vsub.f32 %v1223, %v1625
        %v1635 = vmul.f32 %v1627, %v1627
        %v1636 = vmul.f32 %v1628, %v1628
        %v1637 = vmul.f32 %v1629, %v1629
        %v1638 = vmul.f32 %v1630, %v1630
        %v1639 = vmul.f32 %v1631, %v1631
        %v1640 = vmul.f32 %v1632, %v1632
        %v1641 = vmul.f32 %v1633, %v1633
        %v1642 = vmul.f32 %v1634, %v1634
        %1643 = vmatprep.subr.mxu0 0.0
        %1644 = vmatpush1.msra.mxu0 %v1224
        %1645 = vmatprep.subr.mxu0 0.0
        %1646 = vmatpush1.msra.mxu0 %v1225
        %1647 = vmatprep.subr.mxu0 0.0
        %1648 = vmatpush1.msra.mxu0 %v1226
        %1649 = vmatprep.subr.mxu0 0.0
        %1650 = vmatpush1.msra.mxu0 %v1227
        %1651 = vmatprep.subr.mxu0 0.0
        %1652 = vmatpush1.msra.mxu0 %v1228
        %1653 = vmatprep.subr.mxu0 0.0
        %1654 = vmatpush1.msra.mxu0 %v1229
        %1655 = vmatprep.subr.mxu0 0.0
        %1656 = vmatpush1.msra.mxu0 %v1230
        %1657 = vmatprep.subr.mxu0 0.0
        %1658 = vmatpush1.msra.mxu0 %v1231
        %1659 = vmatprep.subr.mxu0 0.0
        %1660 = vmatpush1.msra.mxu0 %v1232
        %1661 = vmatprep.subr.mxu0 0.0
        %1662 = vmatpush1.msra.mxu0 %v1233
        %1663 = vmatprep.subr.mxu0 0.0
        %1664 = vmatpush1.msra.mxu0 %v1234
        %1665 = vmatprep.subr.mxu0 0.0
        %1666 = vmatpush1.msra.mxu0 %v1235
        %1667 = vmatprep.subr.mxu0 0.0
        %1668 = vmatpush1.msra.mxu0 %v1236
        %1669 = vmatprep.subr.mxu0 0.0
        %1670 = vmatpush1.msra.mxu0 %v1237
        %1671 = vmatprep.subr.mxu0 0.0
        %1672 = vmatpush1.msra.mxu0 %v1238
        %1673 = vmatprep.subr.mxu0 0.0
        %1674 = vmatpush1.msra.mxu0 %v1239
        %1675 = vmatprep.subr.mxu0 0.0
        %1676 = vmatpush1.msra.mxu0 %v1240
        %1677 = vmatprep.subr.mxu0 0.0
        %1678 = vmatpush1.msra.mxu0 %v1241
        %1679 = vmatprep.subr.mxu0 0.0
        %1680 = vmatpush1.msra.mxu0 %v1242
        %1681 = vmatprep.subr.mxu0 0.0
        %1682 = vmatpush1.msra.mxu0 %v1243
        %1683 = vmatprep.subr.mxu0 0.0
        %1684 = vmatpush1.msra.mxu0 %v1244
        %1685 = vmatprep.subr.mxu0 0.0
        %1686 = vmatpush1.msra.mxu0 %v1245
        %1687 = vmatprep.subr.mxu0 0.0
        %1688 = vmatpush1.msra.mxu0 %v1246
        %1689 = vmatprep.subr.mxu0 0.0
        %1690 = vmatpush1.msra.mxu0 %v1247
        %1691 = vmatprep.subr.mxu0 0.0
        %1692 = vmatpush1.msra.mxu0 %v1248
        %1693 = vmatprep.subr.mxu0 0.0
        %1694 = vmatpush1.msra.mxu0 %v1249
        %1695 = vmatprep.subr.mxu0 0.0
        %1696 = vmatpush1.msra.mxu0 %v1250
        %1697 = vmatprep.subr.mxu0 0.0
        %1698 = vmatpush1.msra.mxu0 %v1251
        %1699 = vmatprep.subr.mxu0 0.0
        %1700 = vmatpush1.msra.mxu0 %v1252
        %1701 = vmatprep.subr.mxu0 0.0
        %1702 = vmatpush1.msra.mxu0 %v1253
        %1703 = vmatprep.subr.mxu0 0.0
        %1704 = vmatpush1.msra.mxu0 %v1254
        %1705 = vmatprep.subr.mxu0 0.0
        %1706 = vmatpush1.msra.mxu0 %v1255
        %1707 = vmatprep.mubr.f32.mxu0 %v1636
        %1708 = vmatmul.mubr.f32.gmra.mrb[0].mxu0 %v1635
        %v1709 = vpop.f32.mrb[0].mxu0
        %v1710 = vadd.f32 0.0, %v1709
        %v1711 = vpop.f32.mrb[0].mxu0
        %1712 = vmatprep.mubr.f32.mxu0 %v1640
        %1713 = vmatmul.mubr.f32.gmra.mrb[0].mxu0 %v1639
        %v1714 = vpop.f32.mrb[0].mxu0
        %v1715 = vadd.f32 0.0, %v1714
        %v1716 = vpop.f32.mrb[0].mxu0
        %1717 = vdwg.mxu0
        %1718 = vmatprep.subr.mxu0 0.0
        %1719 = vmatpush1.msra.mxu0 %v1256
        %1720 = vmatprep.subr.mxu0 0.0
        %1721 = vmatpush1.msra.mxu0 %v1257
        %1722 = vmatprep.subr.mxu0 0.0
        %1723 = vmatpush1.msra.mxu0 %v1258
        %1724 = vmatprep.subr.mxu0 0.0
        %1725 = vmatpush1.msra.mxu0 %v1259
        %1726 = vmatprep.subr.mxu0 0.0
        %1727 = vmatpush1.msra.mxu0 %v1260
        %1728 = vmatprep.subr.mxu0 0.0
        %1729 = vmatpush1.msra.mxu0 %v1261
        %1730 = vmatprep.subr.mxu0 0.0
        %1731 = vmatpush1.msra.mxu0 %v1262
        %1732 = vmatprep.subr.mxu0 0.0
        %1733 = vmatpush1.msra.mxu0 %v1263
        %1734 = vmatprep.subr.mxu0 0.0
        %1735 = vmatpush1.msra.mxu0 %v1264
        %1736 = vmatprep.subr.mxu0 0.0
        %1737 = vmatpush1.msra.mxu0 %v1265
        %1738 = vmatprep.subr.mxu0 0.0
        %1739 = vmatpush1.msra.mxu0 %v1266
        %1740 = vmatprep.subr.mxu0 0.0
        %1741 = vmatpush1.msra.mxu0 %v1267
        %1742 = vmatprep.subr.mxu0 0.0
        %1743 = vmatpush1.msra.mxu0 %v1268
        %1744 = vmatprep.subr.mxu0 0.0
        %1745 = vmatpush1.msra.mxu0 %v1269
        %1746 = vmatprep.subr.mxu0 0.0
        %1747 = vmatpush1.msra.mxu0 %v1270
        %1748 = vmatprep.subr.mxu0 0.0
        %1749 = vmatpush1.msra.mxu0 %v1271
        %1750 = vmatprep.subr.mxu0 0.0
        %1751 = vmatpush1.msra.mxu0 %v1272
        %1752 = vmatprep.subr.mxu0 0.0
        %1753 = vmatpush1.msra.mxu0 %v1273
        %1754 = vmatprep.subr.mxu0 0.0
        %1755 = vmatpush1.msra.mxu0 %v1274
        %1756 = vmatprep.subr.mxu0 0.0
        %1757 = vmatpush1.msra.mxu0 %v1275
        %1758 = vmatprep.subr.mxu0 0.0
        %1759 = vmatpush1.msra.mxu0 %v1276
        %1760 = vmatprep.subr.mxu0 0.0
        %1761 = vmatpush1.msra.mxu0 %v1277
        %1762 = vmatprep.subr.mxu0 0.0
        %1763 = vmatpush1.msra.mxu0 %v1278
        %1764 = vmatprep.subr.mxu0 0.0
        %1765 = vmatpush1.msra.mxu0 %v1279
        %1766 = vmatprep.subr.mxu0 0.0
        %1767 = vmatpush1.msra.mxu0 %v1280
        %1768 = vmatprep.subr.mxu0 0.0
        %1769 = vmatpush1.msra.mxu0 %v1281
        %1770 = vmatprep.subr.mxu0 0.0
        %1771 = vmatpush1.msra.mxu0 %v1282
        %1772 = vmatprep.subr.mxu0 0.0
        %1773 = vmatpush1.msra.mxu0 %v1283
        %1774 = vmatprep.subr.mxu0 0.0
        %1775 = vmatpush1.msra.mxu0 %v1284
        %1776 = vmatprep.subr.mxu0 0.0
        %1777 = vmatpush1.msra.mxu0 %v1285
        %1778 = vmatprep.subr.mxu0 0.0
        %1779 = vmatpush1.msra.mxu0 %v1286
        %1780 = vmatprep.subr.mxu0 0.0
        %1781 = vmatpush1.msra.mxu0 %v1287
        %1782 = vmatprep.mubr.f32.mxu0 %v1638
        %1783 = vmatmul.mubr.f32.gmra.mrb[0].mxu0 %v1637
        %v1784 = vpop.f32.mrb[0].mxu0
        %v1785 = vadd.f32 %v1710, %v1784
        %v1786 = vpop.f32.mrb[0].mxu0
        %1787 = vmatprep.mubr.f32.mxu0 %v1642
        %1788 = vmatmul.mubr.f32.gmra.mrb[0].mxu0 %v1641
        %v1789 = vpop.f32.mrb[0].mxu0
        %v1790 = vadd.f32 %v1715, %v1789
        %v1791 = vpop.f32.mrb[0].mxu0
        %1792 = vdwg.mxu0
        %v1793 = vld [vmem:[%s5] sm:$0xff]
        %v1794 = vld [vmem:[%s5 + $0x8] sm:$0xff]
        %1796 = vset.pattern.permute.xlu0 0
        %1797 = vperm.xlu0 %1796, %v1793
        %v1798 = vpop.permute.xlu0 %1797
        %1801 = vset.pattern.permute.xlu0 0
        %1802 = vperm.xlu0 %1801, %v1794
        %v1803 = vpop.permute.xlu0 %1802
        %v1805 = vmul.f32 %v1798, %v1627
        %v1806 = vmul.f32 %v1798, %v1628
        %v1807 = vmul.f32 %v1798, %v1629
        %v1808 = vmul.f32 %v1798, %v1630
        %v1809 = vmul.f32 %v1803, %v1631
        %v1810 = vmul.f32 %v1803, %v1632
        %v1811 = vmul.f32 %v1803, %v1633
        %v1812 = vmul.f32 %v1803, %v1634
        %v1814 = vsel %vm1457, %v1785, 0
        %v1817 = vsel %vm1457, %v1790, 0
        %1819 = vmatprep.subr.mxu0 %v1467
        %1820 = vmatpush1.msra.mxu0 %v1465
        %1821 = vmatprep.subr.mxu0 0.0
        %1822 = vmatpush1.msra.mxu0 0.0
        %1823 = vmatprep.subr.mxu0 0.0
        %1824 = vmatpush1.msra.mxu0 0.0
        %1825 = vmatprep.subr.mxu0 0.0
        %1826 = vmatpush1.msra.mxu0 0.0
        %1827 = vmatprep.subr.mxu0 0.0
        %1828 = vmatpush1.msra.mxu0 0.0
        %1829 = vmatprep.subr.mxu0 0.0
        %1830 = vmatpush1.msra.mxu0 0.0
        %1831 = vmatprep.subr.mxu0 0.0
        %1832 = vmatpush1.msra.mxu0 0.0
        %1833 = vmatprep.subr.mxu0 0.0
        %1834 = vmatpush1.msra.mxu0 0.0
        %1835 = vmatprep.subr.mxu0 0.0
        %1836 = vmatpush1.msra.mxu0 0.0
        %1837 = vmatprep.subr.mxu0 0.0
        %1838 = vmatpush1.msra.mxu0 0.0
        %1839 = vmatprep.subr.mxu0 0.0
        %1840 = vmatpush1.msra.mxu0 0.0
        %1841 = vmatprep.subr.mxu0 0.0
        %1842 = vmatpush1.msra.mxu0 0.0
        %1843 = vmatprep.subr.mxu0 0.0
        %1844 = vmatpush1.msra.mxu0 0.0
        %1845 = vmatprep.subr.mxu0 0.0
        %1846 = vmatpush1.msra.mxu0 0.0
        %1847 = vmatprep.subr.mxu0 0.0
        %1848 = vmatpush1.msra.mxu0 0.0
        %1849 = vmatprep.subr.mxu0 0.0
        %1850 = vmatpush1.msra.mxu0 0.0
        %1851 = vmatprep.subr.mxu0 0.0
        %1852 = vmatpush1.msra.mxu0 0.0
        %1853 = vmatprep.subr.mxu0 0.0
        %1854 = vmatpush1.msra.mxu0 0.0
        %1855 = vmatprep.subr.mxu0 0.0
        %1856 = vmatpush1.msra.mxu0 0.0
        %1857 = vmatprep.subr.mxu0 0.0
        %1858 = vmatpush1.msra.mxu0 0.0
        %1859 = vmatprep.subr.mxu0 0.0
        %1860 = vmatpush1.msra.mxu0 0.0
        %1861 = vmatprep.subr.mxu0 0.0
        %1862 = vmatpush1.msra.mxu0 0.0
        %1863 = vmatprep.subr.mxu0 0.0
        %1864 = vmatpush1.msra.mxu0 0.0
        %1865 = vmatprep.subr.mxu0 0.0
        %1866 = vmatpush1.msra.mxu0 0.0
        %1867 = vmatprep.subr.mxu0 0.0
        %1868 = vmatpush1.msra.mxu0 0.0
        %1869 = vmatprep.subr.mxu0 0.0
        %1870 = vmatpush1.msra.mxu0 0.0
        %1871 = vmatprep.subr.mxu0 0.0
        %1872 = vmatpush1.msra.mxu0 0.0
        %1873 = vmatprep.subr.mxu0 0.0
        %1874 = vmatpush1.msra.mxu0 0.0
        %1875 = vmatprep.subr.mxu0 0.0
        %1876 = vmatpush1.msra.mxu0 0.0
        %1877 = vmatprep.subr.mxu0 0.0
        %1878 = vmatpush1.msra.mxu0 0.0
        %1879 = vmatprep.subr.mxu0 0.0
        %1880 = vmatpush1.msra.mxu0 0.0
        %1881 = vmatprep.subr.mxu0 0.0
        %1882 = vmatpush1.msra.mxu0 0.0
        %1883 = vmatprep.mubr.f32.mxu0 0.0
        %1884 = vmatmul.mubr.f32.gmra.mrb[0].mxu0 %v1814
        %v1885 = vpop.f32.mrb[0].mxu0
        %v1886 = vadd.f32 1e-05, %v1885
        %v1887 = vpop.f32.mrb[0].mxu0
        %v1888 = vadd.f32 1e-05, %v1887
        %1889 = vmatprep.mubr.f32.mxu0 0.0
        %1890 = vmatmul.mubr.f32.gmra.mrb[0].mxu0 %v1817
        %v1891 = vpop.f32.mrb[0].mxu0
        %v1892 = vadd.f32 1e-05, %v1891
        %v1893 = vpop.f32.mrb[0].mxu0
        %v1894 = vadd.f32 1e-05, %v1893
        %1895 = vdwg.mxu0
        %1896 = vmatprep.subr.mxu0 %v1471
        %1897 = vmatpush1.msra.mxu0 %v1469
        %1898 = vmatprep.subr.mxu0 0.0
        %1899 = vmatpush1.msra.mxu0 0.0
        %1900 = vmatprep.subr.mxu0 0.0
        %1901 = vmatpush1.msra.mxu0 0.0
        %1902 = vmatprep.subr.mxu0 0.0
        %1903 = vmatpush1.msra.mxu0 0.0
        %1904 = vmatprep.subr.mxu0 0.0
        %1905 = vmatpush1.msra.mxu0 0.0
        %1906 = vmatprep.subr.mxu0 0.0
        %1907 = vmatpush1.msra.mxu0 0.0
        %1908 = vmatprep.subr.mxu0 0.0
        %1909 = vmatpush1.msra.mxu0 0.0
        %1910 = vmatprep.subr.mxu0 0.0
        %1911 = vmatpush1.msra.mxu0 0.0
        %1912 = vmatprep.subr.mxu0 0.0
        %1913 = vmatpush1.msra.mxu0 0.0
        %1914 = vmatprep.subr.mxu0 0.0
        %1915 = vmatpush1.msra.mxu0 0.0
        %1916 = vmatprep.subr.mxu0 0.0
        %1917 = vmatpush1.msra.mxu0 0.0
        %1918 = vmatprep.subr.mxu0 0.0
        %1919 = vmatpush1.msra.mxu0 0.0
        %1920 = vmatprep.subr.mxu0 0.0
        %1921 = vmatpush1.msra.mxu0 0.0
        %1922 = vmatprep.subr.mxu0 0.0
        %1923 = vmatpush1.msra.mxu0 0.0
        %1924 = vmatprep.subr.mxu0 0.0
        %1925 = vmatpush1.msra.mxu0 0.0
        %1926 = vmatprep.subr.mxu0 0.0
        %1927 = vmatpush1.msra.mxu0 0.0
        %1928 = vmatprep.subr.mxu0 0.0
        %1929 = vmatpush1.msra.mxu0 0.0
        %1930 = vmatprep.subr.mxu0 0.0
        %1931 = vmatpush1.msra.mxu0 0.0
        %1932 = vmatprep.subr.mxu0 0.0
        %1933 = vmatpush1.msra.mxu0 0.0
        %1934 = vmatprep.subr.mxu0 0.0
        %1935 = vmatpush1.msra.mxu0 0.0
        %1936 = vmatprep.subr.mxu0 0.0
        %1937 = vmatpush1.msra.mxu0 0.0
        %1938 = vmatprep.subr.mxu0 0.0
        %1939 = vmatpush1.msra.mxu0 0.0
        %1940 = vmatprep.subr.mxu0 0.0
        %1941 = vmatpush1.msra.mxu0 0.0
        %1942 = vmatprep.subr.mxu0 0.0
        %1943 = vmatpush1.msra.mxu0 0.0
        %1944 = vmatprep.subr.mxu0 0.0
        %1945 = vmatpush1.msra.mxu0 0.0
        %1946 = vmatprep.subr.mxu0 0.0
        %1947 = vmatpush1.msra.mxu0 0.0
        %1948 = vmatprep.subr.mxu0 0.0
        %1949 = vmatpush1.msra.mxu0 0.0
        %1950 = vmatprep.subr.mxu0 0.0
        %1951 = vmatpush1.msra.mxu0 0.0
        %1952 = vmatprep.subr.mxu0 0.0
        %1953 = vmatpush1.msra.mxu0 0.0
        %1954 = vmatprep.subr.mxu0 0.0
        %1955 = vmatpush1.msra.mxu0 0.0
        %1956 = vmatprep.subr.mxu0 0.0
        %1957 = vmatpush1.msra.mxu0 0.0
        %1958 = vmatprep.subr.mxu0 0.0
        %1959 = vmatpush1.msra.mxu0 0.0
        %1960 = vmatprep.mubr.f32.mxu0 0.0
        %1961 = vmatmul.mubr.f32.gmra.mrb[0].mxu0 %v1814
        %v1962 = vpop.f32.mrb[0].mxu0
        %v1963 = vadd.f32 1e-05, %v1962
        %v1964 = vpop.f32.mrb[0].mxu0
        %v1965 = vadd.f32 1e-05, %v1964
        %1966 = vmatprep.mubr.f32.mxu0 0.0
        %1967 = vmatmul.mubr.f32.gmra.mrb[0].mxu0 %v1817
        %v1968 = vpop.f32.mrb[0].mxu0
        %v1969 = vadd.f32 1e-05, %v1968
        %v1970 = vpop.f32.mrb[0].mxu0
        %v1971 = vadd.f32 1e-05, %v1970
        %1972 = vdwg.mxu0
        %v1973 = vrsqrt.pop %v1886
        %v1974 = vrsqrt.pop %v1888
        %v1975 = vrsqrt.pop %v1963
        %v1976 = vrsqrt.pop %v1965
        %v1977 = vrsqrt.pop %v1892
        %v1978 = vrsqrt.pop %v1894
        %v1979 = vrsqrt.pop %v1969
        %v1980 = vrsqrt.pop %v1971
        %v1981 = vmul.f32 %v1805, %v1973
        %v1982 = vmul.f32 %v1806, %v1974
        %v1983 = vmul.f32 %v1807, %v1975
        %v1984 = vmul.f32 %v1808, %v1976
        %v1985 = vmul.f32 %v1809, %v1977
        %v1986 = vmul.f32 %v1810, %v1978
        %v1987 = vmul.f32 %v1811, %v1979
        %v1988 = vmul.f32 %v1812, %v1980
        %v1989 = vld [vmem:[%s6] sm:$0xff]
        %v1990 = vld [vmem:[%s6 + $0x8] sm:$0xff]
        %1992 = vset.pattern.permute.xlu0 0
        %1993 = vperm.xlu0 %1992, %v1989
        %v1994 = vpop.permute.xlu0 %1993
        %1997 = vset.pattern.permute.xlu0 0
        %1998 = vperm.xlu0 %1997, %v1990
        %v1999 = vpop.permute.xlu0 %1998
        %v2001 = vadd.f32 %v1981, %v1994
        %v2002 = vadd.f32 %v1982, %v1994
        %v2003 = vadd.f32 %v1983, %v1994
        %v2004 = vadd.f32 %v1984, %v1994
        %v2005 = vadd.f32 %v1985, %v1999
        %v2006 = vadd.f32 %v1986, %v1999
        %v2007 = vadd.f32 %v1987, %v1999
        %v2008 = vadd.f32 %v1988, %v1999
        %v2009 = vld [vmem:[%s12] sm:$0xff]
        %v2010 = vld [vmem:[%s12 + $0x8] sm:$0xff]
        %v2011 = vld [vmem:[%s12 + $0x10] sm:$0xff]
        %v2012 = vld [vmem:[%s12 + $0x18] sm:$0xff]
        %v2013 = vld [vmem:[%s12 + $0x20] sm:$0x1]
        %v2014 = vld [vmem:[%s12 + $0x28] sm:$0x1]
        %v2015 = vld [vmem:[%s12 + $0x30] sm:$0x1]
        %v2016 = vld [vmem:[%s12 + $0x38] sm:$0x1]
        %2017 = vrot.lane.b32.xlu0 %v439, 34
        %v2018 = vpop.permute.xlu0 %2017
        %2019 = vrot.lane.b32.xlu0 %v443, 34
        %v2020 = vpop.permute.xlu0 %2019
        %2021 = vrot.lane.b32.xlu0 %v440, 34
        %v2022 = vpop.permute.xlu0 %2021
        %2023 = vrot.lane.b32.xlu0 %v444, 34
        %v2024 = vpop.permute.xlu0 %2023
        %2025 = vrot.lane.b32.xlu0 %v441, 34
        %v2026 = vpop.permute.xlu0 %2025
        %2027 = vrot.lane.b32.xlu0 %v445, 34
        %v2028 = vpop.permute.xlu0 %2027
        %2029 = vrot.lane.b32.xlu0 %v442, 34
        %v2030 = vpop.permute.xlu0 %2029
        %2031 = vrot.lane.b32.xlu0 %v446, 34
        %v2032 = vpop.permute.xlu0 %2031
        %v2033 = vlaneseq
        %v2034 = vand.u32 %v2033, 127
        %vm2035 = vcmp.lt.s32.totalorder %v2034, 34
        %v2036 = vsel %vm2035, %v2026, %v2030
        %v2037 = vsel %vm2035, %v2028, %v2032
        %v2038 = vsel %vm2035, %v2022, %v2026
        %v2039 = vsel %vm2035, %v2024, %v2028
        %v2040 = vsel %vm2035, %v2018, %v2022
        %v2041 = vsel %vm2035, %v2020, %v2024
        %v2042 = vsel %vm2035, %v2030, %v2018
        %v2043 = vsel %vm2035, %v2032, %v2020
        %v2044 = vlaneseq
        %v2045 = vshrl.u32 %v2044, 7
        %v2046 = vsub.s32 0, %v2045
        %v2047 = vrot.slane %v2009, %v2046
        %v2048 = vlaneseq
        %v2049 = vshrl.u32 %v2048, 7
        %v2050 = vsub.s32 0, %v2049
        %v2051 = vrot.slane %v2010, %v2050
        %v2052 = vlaneseq
        %v2053 = vshrl.u32 %v2052, 7
        %v2054 = vsub.s32 0, %v2053
        %v2055 = vrot.slane %v2011, %v2054
        %v2056 = vlaneseq
        %v2057 = vshrl.u32 %v2056, 7
        %v2058 = vsub.s32 0, %v2057
        %v2059 = vrot.slane %v2012, %v2058
        %v2060 = vmul.f32 %v2042, %v2047
        %v2061 = vmul.f32 %v2040, %v2051
        %v2062 = vmul.f32 %v2038, %v2055
        %v2063 = vmul.f32 %v2036, %v2059
        %v2064 = vmul.f32 %v2043, %v2047
        %v2065 = vmul.f32 %v2041, %v2051
        %v2066 = vmul.f32 %v2039, %v2055
        %v2067 = vmul.f32 %v2037, %v2059
        %2068 = vrot.lane.b32.xlu0 %v439, 32
        %v2069 = vpop.permute.xlu0 %2068
        %2070 = vrot.lane.b32.xlu0 %v443, 32
        %v2071 = vpop.permute.xlu0 %2070
        %2072 = vrot.lane.b32.xlu0 %v440, 32
        %v2073 = vpop.permute.xlu0 %2072
        %2074 = vrot.lane.b32.xlu0 %v444, 32
        %v2075 = vpop.permute.xlu0 %2074
        %2076 = vrot.lane.b32.xlu0 %v441, 32
        %v2077 = vpop.permute.xlu0 %2076
        %2078 = vrot.lane.b32.xlu0 %v445, 32
        %v2079 = vpop.permute.xlu0 %2078
        %2080 = vrot.lane.b32.xlu0 %v442, 32
        %v2081 = vpop.permute.xlu0 %2080
        %2082 = vrot.lane.b32.xlu0 %v446, 32
        %v2083 = vpop.permute.xlu0 %2082
        %vm2084 = vcmp.lt.s32.totalorder %v2034, 32
        %v2085 = vsel %vm2084, %v2077, %v2081
        %v2086 = vsel %vm2084, %v2079, %v2083
        %v2087 = vsel %vm2084, %v2073, %v2077
        %v2088 = vsel %vm2084, %v2075, %v2079
        %v2089 = vsel %vm2084, %v2069, %v2073
        %v2090 = vsel %vm2084, %v2071, %v2075
        %v2091 = vsel %vm2084, %v2081, %v2069
        %v2092 = vsel %vm2084, %v2083, %v2071
        %v2093 = vlaneseq
        %v2094 = vshrl.u32 %v2093, 7
        %v2095 = vsub.s32 1, %v2094
        %v2096 = vrot.slane %v2009, %v2095
        %v2097 = vlaneseq
        %v2098 = vshrl.u32 %v2097, 7
        %v2099 = vsub.s32 1, %v2098
        %v2100 = vrot.slane %v2010, %v2099
        %v2101 = vlaneseq
        %v2102 = vshrl.u32 %v2101, 7
        %v2103 = vsub.s32 1, %v2102
        %v2104 = vrot.slane %v2011, %v2103
        %v2105 = vlaneseq
        %v2106 = vshrl.u32 %v2105, 7
        %v2107 = vsub.s32 1, %v2106
        %v2108 = vrot.slane %v2012, %v2107
        %v2109 = vmul.f32 %v2091, %v2096
        %v2110 = vmul.f32 %v2089, %v2100
        %v2111 = vmul.f32 %v2087, %v2104
        %v2112 = vmul.f32 %v2085, %v2108
        %v2113 = vmul.f32 %v2092, %v2096
        %v2114 = vmul.f32 %v2090, %v2100
        %v2115 = vmul.f32 %v2088, %v2104
        %v2116 = vmul.f32 %v2086, %v2108
        %2117 = vrot.lane.b32.xlu0 %v439, 30
        %v2118 = vpop.permute.xlu0 %2117
        %2119 = vrot.lane.b32.xlu0 %v443, 30
        %v2120 = vpop.permute.xlu0 %2119
        %2121 = vrot.lane.b32.xlu0 %v440, 30
        %v2122 = vpop.permute.xlu0 %2121
        %2123 = vrot.lane.b32.xlu0 %v444, 30
        %v2124 = vpop.permute.xlu0 %2123
        %2125 = vrot.lane.b32.xlu0 %v441, 30
        %v2126 = vpop.permute.xlu0 %2125
        %2127 = vrot.lane.b32.xlu0 %v445, 30
        %v2128 = vpop.permute.xlu0 %2127
        %2129 = vrot.lane.b32.xlu0 %v442, 30
        %v2130 = vpop.permute.xlu0 %2129
        %2131 = vrot.lane.b32.xlu0 %v446, 30
        %v2132 = vpop.permute.xlu0 %2131
        %vm2133 = vcmp.lt.s32.totalorder %v2034, 30
        %v2134 = vsel %vm2133, %v2126, %v2130
        %v2135 = vsel %vm2133, %v2128, %v2132
        %v2136 = vsel %vm2133, %v2122, %v2126
        %v2137 = vsel %vm2133, %v2124, %v2128
        %v2138 = vsel %vm2133, %v2118, %v2122
        %v2139 = vsel %vm2133, %v2120, %v2124
        %v2140 = vsel %vm2133, %v2130, %v2118
        %v2141 = vsel %vm2133, %v2132, %v2120
        %v2142 = vlaneseq
        %v2143 = vshrl.u32 %v2142, 7
        %v2144 = vsub.s32 2, %v2143
        %v2145 = vrot.slane %v2009, %v2144
        %v2146 = vlaneseq
        %v2147 = vshrl.u32 %v2146, 7
        %v2148 = vsub.s32 2, %v2147
        %v2149 = vrot.slane %v2010, %v2148
        %v2150 = vlaneseq
        %v2151 = vshrl.u32 %v2150, 7
        %v2152 = vsub.s32 2, %v2151
        %v2153 = vrot.slane %v2011, %v2152
        %v2154 = vlaneseq
        %v2155 = vshrl.u32 %v2154, 7
        %v2156 = vsub.s32 2, %v2155
        %v2157 = vrot.slane %v2012, %v2156
        %v2158 = vmul.f32 %v2140, %v2145
        %v2159 = vmul.f32 %v2138, %v2149
        %v2160 = vmul.f32 %v2136, %v2153
        %v2161 = vmul.f32 %v2134, %v2157
        %v2162 = vmul.f32 %v2141, %v2145
        %v2163 = vmul.f32 %v2139, %v2149
        %v2164 = vmul.f32 %v2137, %v2153
        %v2165 = vmul.f32 %v2135, %v2157
        %2166 = vrot.lane.b32.xlu0 %v439, 2
        %v2167 = vpop.permute.xlu0 %2166
        %2168 = vrot.lane.b32.xlu0 %v443, 2
        %v2169 = vpop.permute.xlu0 %2168
        %2170 = vrot.lane.b32.xlu0 %v440, 2
        %v2171 = vpop.permute.xlu0 %2170
        %2172 = vrot.lane.b32.xlu0 %v444, 2
        %v2173 = vpop.permute.xlu0 %2172
        %2174 = vrot.lane.b32.xlu0 %v441, 2
        %v2175 = vpop.permute.xlu0 %2174
        %2176 = vrot.lane.b32.xlu0 %v445, 2
        %v2177 = vpop.permute.xlu0 %2176
        %2178 = vrot.lane.b32.xlu0 %v442, 2
        %v2179 = vpop.permute.xlu0 %2178
        %2180 = vrot.lane.b32.xlu0 %v446, 2
        %v2181 = vpop.permute.xlu0 %2180
        %vm2182 = vcmp.lt.s32.totalorder %v2034, 2
        %v2183 = vsel %vm2182, %v2175, %v2179
        %v2184 = vsel %vm2182, %v2177, %v2181
        %v2185 = vsel %vm2182, %v2171, %v2175
        %v2186 = vsel %vm2182, %v2173, %v2177
        %v2187 = vsel %vm2182, %v2167, %v2171
        %v2188 = vsel %vm2182, %v2169, %v2173
        %v2189 = vsel %vm2182, %v2179, %v2167
        %v2190 = vsel %vm2182, %v2181, %v2169
        %v2191 = vlaneseq
        %v2192 = vshrl.u32 %v2191, 7
        %v2193 = vsub.s32 3, %v2192
        %v2194 = vrot.slane %v2009, %v2193
        %v2195 = vlaneseq
        %v2196 = vshrl.u32 %v2195, 7
        %v2197 = vsub.s32 3, %v2196
        %v2198 = vrot.slane %v2010, %v2197
        %v2199 = vlaneseq
        %v2200 = vshrl.u32 %v2199, 7
        %v2201 = vsub.s32 3, %v2200
        %v2202 = vrot.slane %v2011, %v2201
        %v2203 = vlaneseq
        %v2204 = vshrl.u32 %v2203, 7
        %v2205 = vsub.s32 3, %v2204
        %v2206 = vrot.slane %v2012, %v2205
        %v2207 = vmul.f32 %v2189, %v2194
        %v2208 = vmul.f32 %v2187, %v2198
        %v2209 = vmul.f32 %v2185, %v2202
        %v2210 = vmul.f32 %v2183, %v2206
        %v2211 = vmul.f32 %v2190, %v2194
        %v2212 = vmul.f32 %v2188, %v2198
        %v2213 = vmul.f32 %v2186, %v2202
        %v2214 = vmul.f32 %v2184, %v2206
        %v2215 = vlaneseq
        %v2216 = vshrl.u32 %v2215, 7
        %v2217 = vsub.s32 4, %v2216
        %v2218 = vrot.slane %v2009, %v2217
        %v2219 = vlaneseq
        %v2220 = vshrl.u32 %v2219, 7
        %v2221 = vsub.s32 4, %v2220
        %v2222 = vrot.slane %v2010, %v2221
        %v2223 = vlaneseq
        %v2224 = vshrl.u32 %v2223, 7
        %v2225 = vsub.s32 4, %v2224
        %v2226 = vrot.slane %v2011, %v2225
        %v2227 = vlaneseq
        %v2228 = vshrl.u32 %v2227, 7
        %v2229 = vsub.s32 4, %v2228
        %v2230 = vrot.slane %v2012, %v2229
        %v2231 = vmul.f32 %v439, %v2218
        %v2232 = vmul.f32 %v440, %v2222
        %v2233 = vmul.f32 %v441, %v2226
        %v2234 = vmul.f32 %v442, %v2230
        %v2235 = vmul.f32 %v443, %v2218
        %v2236 = vmul.f32 %v444, %v2222
        %v2237 = vmul.f32 %v445, %v2226
        %v2238 = vmul.f32 %v446, %v2230
        %2239 = vrot.lane.b32.xlu0 %v439, 126
        %v2240 = vpop.permute.xlu0 %2239
        %2241 = vrot.lane.b32.xlu0 %v443, 126
        %v2242 = vpop.permute.xlu0 %2241
        %2243 = vrot.lane.b32.xlu0 %v440, 126
        %v2244 = vpop.permute.xlu0 %2243
        %2245 = vrot.lane.b32.xlu0 %v444, 126
        %v2246 = vpop.permute.xlu0 %2245
        %2247 = vrot.lane.b32.xlu0 %v441, 126
        %v2248 = vpop.permute.xlu0 %2247
        %2249 = vrot.lane.b32.xlu0 %v445, 126
        %v2250 = vpop.permute.xlu0 %2249
        %2251 = vrot.lane.b32.xlu0 %v442, 126
        %v2252 = vpop.permute.xlu0 %2251
        %2253 = vrot.lane.b32.xlu0 %v446, 126
        %v2254 = vpop.permute.xlu0 %2253
        %vm2255 = vcmp.lt.s32.totalorder %v2034, 126
        %v2256 = vsel %vm2255, %v2248, %v2252
        %v2257 = vsel %vm2255, %v2250, %v2254
        %v2258 = vsel %vm2255, %v2244, %v2248
        %v2259 = vsel %vm2255, %v2246, %v2250
        %v2260 = vsel %vm2255, %v2240, %v2244
        %v2261 = vsel %vm2255, %v2242, %v2246
        %v2262 = vsel %vm2255, %v2252, %v2240
        %v2263 = vsel %vm2255, %v2254, %v2242
        %v2264 = vlaneseq
        %v2265 = vshrl.u32 %v2264, 7
        %v2266 = vsub.s32 5, %v2265
        %v2267 = vrot.slane %v2009, %v2266
        %v2268 = vlaneseq
        %v2269 = vshrl.u32 %v2268, 7
        %v2270 = vsub.s32 5, %v2269
        %v2271 = vrot.slane %v2010, %v2270
        %v2272 = vlaneseq
        %v2273 = vshrl.u32 %v2272, 7
        %v2274 = vsub.s32 5, %v2273
        %v2275 = vrot.slane %v2011, %v2274
        %v2276 = vlaneseq
        %v2277 = vshrl.u32 %v2276, 7
        %v2278 = vsub.s32 5, %v2277
        %v2279 = vrot.slane %v2012, %v2278
        %v2280 = vmul.f32 %v2260, %v2267
        %v2281 = vmul.f32 %v2258, %v2271
        %v2282 = vmul.f32 %v2256, %v2275
        %v2283 = vmul.f32 %v2262, %v2279
        %v2284 = vmul.f32 %v2261, %v2267
        %v2285 = vmul.f32 %v2259, %v2271
        %v2286 = vmul.f32 %v2257, %v2275
        %v2287 = vmul.f32 %v2263, %v2279
        %2288 = vrot.lane.b32.xlu0 %v439, 98
        %v2289 = vpop.permute.xlu0 %2288
        %2290 = vrot.lane.b32.xlu0 %v443, 98
        %v2291 = vpop.permute.xlu0 %2290
        %2292 = vrot.lane.b32.xlu0 %v440, 98
        %v2293 = vpop.permute.xlu0 %2292
        %2294 = vrot.lane.b32.xlu0 %v444, 98
        %v2295 = vpop.permute.xlu0 %2294
        %2296 = vrot.lane.b32.xlu0 %v441, 98
        %v2297 = vpop.permute.xlu0 %2296
        %2298 = vrot.lane.b32.xlu0 %v445, 98
        %v2299 = vpop.permute.xlu0 %2298
        %2300 = vrot.lane.b32.xlu0 %v442, 98
        %v2301 = vpop.permute.xlu0 %2300
        %2302 = vrot.lane.b32.xlu0 %v446, 98
        %v2303 = vpop.permute.xlu0 %2302
        %vm2304 = vcmp.lt.s32.totalorder %v2034, 98
        %v2305 = vsel %vm2304, %v2297, %v2301
        %v2306 = vsel %vm2304, %v2299, %v2303
        %v2307 = vsel %vm2304, %v2293, %v2297
        %v2308 = vsel %vm2304, %v2295, %v2299
        %v2309 = vsel %vm2304, %v2289, %v2293
        %v2310 = vsel %vm2304, %v2291, %v2295
        %v2311 = vsel %vm2304, %v2301, %v2289
        %v2312 = vsel %vm2304, %v2303, %v2291
        %v2313 = vlaneseq
        %v2314 = vshrl.u32 %v2313, 7
        %v2315 = vsub.s32 6, %v2314
        %v2316 = vrot.slane %v2009, %v2315
        %v2317 = vlaneseq
        %v2318 = vshrl.u32 %v2317, 7
        %v2319 = vsub.s32 6, %v2318
        %v2320 = vrot.slane %v2010, %v2319
        %v2321 = vlaneseq
        %v2322 = vshrl.u32 %v2321, 7
        %v2323 = vsub.s32 6, %v2322
        %v2324 = vrot.slane %v2011, %v2323
        %v2325 = vlaneseq
        %v2326 = vshrl.u32 %v2325, 7
        %v2327 = vsub.s32 6, %v2326
        %v2328 = vrot.slane %v2012, %v2327
        %v2329 = vmul.f32 %v2309, %v2316
        %v2330 = vmul.f32 %v2307, %v2320
        %v2331 = vmul.f32 %v2305, %v2324
        %v2332 = vmul.f32 %v2311, %v2328
        %v2333 = vmul.f32 %v2310, %v2316
        %v2334 = vmul.f32 %v2308, %v2320
        %v2335 = vmul.f32 %v2306, %v2324
        %v2336 = vmul.f32 %v2312, %v2328
        %2337 = vrot.lane.b32.xlu0 %v439, 96
        %v2338 = vpop.permute.xlu0 %2337
        %2339 = vrot.lane.b32.xlu0 %v443, 96
        %v2340 = vpop.permute.xlu0 %2339
        %2341 = vrot.lane.b32.xlu0 %v440, 96
        %v2342 = vpop.permute.xlu0 %2341
        %2343 = vrot.lane.b32.xlu0 %v444, 96
        %v2344 = vpop.permute.xlu0 %2343
        %2345 = vrot.lane.b32.xlu0 %v441, 96
        %v2346 = vpop.permute.xlu0 %2345
        %2347 = vrot.lane.b32.xlu0 %v445, 96
        %v2348 = vpop.permute.xlu0 %2347
        %2349 = vrot.lane.b32.xlu0 %v442, 96
        %v2350 = vpop.permute.xlu0 %2349
        %2351 = vrot.lane.b32.xlu0 %v446, 96
        %v2352 = vpop.permute.xlu0 %2351
        %vm2353 = vcmp.lt.s32.totalorder %v2034, 96
        %v2354 = vsel %vm2353, %v2346, %v2350
        %v2355 = vsel %vm2353, %v2348, %v2352
        %v2356 = vsel %vm2353, %v2342, %v2346
        %v2357 = vsel %vm2353, %v2344, %v2348
        %v2358 = vsel %vm2353, %v2338, %v2342
        %v2359 = vsel %vm2353, %v2340, %v2344
        %v2360 = vsel %vm2353, %v2350, %v2338
        %v2361 = vsel %vm2353, %v2352, %v2340
        %v2362 = vlaneseq
        %v2363 = vshrl.u32 %v2362, 7
        %v2364 = vsub.s32 7, %v2363
        %v2365 = vrot.slane %v2009, %v2364
        %v2366 = vlaneseq
        %v2367 = vshrl.u32 %v2366, 7
        %v2368 = vsub.s32 7, %v2367
        %v2369 = vrot.slane %v2010, %v2368
        %v2370 = vlaneseq
        %v2371 = vshrl.u32 %v2370, 7
        %v2372 = vsub.s32 7, %v2371
        %v2373 = vrot.slane %v2011, %v2372
        %v2374 = vlaneseq
        %v2375 = vshrl.u32 %v2374, 7
        %v2376 = vsub.s32 7, %v2375
        %v2377 = vrot.slane %v2012, %v2376
        %v2378 = vmul.f32 %v2358, %v2365
        %v2379 = vmul.f32 %v2356, %v2369
        %v2380 = vmul.f32 %v2354, %v2373
        %v2381 = vmul.f32 %v2360, %v2377
        %v2382 = vmul.f32 %v2359, %v2365
        %v2383 = vmul.f32 %v2357, %v2369
        %v2384 = vmul.f32 %v2355, %v2373
        %v2385 = vmul.f32 %v2361, %v2377
        %2386 = vrot.lane.b32.xlu0 %v439, 94
        %v2387 = vpop.permute.xlu0 %2386
        %2388 = vrot.lane.b32.xlu0 %v443, 94
        %v2389 = vpop.permute.xlu0 %2388
        %2390 = vrot.lane.b32.xlu0 %v440, 94
        %v2391 = vpop.permute.xlu0 %2390
        %2392 = vrot.lane.b32.xlu0 %v444, 94
        %v2393 = vpop.permute.xlu0 %2392
        %2394 = vrot.lane.b32.xlu0 %v441, 94
        %v2395 = vpop.permute.xlu0 %2394
        %2396 = vrot.lane.b32.xlu0 %v445, 94
        %v2397 = vpop.permute.xlu0 %2396
        %2398 = vrot.lane.b32.xlu0 %v442, 94
        %v2399 = vpop.permute.xlu0 %2398
        %2400 = vrot.lane.b32.xlu0 %v446, 94
        %v2401 = vpop.permute.xlu0 %2400
        %vm2402 = vcmp.lt.s32.totalorder %v2034, 94
        %v2403 = vsel %vm2402, %v2395, %v2399
        %v2404 = vsel %vm2402, %v2397, %v2401
        %v2405 = vsel %vm2402, %v2391, %v2395
        %v2406 = vsel %vm2402, %v2393, %v2397
        %v2407 = vsel %vm2402, %v2387, %v2391
        %v2408 = vsel %vm2402, %v2389, %v2393
        %v2409 = vsel %vm2402, %v2399, %v2387
        %v2410 = vsel %vm2402, %v2401, %v2389
        %v2411 = vlaneseq
        %v2412 = vshrl.u32 %v2411, 7
        %v2413 = vsub.s32 0, %v2412
        %v2414 = vrot.slane %v2013, %v2413
        %v2415 = vlaneseq
        %v2416 = vshrl.u32 %v2415, 7
        %v2417 = vsub.s32 0, %v2416
        %v2418 = vrot.slane %v2014, %v2417
        %v2419 = vlaneseq
        %v2420 = vshrl.u32 %v2419, 7
        %v2421 = vsub.s32 0, %v2420
        %v2422 = vrot.slane %v2015, %v2421
        %v2423 = vlaneseq
        %v2424 = vshrl.u32 %v2423, 7
        %v2425 = vsub.s32 0, %v2424
        %v2426 = vrot.slane %v2016, %v2425
        %v2427 = vmul.f32 %v2407, %v2414
        %v2428 = vmul.f32 %v2405, %v2418
        %v2429 = vmul.f32 %v2403, %v2422
        %v2430 = vmul.f32 %v2409, %v2426
        %v2431 = vmul.f32 %v2408, %v2414
        %v2432 = vmul.f32 %v2406, %v2418
        %v2433 = vmul.f32 %v2404, %v2422
        %v2434 = vmul.f32 %v2410, %v2426
        %v2435 = vld [vmem:[%s3] sm:$0xff]
        %v2436 = vld [vmem:[%s3 + $0x8] sm:$0xff]
        %v2437 = vld [vmem:[%s3 + $0x10] sm:$0xff]
        %v2438 = vld [vmem:[%s3 + $0x18] sm:$0xff]
        %v2439 = vld [vmem:[%s4] sm:$0xff]
        %v2440 = vld [vmem:[%s4 + $0x8] sm:$0xff]
        %2442 = vset.pattern.permute.xlu0 0
        %2443 = vperm.xlu0 %2442, %v2439
        %v2444 = vpop.permute.xlu0 %2443
        %2447 = vset.pattern.permute.xlu0 0
        %2448 = vperm.xlu0 %2447, %v2440
        %v2449 = vpop.permute.xlu0 %2448
        %v2452 = vsel %vm675, %v2436, 0
        %v2455 = vsel %vm675, %v2438, 0
        %2457 = vmatprep.subr.mxu0 %v2061
        %2458 = vmatpush1.msra.mxu0 %v2060
        %2459 = vmatprep.subr.mxu0 %v2065
        %2460 = vmatpush1.msra.mxu0 %v2064
        %2461 = vmatprep.subr.mxu0 %v2110
        %2462 = vmatpush1.msra.mxu0 %v2109
        %2463 = vmatprep.subr.mxu0 %v2114
        %2464 = vmatpush1.msra.mxu0 %v2113
        %2465 = vmatprep.subr.mxu0 %v2159
        %2466 = vmatpush1.msra.mxu0 %v2158
        %2467 = vmatprep.subr.mxu0 %v2163
        %2468 = vmatpush1.msra.mxu0 %v2162
        %2469 = vmatprep.subr.mxu0 %v2208
        %2470 = vmatpush1.msra.mxu0 %v2207
        %2471 = vmatprep.subr.mxu0 %v2212
        %2472 = vmatpush1.msra.mxu0 %v2211
        %2473 = vmatprep.subr.mxu0 %v2232
        %2474 = vmatpush1.msra.mxu0 %v2231
        %2475 = vmatprep.subr.mxu0 %v2236
        %2476 = vmatpush1.msra.mxu0 %v2235
        %2477 = vmatprep.subr.mxu0 %v2281
        %2478 = vmatpush1.msra.mxu0 %v2280
        %2479 = vmatprep.subr.mxu0 %v2285
        %2480 = vmatpush1.msra.mxu0 %v2284
        %2481 = vmatprep.subr.mxu0 %v2330
        %2482 = vmatpush1.msra.mxu0 %v2329
        %2483 = vmatprep.subr.mxu0 %v2334
        %2484 = vmatpush1.msra.mxu0 %v2333
        %2485 = vmatprep.subr.mxu0 %v2379
        %2486 = vmatpush1.msra.mxu0 %v2378
        %2487 = vmatprep.subr.mxu0 %v2383
        %2488 = vmatpush1.msra.mxu0 %v2382
        %2489 = vmatprep.subr.mxu0 %v2428
        %2490 = vmatpush1.msra.mxu0 %v2427
        %2491 = vmatprep.subr.mxu0 %v2432
        %2492 = vmatpush1.msra.mxu0 %v2431
        %2493 = vmatprep.subr.mxu0 0.0
        %2494 = vmatpush1.msra.mxu0 0.0
        %2495 = vmatprep.subr.mxu0 0.0
        %2496 = vmatpush1.msra.mxu0 0.0
        %2497 = vmatprep.subr.mxu0 0.0
        %2498 = vmatpush1.msra.mxu0 0.0
        %2499 = vmatprep.subr.mxu0 0.0
        %2500 = vmatpush1.msra.mxu0 0.0
        %2501 = vmatprep.subr.mxu0 0.0
        %2502 = vmatpush1.msra.mxu0 0.0
        %2503 = vmatprep.subr.mxu0 0.0
        %2504 = vmatpush1.msra.mxu0 0.0
        %2505 = vmatprep.subr.mxu0 0.0
        %2506 = vmatpush1.msra.mxu0 0.0
        %2507 = vmatprep.subr.mxu0 0.0
        %2508 = vmatpush1.msra.mxu0 0.0
        %2509 = vmatprep.subr.mxu0 0.0
        %2510 = vmatpush1.msra.mxu0 0.0
        %2511 = vmatprep.subr.mxu0 0.0
        %2512 = vmatpush1.msra.mxu0 0.0
        %2513 = vmatprep.subr.mxu0 0.0
        %2514 = vmatpush1.msra.mxu0 0.0
        %2515 = vmatprep.subr.mxu0 0.0
        %2516 = vmatpush1.msra.mxu0 0.0
        %2517 = vmatprep.subr.mxu0 0.0
        %2518 = vmatpush1.msra.mxu0 0.0
        %2519 = vmatprep.subr.mxu0 0.0
        %2520 = vmatpush1.msra.mxu0 0.0
        %2521 = vmatprep.mubr.f32.mxu0 %v2452
        %2522 = vmatmul.mubr.f32.gmra.mrb[0].mxu0 %v2435
        %v2523 = vpop.f32.mrb[0].mxu0
        %v2524 = vadd.f32 %v2444, %v2523
        %v2525 = vpop.f32.mrb[0].mxu0
        %v2526 = vadd.f32 %v2444, %v2525
        %2527 = vmatprep.mubr.f32.mxu0 %v2455
        %2528 = vmatmul.mubr.f32.gmra.mrb[0].mxu0 %v2437
        %v2529 = vpop.f32.mrb[0].mxu0
        %v2530 = vadd.f32 %v2449, %v2529
        %v2531 = vpop.f32.mrb[0].mxu0
        %v2532 = vadd.f32 %v2449, %v2531
        %2533 = vdwg.mxu0
        %2534 = vmatprep.subr.mxu0 %v2063
        %2535 = vmatpush1.msra.mxu0 %v2062
        %2536 = vmatprep.subr.mxu0 %v2067
        %2537 = vmatpush1.msra.mxu0 %v2066
        %2538 = vmatprep.subr.mxu0 %v2112
        %2539 = vmatpush1.msra.mxu0 %v2111
        %2540 = vmatprep.subr.mxu0 %v2116
        %2541 = vmatpush1.msra.mxu0 %v2115
        %2542 = vmatprep.subr.mxu0 %v2161
        %2543 = vmatpush1.msra.mxu0 %v2160
        %2544 = vmatprep.subr.mxu0 %v2165
        %2545 = vmatpush1.msra.mxu0 %v2164
        %2546 = vmatprep.subr.mxu0 %v2210
        %2547 = vmatpush1.msra.mxu0 %v2209
        %2548 = vmatprep.subr.mxu0 %v2214
        %2549 = vmatpush1.msra.mxu0 %v2213
        %2550 = vmatprep.subr.mxu0 %v2234
        %2551 = vmatpush1.msra.mxu0 %v2233
        %2552 = vmatprep.subr.mxu0 %v2238
        %2553 = vmatpush1.msra.mxu0 %v2237
        %2554 = vmatprep.subr.mxu0 %v2283
        %2555 = vmatpush1.msra.mxu0 %v2282
        %2556 = vmatprep.subr.mxu0 %v2287
        %2557 = vmatpush1.msra.mxu0 %v2286
        %2558 = vmatprep.subr.mxu0 %v2332
        %2559 = vmatpush1.msra.mxu0 %v2331
        %2560 = vmatprep.subr.mxu0 %v2336
        %2561 = vmatpush1.msra.mxu0 %v2335
        %2562 = vmatprep.subr.mxu0 %v2381
        %2563 = vmatpush1.msra.mxu0 %v2380
        %2564 = vmatprep.subr.mxu0 %v2385
        %2565 = vmatpush1.msra.mxu0 %v2384
        %2566 = vmatprep.subr.mxu0 %v2430
        %2567 = vmatpush1.msra.mxu0 %v2429
        %2568 = vmatprep.subr.mxu0 %v2434
        %2569 = vmatpush1.msra.mxu0 %v2433
        %2570 = vmatprep.subr.mxu0 0.0
        %2571 = vmatpush1.msra.mxu0 0.0
        %2572 = vmatprep.subr.mxu0 0.0
        %2573 = vmatpush1.msra.mxu0 0.0
        %2574 = vmatprep.subr.mxu0 0.0
        %2575 = vmatpush1.msra.mxu0 0.0
        %2576 = vmatprep.subr.mxu0 0.0
        %2577 = vmatpush1.msra.mxu0 0.0
        %2578 = vmatprep.subr.mxu0 0.0
        %2579 = vmatpush1.msra.mxu0 0.0
        %2580 = vmatprep.subr.mxu0 0.0
        %2581 = vmatpush1.msra.mxu0 0.0
        %2582 = vmatprep.subr.mxu0 0.0
        %2583 = vmatpush1.msra.mxu0 0.0
        %2584 = vmatprep.subr.mxu0 0.0
        %2585 = vmatpush1.msra.mxu0 0.0
        %2586 = vmatprep.subr.mxu0 0.0
        %2587 = vmatpush1.msra.mxu0 0.0
        %2588 = vmatprep.subr.mxu0 0.0
        %2589 = vmatpush1.msra.mxu0 0.0
        %2590 = vmatprep.subr.mxu0 0.0
        %2591 = vmatpush1.msra.mxu0 0.0
        %2592 = vmatprep.subr.mxu0 0.0
        %2593 = vmatpush1.msra.mxu0 0.0
        %2594 = vmatprep.subr.mxu0 0.0
        %2595 = vmatpush1.msra.mxu0 0.0
        %2596 = vmatprep.subr.mxu0 0.0
        %2597 = vmatpush1.msra.mxu0 0.0
        %2598 = vmatprep.mubr.f32.mxu0 %v2452
        %2599 = vmatmul.mubr.f32.gmra.mrb[0].mxu0 %v2435
        %v2600 = vpop.f32.mrb[0].mxu0
        %v2601 = vadd.f32 %v2444, %v2600
        %v2602 = vpop.f32.mrb[0].mxu0
        %v2603 = vadd.f32 %v2444, %v2602
        %2604 = vmatprep.mubr.f32.mxu0 %v2455
        %2605 = vmatmul.mubr.f32.gmra.mrb[0].mxu0 %v2437
        %v2606 = vpop.f32.mrb[0].mxu0
        %v2607 = vadd.f32 %v2449, %v2606
        %v2608 = vpop.f32.mrb[0].mxu0
        %v2609 = vadd.f32 %v2449, %v2608
        %2610 = vdwg.mxu0
        %2611 = vmatprep.subr.mxu0 0.0
        %2612 = vmatpush1.msra.mxu0 %v1224
        %2613 = vmatprep.subr.mxu0 0.0
        %2614 = vmatpush1.msra.mxu0 %v1225
        %2615 = vmatprep.subr.mxu0 0.0
        %2616 = vmatpush1.msra.mxu0 %v1226
        %2617 = vmatprep.subr.mxu0 0.0
        %2618 = vmatpush1.msra.mxu0 %v1227
        %2619 = vmatprep.subr.mxu0 0.0
        %2620 = vmatpush1.msra.mxu0 %v1228
        %2621 = vmatprep.subr.mxu0 0.0
        %2622 = vmatpush1.msra.mxu0 %v1229
        %2623 = vmatprep.subr.mxu0 0.0
        %2624 = vmatpush1.msra.mxu0 %v1230
        %2625 = vmatprep.subr.mxu0 0.0
        %2626 = vmatpush1.msra.mxu0 %v1231
        %2627 = vmatprep.subr.mxu0 0.0
        %2628 = vmatpush1.msra.mxu0 %v1232
        %2629 = vmatprep.subr.mxu0 0.0
        %2630 = vmatpush1.msra.mxu0 %v1233
        %2631 = vmatprep.subr.mxu0 0.0
        %2632 = vmatpush1.msra.mxu0 %v1234
        %2633 = vmatprep.subr.mxu0 0.0
        %2634 = vmatpush1.msra.mxu0 %v1235
        %2635 = vmatprep.subr.mxu0 0.0
        %2636 = vmatpush1.msra.mxu0 %v1236
        %2637 = vmatprep.subr.mxu0 0.0
        %2638 = vmatpush1.msra.mxu0 %v1237
        %2639 = vmatprep.subr.mxu0 0.0
        %2640 = vmatpush1.msra.mxu0 %v1238
        %2641 = vmatprep.subr.mxu0 0.0
        %2642 = vmatpush1.msra.mxu0 %v1239
        %2643 = vmatprep.subr.mxu0 0.0
        %2644 = vmatpush1.msra.mxu0 %v1240
        %2645 = vmatprep.subr.mxu0 0.0
        %2646 = vmatpush1.msra.mxu0 %v1241
        %2647 = vmatprep.subr.mxu0 0.0
        %2648 = vmatpush1.msra.mxu0 %v1242
        %2649 = vmatprep.subr.mxu0 0.0
        %2650 = vmatpush1.msra.mxu0 %v1243
        %2651 = vmatprep.subr.mxu0 0.0
        %2652 = vmatpush1.msra.mxu0 %v1244
        %2653 = vmatprep.subr.mxu0 0.0
        %2654 = vmatpush1.msra.mxu0 %v1245
        %2655 = vmatprep.subr.mxu0 0.0
        %2656 = vmatpush1.msra.mxu0 %v1246
        %2657 = vmatprep.subr.mxu0 0.0
        %2658 = vmatpush1.msra.mxu0 %v1247
        %2659 = vmatprep.subr.mxu0 0.0
        %2660 = vmatpush1.msra.mxu0 %v1248
        %2661 = vmatprep.subr.mxu0 0.0
        %2662 = vmatpush1.msra.mxu0 %v1249
        %2663 = vmatprep.subr.mxu0 0.0
        %2664 = vmatpush1.msra.mxu0 %v1250
        %2665 = vmatprep.subr.mxu0 0.0
        %2666 = vmatpush1.msra.mxu0 %v1251
        %2667 = vmatprep.subr.mxu0 0.0
        %2668 = vmatpush1.msra.mxu0 %v1252
        %2669 = vmatprep.subr.mxu0 0.0
        %2670 = vmatpush1.msra.mxu0 %v1253
        %2671 = vmatprep.subr.mxu0 0.0
        %2672 = vmatpush1.msra.mxu0 %v1254
        %2673 = vmatprep.subr.mxu0 0.0
        %2674 = vmatpush1.msra.mxu0 %v1255
        %2675 = vmatprep.mubr.f32.mxu0 %v2002
        %2676 = vmatmul.mubr.f32.gmra.mrb[0].mxu0 %v2001
        %v2677 = vpop.f32.mrb[0].mxu0
        %v2678 = vadd.f32 0.0, %v2677
        %v2679 = vpop.f32.mrb[0].mxu0
        %2680 = vmatprep.mubr.f32.mxu0 %v2006
        %2681 = vmatmul.mubr.f32.gmra.mrb[0].mxu0 %v2005
        %v2682 = vpop.f32.mrb[0].mxu0
        %v2683 = vadd.f32 0.0, %v2682
        %v2684 = vpop.f32.mrb[0].mxu0
        %2685 = vdwg.mxu0
        %2686 = vmatprep.subr.mxu0 0.0
        %2687 = vmatpush1.msra.mxu0 %v1256
        %2688 = vmatprep.subr.mxu0 0.0
        %2689 = vmatpush1.msra.mxu0 %v1257
        %2690 = vmatprep.subr.mxu0 0.0
        %2691 = vmatpush1.msra.mxu0 %v1258
        %2692 = vmatprep.subr.mxu0 0.0
        %2693 = vmatpush1.msra.mxu0 %v1259
        %2694 = vmatprep.subr.mxu0 0.0
        %2695 = vmatpush1.msra.mxu0 %v1260
        %2696 = vmatprep.subr.mxu0 0.0
        %2697 = vmatpush1.msra.mxu0 %v1261
        %2698 = vmatprep.subr.mxu0 0.0
        %2699 = vmatpush1.msra.mxu0 %v1262
        %2700 = vmatprep.subr.mxu0 0.0
        %2701 = vmatpush1.msra.mxu0 %v1263
        %2702 = vmatprep.subr.mxu0 0.0
        %2703 = vmatpush1.msra.mxu0 %v1264
        %2704 = vmatprep.subr.mxu0 0.0
        %2705 = vmatpush1.msra.mxu0 %v1265
        %2706 = vmatprep.subr.mxu0 0.0
        %2707 = vmatpush1.msra.mxu0 %v1266
        %2708 = vmatprep.subr.mxu0 0.0
        %2709 = vmatpush1.msra.mxu0 %v1267
        %2710 = vmatprep.subr.mxu0 0.0
        %2711 = vmatpush1.msra.mxu0 %v1268
        %2712 = vmatprep.subr.mxu0 0.0
        %2713 = vmatpush1.msra.mxu0 %v1269
        %2714 = vmatprep.subr.mxu0 0.0
        %2715 = vmatpush1.msra.mxu0 %v1270
        %2716 = vmatprep.subr.mxu0 0.0
        %2717 = vmatpush1.msra.mxu0 %v1271
        %2718 = vmatprep.subr.mxu0 0.0
        %2719 = vmatpush1.msra.mxu0 %v1272
        %2720 = vmatprep.subr.mxu0 0.0
        %2721 = vmatpush1.msra.mxu0 %v1273
        %2722 = vmatprep.subr.mxu0 0.0
        %2723 = vmatpush1.msra.mxu0 %v1274
        %2724 = vmatprep.subr.mxu0 0.0
        %2725 = vmatpush1.msra.mxu0 %v1275
        %2726 = vmatprep.subr.mxu0 0.0
        %2727 = vmatpush1.msra.mxu0 %v1276
        %2728 = vmatprep.subr.mxu0 0.0
        %2729 = vmatpush1.msra.mxu0 %v1277
        %2730 = vmatprep.subr.mxu0 0.0
        %2731 = vmatpush1.msra.mxu0 %v1278
        %2732 = vmatprep.subr.mxu0 0.0
        %2733 = vmatpush1.msra.mxu0 %v1279
        %2734 = vmatprep.subr.mxu0 0.0
        %2735 = vmatpush1.msra.mxu0 %v1280
        %2736 = vmatprep.subr.mxu0 0.0
        %2737 = vmatpush1.msra.mxu0 %v1281
        %2738 = vmatprep.subr.mxu0 0.0
        %2739 = vmatpush1.msra.mxu0 %v1282
        %2740 = vmatprep.subr.mxu0 0.0
        %2741 = vmatpush1.msra.mxu0 %v1283
        %2742 = vmatprep.subr.mxu0 0.0
        %2743 = vmatpush1.msra.mxu0 %v1284
        %2744 = vmatprep.subr.mxu0 0.0
        %2745 = vmatpush1.msra.mxu0 %v1285
        %2746 = vmatprep.subr.mxu0 0.0
        %2747 = vmatpush1.msra.mxu0 %v1286
        %2748 = vmatprep.subr.mxu0 0.0
        %2749 = vmatpush1.msra.mxu0 %v1287
        %2750 = vmatprep.mubr.f32.mxu0 %v2004
        %2751 = vmatmul.mubr.f32.gmra.mrb[0].mxu0 %v2003
        %v2752 = vpop.f32.mrb[0].mxu0
        %v2753 = vadd.f32 %v2678, %v2752
        %v2754 = vpop.f32.mrb[0].mxu0
        %2755 = vmatprep.mubr.f32.mxu0 %v2008
        %2756 = vmatmul.mubr.f32.gmra.mrb[0].mxu0 %v2007
        %v2757 = vpop.f32.mrb[0].mxu0
        %v2758 = vadd.f32 %v2683, %v2757
        %v2759 = vpop.f32.mrb[0].mxu0
        %2760 = vdwg.mxu0
        %2761 = vmatprep.subr.mxu0 0.0
        %2762 = vmatpush1.msra.mxu0 %v1224
        %2763 = vmatprep.subr.mxu0 0.0
        %2764 = vmatpush1.msra.mxu0 %v1225
        %2765 = vmatprep.subr.mxu0 0.0
        %2766 = vmatpush1.msra.mxu0 %v1226
        %2767 = vmatprep.subr.mxu0 0.0
        %2768 = vmatpush1.msra.mxu0 %v1227
        %2769 = vmatprep.subr.mxu0 0.0
        %2770 = vmatpush1.msra.mxu0 %v1228
        %2771 = vmatprep.subr.mxu0 0.0
        %2772 = vmatpush1.msra.mxu0 %v1229
        %2773 = vmatprep.subr.mxu0 0.0
        %2774 = vmatpush1.msra.mxu0 %v1230
        %2775 = vmatprep.subr.mxu0 0.0
        %2776 = vmatpush1.msra.mxu0 %v1231
        %2777 = vmatprep.subr.mxu0 0.0
        %2778 = vmatpush1.msra.mxu0 %v1232
        %2779 = vmatprep.subr.mxu0 0.0
        %2780 = vmatpush1.msra.mxu0 %v1233
        %2781 = vmatprep.subr.mxu0 0.0
        %2782 = vmatpush1.msra.mxu0 %v1234
        %2783 = vmatprep.subr.mxu0 0.0
        %2784 = vmatpush1.msra.mxu0 %v1235
        %2785 = vmatprep.subr.mxu0 0.0
        %2786 = vmatpush1.msra.mxu0 %v1236
        %2787 = vmatprep.subr.mxu0 0.0
        %2788 = vmatpush1.msra.mxu0 %v1237
        %2789 = vmatprep.subr.mxu0 0.0
        %2790 = vmatpush1.msra.mxu0 %v1238
        %2791 = vmatprep.subr.mxu0 0.0
        %2792 = vmatpush1.msra.mxu0 %v1239
        %2793 = vmatprep.subr.mxu0 0.0
        %2794 = vmatpush1.msra.mxu0 %v1240
        %2795 = vmatprep.subr.mxu0 0.0
        %2796 = vmatpush1.msra.mxu0 %v1241
        %2797 = vmatprep.subr.mxu0 0.0
        %2798 = vmatpush1.msra.mxu0 %v1242
        %2799 = vmatprep.subr.mxu0 0.0
        %2800 = vmatpush1.msra.mxu0 %v1243
        %2801 = vmatprep.subr.mxu0 0.0
        %2802 = vmatpush1.msra.mxu0 %v1244
        %2803 = vmatprep.subr.mxu0 0.0
        %2804 = vmatpush1.msra.mxu0 %v1245
        %2805 = vmatprep.subr.mxu0 0.0
        %2806 = vmatpush1.msra.mxu0 %v1246
        %2807 = vmatprep.subr.mxu0 0.0
        %2808 = vmatpush1.msra.mxu0 %v1247
        %2809 = vmatprep.subr.mxu0 0.0
        %2810 = vmatpush1.msra.mxu0 %v1248
        %2811 = vmatprep.subr.mxu0 0.0
        %2812 = vmatpush1.msra.mxu0 %v1249
        %2813 = vmatprep.subr.mxu0 0.0
        %2814 = vmatpush1.msra.mxu0 %v1250
        %2815 = vmatprep.subr.mxu0 0.0
        %2816 = vmatpush1.msra.mxu0 %v1251
        %2817 = vmatprep.subr.mxu0 0.0
        %2818 = vmatpush1.msra.mxu0 %v1252
        %2819 = vmatprep.subr.mxu0 0.0
        %2820 = vmatpush1.msra.mxu0 %v1253
        %2821 = vmatprep.subr.mxu0 0.0
        %2822 = vmatpush1.msra.mxu0 %v1254
        %2823 = vmatprep.subr.mxu0 0.0
        %2824 = vmatpush1.msra.mxu0 %v1255
        %2825 = vmatprep.mubr.f32.mxu0 %v2526
        %2826 = vmatmul.mubr.f32.gmra.mrb[0].mxu0 %v2524
        %v2827 = vpop.f32.mrb[0].mxu0
        %v2828 = vadd.f32 0.0, %v2827
        %v2829 = vpop.f32.mrb[0].mxu0
        %2830 = vmatprep.mubr.f32.mxu0 %v2532
        %2831 = vmatmul.mubr.f32.gmra.mrb[0].mxu0 %v2530
        %v2832 = vpop.f32.mrb[0].mxu0
        %v2833 = vadd.f32 0.0, %v2832
        %v2834 = vpop.f32.mrb[0].mxu0
        %2835 = vdwg.mxu0
        %2836 = vmatprep.subr.mxu0 0.0
        %2837 = vmatpush1.msra.mxu0 %v1256
        %2838 = vmatprep.subr.mxu0 0.0
        %2839 = vmatpush1.msra.mxu0 %v1257
        %2840 = vmatprep.subr.mxu0 0.0
        %2841 = vmatpush1.msra.mxu0 %v1258
        %2842 = vmatprep.subr.mxu0 0.0
        %2843 = vmatpush1.msra.mxu0 %v1259
        %2844 = vmatprep.subr.mxu0 0.0
        %2845 = vmatpush1.msra.mxu0 %v1260
        %2846 = vmatprep.subr.mxu0 0.0
        %2847 = vmatpush1.msra.mxu0 %v1261
        %2848 = vmatprep.subr.mxu0 0.0
        %2849 = vmatpush1.msra.mxu0 %v1262
        %2850 = vmatprep.subr.mxu0 0.0
        %2851 = vmatpush1.msra.mxu0 %v1263
        %2852 = vmatprep.subr.mxu0 0.0
        %2853 = vmatpush1.msra.mxu0 %v1264
        %2854 = vmatprep.subr.mxu0 0.0
        %2855 = vmatpush1.msra.mxu0 %v1265
        %2856 = vmatprep.subr.mxu0 0.0
        %2857 = vmatpush1.msra.mxu0 %v1266
        %2858 = vmatprep.subr.mxu0 0.0
        %2859 = vmatpush1.msra.mxu0 %v1267
        %2860 = vmatprep.subr.mxu0 0.0
        %2861 = vmatpush1.msra.mxu0 %v1268
        %2862 = vmatprep.subr.mxu0 0.0
        %2863 = vmatpush1.msra.mxu0 %v1269
        %2864 = vmatprep.subr.mxu0 0.0
        %2865 = vmatpush1.msra.mxu0 %v1270
        %2866 = vmatprep.subr.mxu0 0.0
        %2867 = vmatpush1.msra.mxu0 %v1271
        %2868 = vmatprep.subr.mxu0 0.0
        %2869 = vmatpush1.msra.mxu0 %v1272
        %2870 = vmatprep.subr.mxu0 0.0
        %2871 = vmatpush1.msra.mxu0 %v1273
        %2872 = vmatprep.subr.mxu0 0.0
        %2873 = vmatpush1.msra.mxu0 %v1274
        %2874 = vmatprep.subr.mxu0 0.0
        %2875 = vmatpush1.msra.mxu0 %v1275
        %2876 = vmatprep.subr.mxu0 0.0
        %2877 = vmatpush1.msra.mxu0 %v1276
        %2878 = vmatprep.subr.mxu0 0.0
        %2879 = vmatpush1.msra.mxu0 %v1277
        %2880 = vmatprep.subr.mxu0 0.0
        %2881 = vmatpush1.msra.mxu0 %v1278
        %2882 = vmatprep.subr.mxu0 0.0
        %2883 = vmatpush1.msra.mxu0 %v1279
        %2884 = vmatprep.subr.mxu0 0.0
        %2885 = vmatpush1.msra.mxu0 %v1280
        %2886 = vmatprep.subr.mxu0 0.0
        %2887 = vmatpush1.msra.mxu0 %v1281
        %2888 = vmatprep.subr.mxu0 0.0
        %2889 = vmatpush1.msra.mxu0 %v1282
        %2890 = vmatprep.subr.mxu0 0.0
        %2891 = vmatpush1.msra.mxu0 %v1283
        %2892 = vmatprep.subr.mxu0 0.0
        %2893 = vmatpush1.msra.mxu0 %v1284
        %2894 = vmatprep.subr.mxu0 0.0
        %2895 = vmatpush1.msra.mxu0 %v1285
        %2896 = vmatprep.subr.mxu0 0.0
        %2897 = vmatpush1.msra.mxu0 %v1286
        %2898 = vmatprep.subr.mxu0 0.0
        %2899 = vmatpush1.msra.mxu0 %v1287
        %2900 = vmatprep.mubr.f32.mxu0 %v2603
        %2901 = vmatmul.mubr.f32.gmra.mrb[0].mxu0 %v2601
        %v2902 = vpop.f32.mrb[0].mxu0
        %v2903 = vadd.f32 %v2828, %v2902
        %v2904 = vpop.f32.mrb[0].mxu0
        %2905 = vmatprep.mubr.f32.mxu0 %v2609
        %2906 = vmatmul.mubr.f32.gmra.mrb[0].mxu0 %v2607
        %v2907 = vpop.f32.mrb[0].mxu0
        %v2908 = vadd.f32 %v2833, %v2907
        %v2909 = vpop.f32.mrb[0].mxu0
        %2910 = vdwg.mxu0
        %v2911 = vsel %vm1457, %v2753, -inf
        %v2912 = vsel %vm1457, %v2758, -inf
        %v2913 = vmax.f32 %v2911, %v2912
        %v2914 = vrot.slane %v2913, 4
        %v2915 = vmax.f32 %v2913, %v2914
        %v2916 = vrot.slane %v2915, 2
        %v2917 = vmax.f32 %v2915, %v2916
        %v2918 = vrot.slane %v2917, 1
        %v2919 = vmax.f32 %v2917, %v2918
        %v2920 = vsub.f32 %v2753, %v2919
        %v2921 = vsub.f32 %v2758, %v2919
        %v2922 = vmul.f32 %v2920, 1.442695
        %v2923 = vpow.pop %v2922
        %v2924 = vmul.f32 %v2921, 1.442695
        %v2925 = vpow.pop %v2924
        %v2926 = vsel %vm1457, %v2923, 0.0
        %v2927 = vsel %vm1457, %v2925, 0.0
        %v2928 = vadd.f32 %v2926, %v2927
        %v2929 = vrot.slane %v2928, 4
        %v2930 = vadd.f32 %v2928, %v2929
        %v2931 = vrot.slane %v2930, 2
        %v2932 = vadd.f32 %v2930, %v2931
        %v2933 = vrot.slane %v2932, 1
        %v2934 = vadd.f32 %v2932, %v2933
        %v2935 = vrcp.pop %v2934
        %v2936 = vmul.f32 %v2923, %v2935
        %v2937 = vmul.f32 %v2925, %v2935
        %v2938 = vsel %vm1457, %v2903, -inf
        %v2939 = vsel %vm1457, %v2908, -inf
        %v2940 = vmax.f32 %v2938, %v2939
        %v2941 = vrot.slane %v2940, 4
        %v2942 = vmax.f32 %v2940, %v2941
        %v2943 = vrot.slane %v2942, 2
        %v2944 = vmax.f32 %v2942, %v2943
        %v2945 = vrot.slane %v2944, 1
        %v2946 = vmax.f32 %v2944, %v2945
        %v2947 = vsub.f32 %v2903, %v2946
        %v2948 = vsub.f32 %v2908, %v2946
        %v2949 = vmul.f32 %v2947, 1.442695
        %v2950 = vpow.pop %v2949
        %v2951 = vmul.f32 %v2948, 1.442695
        %v2952 = vpow.pop %v2951
        %v2953 = vsel %vm1457, %v2950, 0.0
        %v2954 = vsel %vm1457, %v2952, 0.0
        %v2955 = vadd.f32 %v2953, %v2954
        %v2956 = vrot.slane %v2955, 4
        %v2957 = vadd.f32 %v2955, %v2956
        %v2958 = vrot.slane %v2957, 2
        %v2959 = vadd.f32 %v2957, %v2958
        %v2960 = vrot.slane %v2959, 1
        %v2961 = vadd.f32 %v2959, %v2960
        %v2962 = vrcp.pop %v2961
        %v2963 = vmul.f32 %v2950, %v2962
        %v2964 = vmul.f32 %v2952, %v2962
        %v2966 = vsel %vm1457, %v2936, 0
        %v2969 = vsel %vm1457, %v2937, 0
        %2971 = vmatprep.subr.mxu0 %v1467
        %2972 = vmatpush1.msra.mxu0 %v1465
        %2973 = vmatprep.subr.mxu0 0.0
        %2974 = vmatpush1.msra.mxu0 0.0
        %2975 = vmatprep.subr.mxu0 0.0
        %2976 = vmatpush1.msra.mxu0 0.0
        %2977 = vmatprep.subr.mxu0 0.0
        %2978 = vmatpush1.msra.mxu0 0.0
        %2979 = vmatprep.subr.mxu0 0.0
        %2980 = vmatpush1.msra.mxu0 0.0
        %2981 = vmatprep.subr.mxu0 0.0
        %2982 = vmatpush1.msra.mxu0 0.0
        %2983 = vmatprep.subr.mxu0 0.0
        %2984 = vmatpush1.msra.mxu0 0.0
        %2985 = vmatprep.subr.mxu0 0.0
        %2986 = vmatpush1.msra.mxu0 0.0
        %2987 = vmatprep.subr.mxu0 0.0
        %2988 = vmatpush1.msra.mxu0 0.0
        %2989 = vmatprep.subr.mxu0 0.0
        %2990 = vmatpush1.msra.mxu0 0.0
        %2991 = vmatprep.subr.mxu0 0.0
        %2992 = vmatpush1.msra.mxu0 0.0
        %2993 = vmatprep.subr.mxu0 0.0
        %2994 = vmatpush1.msra.mxu0 0.0
        %2995 = vmatprep.subr.mxu0 0.0
        %2996 = vmatpush1.msra.mxu0 0.0
        %2997 = vmatprep.subr.mxu0 0.0
        %2998 = vmatpush1.msra.mxu0 0.0
        %2999 = vmatprep.subr.mxu0 0.0
        %3000 = vmatpush1.msra.mxu0 0.0
        %3001 = vmatprep.subr.mxu0 0.0
        %3002 = vmatpush1.msra.mxu0 0.0
        %3003 = vmatprep.subr.mxu0 0.0
        %3004 = vmatpush1.msra.mxu0 0.0
        %3005 = vmatprep.subr.mxu0 0.0
        %3006 = vmatpush1.msra.mxu0 0.0
        %3007 = vmatprep.subr.mxu0 0.0
        %3008 = vmatpush1.msra.mxu0 0.0
        %3009 = vmatprep.subr.mxu0 0.0
        %3010 = vmatpush1.msra.mxu0 0.0
        %3011 = vmatprep.subr.mxu0 0.0
        %3012 = vmatpush1.msra.mxu0 0.0
        %3013 = vmatprep.subr.mxu0 0.0
        %3014 = vmatpush1.msra.mxu0 0.0
        %3015 = vmatprep.subr.mxu0 0.0
        %3016 = vmatpush1.msra.mxu0 0.0
        %3017 = vmatprep.subr.mxu0 0.0
        %3018 = vmatpush1.msra.mxu0 0.0
        %3019 = vmatprep.subr.mxu0 0.0
        %3020 = vmatpush1.msra.mxu0 0.0
        %3021 = vmatprep.subr.mxu0 0.0
        %3022 = vmatpush1.msra.mxu0 0.0
        %3023 = vmatprep.subr.mxu0 0.0
        %3024 = vmatpush1.msra.mxu0 0.0
        %3025 = vmatprep.subr.mxu0 0.0
        %3026 = vmatpush1.msra.mxu0 0.0
        %3027 = vmatprep.subr.mxu0 0.0
        %3028 = vmatpush1.msra.mxu0 0.0
        %3029 = vmatprep.subr.mxu0 0.0
        %3030 = vmatpush1.msra.mxu0 0.0
        %3031 = vmatprep.subr.mxu0 0.0
        %3032 = vmatpush1.msra.mxu0 0.0
        %3033 = vmatprep.subr.mxu0 0.0
        %3034 = vmatpush1.msra.mxu0 0.0
        %3035 = vmatprep.mubr.f32.mxu0 0.0
        %3036 = vmatmul.mubr.f32.gmra.mrb[0].mxu0 %v2966
        %v3037 = vpop.f32.mrb[0].mxu0
        %v3038 = vadd.f32 0.0, %v3037
        %v3039 = vpop.f32.mrb[0].mxu0
        %v3040 = vadd.f32 0.0, %v3039
        %3041 = vmatprep.mubr.f32.mxu0 0.0
        %3042 = vmatmul.mubr.f32.gmra.mrb[0].mxu0 %v2969
        %v3043 = vpop.f32.mrb[0].mxu0
        %v3044 = vadd.f32 0.0, %v3043
        %v3045 = vpop.f32.mrb[0].mxu0
        %v3046 = vadd.f32 0.0, %v3045
        %3047 = vdwg.mxu0
        %3048 = vmatprep.subr.mxu0 %v1471
        %3049 = vmatpush1.msra.mxu0 %v1469
        %3050 = vmatprep.subr.mxu0 0.0
        %3051 = vmatpush1.msra.mxu0 0.0
        %3052 = vmatprep.subr.mxu0 0.0
        %3053 = vmatpush1.msra.mxu0 0.0
        %3054 = vmatprep.subr.mxu0 0.0
        %3055 = vmatpush1.msra.mxu0 0.0
        %3056 = vmatprep.subr.mxu0 0.0
        %3057 = vmatpush1.msra.mxu0 0.0
        %3058 = vmatprep.subr.mxu0 0.0
        %3059 = vmatpush1.msra.mxu0 0.0
        %3060 = vmatprep.subr.mxu0 0.0
        %3061 = vmatpush1.msra.mxu0 0.0
        %3062 = vmatprep.subr.mxu0 0.0
        %3063 = vmatpush1.msra.mxu0 0.0
        %3064 = vmatprep.subr.mxu0 0.0
        %3065 = vmatpush1.msra.mxu0 0.0
        %3066 = vmatprep.subr.mxu0 0.0
        %3067 = vmatpush1.msra.mxu0 0.0
        %3068 = vmatprep.subr.mxu0 0.0
        %3069 = vmatpush1.msra.mxu0 0.0
        %3070 = vmatprep.subr.mxu0 0.0
        %3071 = vmatpush1.msra.mxu0 0.0
        %3072 = vmatprep.subr.mxu0 0.0
        %3073 = vmatpush1.msra.mxu0 0.0
        %3074 = vmatprep.subr.mxu0 0.0
        %3075 = vmatpush1.msra.mxu0 0.0
        %3076 = vmatprep.subr.mxu0 0.0
        %3077 = vmatpush1.msra.mxu0 0.0
        %3078 = vmatprep.subr.mxu0 0.0
        %3079 = vmatpush1.msra.mxu0 0.0
        %3080 = vmatprep.subr.mxu0 0.0
        %3081 = vmatpush1.msra.mxu0 0.0
        %3082 = vmatprep.subr.mxu0 0.0
        %3083 = vmatpush1.msra.mxu0 0.0
        %3084 = vmatprep.subr.mxu0 0.0
        %3085 = vmatpush1.msra.mxu0 0.0
        %3086 = vmatprep.subr.mxu0 0.0
        %3087 = vmatpush1.msra.mxu0 0.0
        %3088 = vmatprep.subr.mxu0 0.0
        %3089 = vmatpush1.msra.mxu0 0.0
        %3090 = vmatprep.subr.mxu0 0.0
        %3091 = vmatpush1.msra.mxu0 0.0
        %3092 = vmatprep.subr.mxu0 0.0
        %3093 = vmatpush1.msra.mxu0 0.0
        %3094 = vmatprep.subr.mxu0 0.0
        %3095 = vmatpush1.msra.mxu0 0.0
        %3096 = vmatprep.subr.mxu0 0.0
        %3097 = vmatpush1.msra.mxu0 0.0
        %3098 = vmatprep.subr.mxu0 0.0
        %3099 = vmatpush1.msra.mxu0 0.0
        %3100 = vmatprep.subr.mxu0 0.0
        %3101 = vmatpush1.msra.mxu0 0.0
        %3102 = vmatprep.subr.mxu0 0.0
        %3103 = vmatpush1.msra.mxu0 0.0
        %3104 = vmatprep.subr.mxu0 0.0
        %3105 = vmatpush1.msra.mxu0 0.0
        %3106 = vmatprep.subr.mxu0 0.0
        %3107 = vmatpush1.msra.mxu0 0.0
        %3108 = vmatprep.subr.mxu0 0.0
        %3109 = vmatpush1.msra.mxu0 0.0
        %3110 = vmatprep.subr.mxu0 0.0
        %3111 = vmatpush1.msra.mxu0 0.0
        %3112 = vmatprep.mubr.f32.mxu0 0.0
        %3113 = vmatmul.mubr.f32.gmra.mrb[0].mxu0 %v2966
        %v3114 = vpop.f32.mrb[0].mxu0
        %v3115 = vadd.f32 0.0, %v3114
        %v3116 = vpop.f32.mrb[0].mxu0
        %v3117 = vadd.f32 0.0, %v3116
        %3118 = vmatprep.mubr.f32.mxu0 0.0
        %3119 = vmatmul.mubr.f32.gmra.mrb[0].mxu0 %v2969
        %v3120 = vpop.f32.mrb[0].mxu0
        %v3121 = vadd.f32 0.0, %v3120
        %v3122 = vpop.f32.mrb[0].mxu0
        %v3123 = vadd.f32 0.0, %v3122
        %3124 = vdwg.mxu0
        %v3126 = vsel %vm1457, %v2963, 0
        %v3129 = vsel %vm1457, %v2964, 0
        %3131 = vmatprep.subr.mxu0 %v1467
        %3132 = vmatpush1.msra.mxu0 %v1465
        %3133 = vmatprep.subr.mxu0 0.0
        %3134 = vmatpush1.msra.mxu0 0.0
        %3135 = vmatprep.subr.mxu0 0.0
        %3136 = vmatpush1.msra.mxu0 0.0
        %3137 = vmatprep.subr.mxu0 0.0
        %3138 = vmatpush1.msra.mxu0 0.0
        %3139 = vmatprep.subr.mxu0 0.0
        %3140 = vmatpush1.msra.mxu0 0.0
        %3141 = vmatprep.subr.mxu0 0.0
        %3142 = vmatpush1.msra.mxu0 0.0
        %3143 = vmatprep.subr.mxu0 0.0
        %3144 = vmatpush1.msra.mxu0 0.0
        %3145 = vmatprep.subr.mxu0 0.0
        %3146 = vmatpush1.msra.mxu0 0.0
        %3147 = vmatprep.subr.mxu0 0.0
        %3148 = vmatpush1.msra.mxu0 0.0
        %3149 = vmatprep.subr.mxu0 0.0
        %3150 = vmatpush1.msra.mxu0 0.0
        %3151 = vmatprep.subr.mxu0 0.0
        %3152 = vmatpush1.msra.mxu0 0.0
        %3153 = vmatprep.subr.mxu0 0.0
        %3154 = vmatpush1.msra.mxu0 0.0
        %3155 = vmatprep.subr.mxu0 0.0
        %3156 = vmatpush1.msra.mxu0 0.0
        %3157 = vmatprep.subr.mxu0 0.0
        %3158 = vmatpush1.msra.mxu0 0.0
        %3159 = vmatprep.subr.mxu0 0.0
        %3160 = vmatpush1.msra.mxu0 0.0
        %3161 = vmatprep.subr.mxu0 0.0
        %3162 = vmatpush1.msra.mxu0 0.0
        %3163 = vmatprep.subr.mxu0 0.0
        %3164 = vmatpush1.msra.mxu0 0.0
        %3165 = vmatprep.subr.mxu0 0.0
        %3166 = vmatpush1.msra.mxu0 0.0
        %3167 = vmatprep.subr.mxu0 0.0
        %3168 = vmatpush1.msra.mxu0 0.0
        %3169 = vmatprep.subr.mxu0 0.0
        %3170 = vmatpush1.msra.mxu0 0.0
        %3171 = vmatprep.subr.mxu0 0.0
        %3172 = vmatpush1.msra.mxu0 0.0
        %3173 = vmatprep.subr.mxu0 0.0
        %3174 = vmatpush1.msra.mxu0 0.0
        %3175 = vmatprep.subr.mxu0 0.0
        %3176 = vmatpush1.msra.mxu0 0.0
        %3177 = vmatprep.subr.mxu0 0.0
        %3178 = vmatpush1.msra.mxu0 0.0
        %3179 = vmatprep.subr.mxu0 0.0
        %3180 = vmatpush1.msra.mxu0 0.0
        %3181 = vmatprep.subr.mxu0 0.0
        %3182 = vmatpush1.msra.mxu0 0.0
        %3183 = vmatprep.subr.mxu0 0.0
        %3184 = vmatpush1.msra.mxu0 0.0
        %3185 = vmatprep.subr.mxu0 0.0
        %3186 = vmatpush1.msra.mxu0 0.0
        %3187 = vmatprep.subr.mxu0 0.0
        %3188 = vmatpush1.msra.mxu0 0.0
        %3189 = vmatprep.subr.mxu0 0.0
        %3190 = vmatpush1.msra.mxu0 0.0
        %3191 = vmatprep.subr.mxu0 0.0
        %3192 = vmatpush1.msra.mxu0 0.0
        %3193 = vmatprep.subr.mxu0 0.0
        %3194 = vmatpush1.msra.mxu0 0.0
        %3195 = vmatprep.mubr.f32.mxu0 0.0
        %3196 = vmatmul.mubr.f32.gmra.mrb[0].mxu0 %v3126
        %v3197 = vpop.f32.mrb[0].mxu0
        %v3198 = vadd.f32 0.0, %v3197
        %v3199 = vpop.f32.mrb[0].mxu0
        %v3200 = vadd.f32 0.0, %v3199
        %3201 = vmatprep.mubr.f32.mxu0 0.0
        %3202 = vmatmul.mubr.f32.gmra.mrb[0].mxu0 %v3129
        %v3203 = vpop.f32.mrb[0].mxu0
        %v3204 = vadd.f32 0.0, %v3203
        %v3205 = vpop.f32.mrb[0].mxu0
        %v3206 = vadd.f32 0.0, %v3205
        %3207 = vdwg.mxu0
        %3208 = vmatprep.subr.mxu0 %v1471
        %3209 = vmatpush1.msra.mxu0 %v1469
        %3210 = vmatprep.subr.mxu0 0.0
        %3211 = vmatpush1.msra.mxu0 0.0
        %3212 = vmatprep.subr.mxu0 0.0
        %3213 = vmatpush1.msra.mxu0 0.0
        %3214 = vmatprep.subr.mxu0 0.0
        %3215 = vmatpush1.msra.mxu0 0.0
        %3216 = vmatprep.subr.mxu0 0.0
        %3217 = vmatpush1.msra.mxu0 0.0
        %3218 = vmatprep.subr.mxu0 0.0
        %3219 = vmatpush1.msra.mxu0 0.0
        %3220 = vmatprep.subr.mxu0 0.0
        %3221 = vmatpush1.msra.mxu0 0.0
        %3222 = vmatprep.subr.mxu0 0.0
        %3223 = vmatpush1.msra.mxu0 0.0
        %3224 = vmatprep.subr.mxu0 0.0
        %3225 = vmatpush1.msra.mxu0 0.0
        %3226 = vmatprep.subr.mxu0 0.0
        %3227 = vmatpush1.msra.mxu0 0.0
        %3228 = vmatprep.subr.mxu0 0.0
        %3229 = vmatpush1.msra.mxu0 0.0
        %3230 = vmatprep.subr.mxu0 0.0
        %3231 = vmatpush1.msra.mxu0 0.0
        %3232 = vmatprep.subr.mxu0 0.0
        %3233 = vmatpush1.msra.mxu0 0.0
        %3234 = vmatprep.subr.mxu0 0.0
        %3235 = vmatpush1.msra.mxu0 0.0
        %3236 = vmatprep.subr.mxu0 0.0
        %3237 = vmatpush1.msra.mxu0 0.0
        %3238 = vmatprep.subr.mxu0 0.0
        %3239 = vmatpush1.msra.mxu0 0.0
        %3240 = vmatprep.subr.mxu0 0.0
        %3241 = vmatpush1.msra.mxu0 0.0
        %3242 = vmatprep.subr.mxu0 0.0
        %3243 = vmatpush1.msra.mxu0 0.0
        %3244 = vmatprep.subr.mxu0 0.0
        %3245 = vmatpush1.msra.mxu0 0.0
        %3246 = vmatprep.subr.mxu0 0.0
        %3247 = vmatpush1.msra.mxu0 0.0
        %3248 = vmatprep.subr.mxu0 0.0
        %3249 = vmatpush1.msra.mxu0 0.0
        %3250 = vmatprep.subr.mxu0 0.0
        %3251 = vmatpush1.msra.mxu0 0.0
        %3252 = vmatprep.subr.mxu0 0.0
        %3253 = vmatpush1.msra.mxu0 0.0
        %3254 = vmatprep.subr.mxu0 0.0
        %3255 = vmatpush1.msra.mxu0 0.0
        %3256 = vmatprep.subr.mxu0 0.0
        %3257 = vmatpush1.msra.mxu0 0.0
        %3258 = vmatprep.subr.mxu0 0.0
        %3259 = vmatpush1.msra.mxu0 0.0
        %3260 = vmatprep.subr.mxu0 0.0
        %3261 = vmatpush1.msra.mxu0 0.0
        %3262 = vmatprep.subr.mxu0 0.0
        %3263 = vmatpush1.msra.mxu0 0.0
        %3264 = vmatprep.subr.mxu0 0.0
        %3265 = vmatpush1.msra.mxu0 0.0
        %3266 = vmatprep.subr.mxu0 0.0
        %3267 = vmatpush1.msra.mxu0 0.0
        %3268 = vmatprep.subr.mxu0 0.0
        %3269 = vmatpush1.msra.mxu0 0.0
        %3270 = vmatprep.subr.mxu0 0.0
        %3271 = vmatpush1.msra.mxu0 0.0
        %3272 = vmatprep.mubr.f32.mxu0 0.0
        %3273 = vmatmul.mubr.f32.gmra.mrb[0].mxu0 %v3126
        %v3274 = vpop.f32.mrb[0].mxu0
        %v3275 = vadd.f32 0.0, %v3274
        %v3276 = vpop.f32.mrb[0].mxu0
        %v3277 = vadd.f32 0.0, %v3276
        %3278 = vmatprep.mubr.f32.mxu0 0.0
        %3279 = vmatmul.mubr.f32.gmra.mrb[0].mxu0 %v3129
        %v3280 = vpop.f32.mrb[0].mxu0
        %v3281 = vadd.f32 0.0, %v3280
        %v3282 = vpop.f32.mrb[0].mxu0
        %v3283 = vadd.f32 0.0, %v3282
        %3284 = vdwg.mxu0
        %v3285 = vmul.f32 %v3038, %v2524
        %v3286 = vmul.f32 %v3040, %v2526
        %v3287 = vmul.f32 %v3115, %v2601
        %v3288 = vmul.f32 %v3117, %v2603
        %v3289 = vmul.f32 %v3044, %v2530
        %v3290 = vmul.f32 %v3046, %v2532
        %v3291 = vmul.f32 %v3121, %v2607
        %v3292 = vmul.f32 %v3123, %v2609
        %v3293 = vmul.f32 %v3198, %v2001
        %v3294 = vmul.f32 %v3200, %v2002
        %v3295 = vmul.f32 %v3275, %v2003
        %v3296 = vmul.f32 %v3277, %v2004
        %v3297 = vmul.f32 %v3204, %v2005
        %v3298 = vmul.f32 %v3206, %v2006
        %v3299 = vmul.f32 %v3281, %v2007
        %v3300 = vmul.f32 %v3283, %v2008
        %v3301 = vadd.f32 %v3285, %v3293
        %v3302 = vadd.f32 %v3286, %v3294
        %v3303 = vadd.f32 %v3287, %v3295
        %v3304 = vadd.f32 %v3288, %v3296
        %v3305 = vadd.f32 %v3289, %v3297
        %v3306 = vadd.f32 %v3290, %v3298
        %v3307 = vadd.f32 %v3291, %v3299
        %v3308 = vadd.f32 %v3292, %v3300
        %v3309 = vadd.f32 %v3301, %v3305
        %v3310 = vrot.slane %v3309, 4
        %v3311 = vadd.f32 %v3309, %v3310
        %v3312 = vrot.slane %v3311, 2
        %v3313 = vadd.f32 %v3311, %v3312
        %v3314 = vrot.slane %v3313, 1
        %v3315 = vadd.f32 %v3313, %v3314
        %v3316 = vadd.f32 %v3302, %v3306
        %v3317 = vrot.slane %v3316, 4
        %v3318 = vadd.f32 %v3316, %v3317
        %v3319 = vrot.slane %v3318, 2
        %v3320 = vadd.f32 %v3318, %v3319
        %v3321 = vrot.slane %v3320, 1
        %v3322 = vadd.f32 %v3320, %v3321
        %v3323 = vadd.f32 %v3303, %v3307
        %v3324 = vrot.slane %v3323, 4
        %v3325 = vadd.f32 %v3323, %v3324
        %v3326 = vrot.slane %v3325, 2
        %v3327 = vadd.f32 %v3325, %v3326
        %v3328 = vrot.slane %v3327, 1
        %v3329 = vadd.f32 %v3327, %v3328
        %v3330 = vadd.f32 %v3304, %v3308
        %v3331 = vrot.slane %v3330, 4
        %v3332 = vadd.f32 %v3330, %v3331
        %v3333 = vrot.slane %v3332, 2
        %v3334 = vadd.f32 %v3332, %v3333
        %v3335 = vrot.slane %v3334, 1
        %v3336 = vadd.f32 %v3334, %v3335
        %v3337 = vxor.u32 %v3315, 2147483648
        %v3338 = vxor.u32 %v3322, 2147483648
        %v3339 = vxor.u32 %v3329, 2147483648
        %v3340 = vxor.u32 %v3336, 2147483648
        %v3341 = vmul.f32 %v3337, 1.442695
        %v3342 = vpow.pop %v3341
        %v3343 = vmul.f32 %v3338, 1.442695
        %v3344 = vpow.pop %v3343
        %v3345 = vmul.f32 %v3339, 1.442695
        %v3346 = vpow.pop %v3345
        %v3347 = vmul.f32 %v3340, 1.442695
        %v3348 = vpow.pop %v3347
        %v3349 = vadd.f32 %v3342, 1.0
        %v3350 = vadd.f32 %v3344, 1.0
        %v3351 = vadd.f32 %v3346, 1.0
        %v3352 = vadd.f32 %v3348, 1.0
        %v3353 = vrcp.pop %v3349
        %v3354 = vmul.f32 1.0, %v3353
        %v3355 = vrcp.pop %v3350
        %v3356 = vmul.f32 1.0, %v3355
        %v3357 = vrcp.pop %v3351
        %v3358 = vmul.f32 1.0, %v3357
        %v3359 = vrcp.pop %v3352
        %v3360 = vmul.f32 1.0, %v3359
        %v3361 = vmul.f32 %v439, %v3354
        %v3362 = vmul.f32 %v440, %v3356
        %v3363 = vmul.f32 %v441, %v3358
        %v3364 = vmul.f32 %v442, %v3360
        %v3365 = vmul.f32 %v443, %v3354
        %v3366 = vmul.f32 %v444, %v3356
        %v3367 = vmul.f32 %v445, %v3358
        %v3368 = vmul.f32 %v446, %v3360
        %3369 = vst [vmem:[%s433] sm:$0xff] %v3361
        %3370 = vst [vmem:[%s433 + $0x8] sm:$0xff] %v3362
        %3371 = vst [vmem:[%s433 + $0x10] sm:$0xff] %v3363
        %3372 = vst [vmem:[%s433 + $0x18] sm:$0xff] %v3364
        %3373 = vst [vmem:[%s433 + $0x20] sm:$0xff] %v3365
        %3374 = vst [vmem:[%s433 + $0x28] sm:$0xff] %v3366
        %3375 = vst [vmem:[%s433 + $0x30] sm:$0xff] %v3367
        %3376 = vst [vmem:[%s433 + $0x38] sm:$0xff] %v3368
        %s3377 = sand.u32 %s313, 1
        %s3378 = scalar_lea.sflag [#allocation3], %s3377
        %s3379 = sand.u32 %s313, 1
        %s3380 = smul.addr %s3379, 64
        %s3381 = scalar_lea.vmem [#allocation2], %s3380
        // Predicated region
        $region73: #{tpu_custom_call.1} parent=71 // pred_check
          %p3382 = pneg %p323
        $region74: #{tpu_custom_call.1} parent=71 // pred_check_branch
          %3384 = sbr.rel (%p3382) target = $region76
        $region75: #{tpu_custom_call.1} parent=71 // pred_region
          %s3386 = ssub.s32 1024, 1024
          %3387 = vsyncadd %s3378, %s3386
          %s3388 = smul.addr %s27, 8
          %s3389 = smul.addr %s3388, 128
          %s3390 = scalar_lea.hbm %s13, %s3389
          %s3391 = sshll.u32 %s3381, 4
          %s3392 = int_to_ptr.vmem [resolvable:$true] %s3391
          %3397 = dma.vmem_to_hbm [thread:$0]  %s3392, 1024, %s3390, %s3378, 512, 512, 32
        $region76: #{tpu_custom_call.1} parent=71 // pred_fallthru
          _
      $region72: #{tpu_custom_call.1} parent=5 // pred_fallthru
        _
      %p3398 = scmp.le.s32.totalorder 2, %s22
      // Predicated region
      $region77: #{tpu_custom_call.1} parent=5 // pred_check
        %p3399 = pneg %p3398
      $region78: #{tpu_custom_call.1} parent=5 // pred_check_branch
        %3401 = sbr.rel (%p3399) target = $region80
      $region79: #{tpu_custom_call.1} parent=5 // pred_region
        %s3402 = ssub.s32 %s22, 2
        // Predicated region
        $region81: #{tpu_custom_call.1} parent=79 // pred_check
          %p3403 = pneg %p329
        $region82: #{tpu_custom_call.1} parent=79 // pred_check_branch
          %3405 = sbr.rel (%p3403) target = $region84
        $region83: #{tpu_custom_call.1} parent=79 // pred_region
          %s3406 = sand.u32 %s314, 1
          %s3407 = scalar_lea.sflag [#allocation3], %s3406
          %s3408 = sand.u32 %s314, 1
          %s3409 = smul.addr %s3408, 64
          %s3410 = scalar_lea.vmem [#allocation2], %s3409
          %3411 = dma.done %s3407, 1024
        $region84: #{tpu_custom_call.1} parent=79 // pred_fallthru
          _
      $region80: #{tpu_custom_call.1} parent=5 // pred_fallthru
        _
    $region6: #{tpu_custom_call.1} parent=1 // loop_footer
      %s26 = sadd.s32 1, %s22
    $region7: #{tpu_custom_call.1} parent=1 // loop_footer_branch
      %21 = sbr.rel target = $region3
    $region8: #{tpu_custom_call.1} parent=1 // loop_exit
      _
    %3412 = vsyncpa [#allocation3], 1
    %s3413 = scalar_lea.sflag [#allocation3], 1
    %3414 = vsyncpa %s3413, 1

</llo_original>
